<compile_context>
chip_gen: v7x
topology: tpu7x:2x2x1
jax: 0.10.0
libtpu: 0.0.40
codegen_flags: <defaults>
</compile_context>

<pallas_src>
import math

import jax
import jax.numpy as jnp
from jax import lax
from jax.experimental import pallas as pl
from jax.experimental.pallas import tpu as pltpu  # noqa: F401  (TPU backend assumed)


# Model constants (match the PyTorch module defaults).
IN_DIM = 24        # observation channels (input_dim)
CNN_DIM = 24       # conv output channels (cnn_dim)
N_ACTIONS = 1
H_IN = 7           # 7x7 obs -> conv(k=2,s=1) 6x6 -> maxpool(2,2) 3x3 -> 9*CNN_DIM per obs
K_CONV = IN_DIM * 4            # 96  = (cin, ki, kj) features per conv position
K_BLOCK = 9 * K_CONV           # 864 = block-diagonal K (9 pooled positions)
N_BLOCK = 9 * CNN_DIM          # 216 = pooled + flattened features per observation
HIDDEN = 256


# ----------------------------------------------------------------------------
# Fused Pallas kernel: convpool(fine) + convpool(coarse) + fc_1 + fc_2 + head
# ----------------------------------------------------------------------------
def _critic_kernel(pf_ref, pc_ref, act_ref,
                   wbd_ref, bbd_ref,
                   w1f_ref, w1c_ref, w1a_ref, b1_ref,
                   w2_ref, b2_ref,
                   w3_ref, b3_ref,
                   out_ref):
    f32 = jnp.float32

    def conv_pool(p_ref):
        # p_ref: [4, B, 864] patches (one slice per 2x2 pool-window offset).
        # wbd:   [864, 216] block-diagonal conv weight -> output lanes are already the
        #        flattened (pooled_pos, channel) feature vector.
        z = jnp.dot(p_ref[0], wbd_ref[...], preferred_element_type=f32)
        for q in range(1, 4):
            zq = jnp.dot(p_ref[q], wbd_ref[...], preferred_element_type=f32)
            z = jnp.maximum(z, zq)                       # MaxPool over the 2x2 window
        # MaxPool(ReLU(conv + b)) == ReLU(max_q(conv_q) + b)  (relu monotone, bias const)
        return jnp.maximum(z + bbd_ref[...], 0.0)        # [B, 216]

    feat_f = conv_pool(pf_ref)                           # fine   pooled features
    feat_c = conv_pool(pc_ref)                           # coarse pooled features

    # fc_1 over the implicit concat [fine | coarse | action] (never materialized).
    h1 = jnp.dot(feat_f, w1f_ref[...], preferred_element_type=f32)
    h1 = h1 + jnp.dot(feat_c, w1c_ref[...], preferred_element_type=f32)
    h1 = h1 + act_ref[...] * w1a_ref[...]                # [B,1]*[1,256] (n_actions == 1)
    h1 = jnp.maximum(h1 + b1_ref[...], 0.0)              # [B, 256]

    # fc_2
    h2 = jnp.dot(h1, w2_ref[...], preferred_element_type=f32)
    h2 = jnp.maximum(h2 + b2_ref[...], 0.0)              # [B, 256]

    # critic head (out_features = 1): lane reduction, no 128-padded matmul output.
    val = jnp.sum(h2 * w3_ref[...], axis=1, keepdims=True) + b3_ref[...]
    out_ref[...] = val.astype(out_ref.dtype)             # [B, 1]


# ----------------------------------------------------------------------------
# Host-side glue (cheap, plain JAX)
# ----------------------------------------------------------------------------
def _pool_window_patches(x, dh, dw):
    """x: [B, C, 7, 7] -> [B, 9*C*4] im2col patches for the conv positions feeding
    pool-window offset (dh, dw). Feature order: (pooled_pos p=ph*3+pw, cin, ki, kj)."""
    B, C = x.shape[0], x.shape[1]
    xs = x[:, :, dh:dh + 6, dw:dw + 6]                   # conv positions 2*ph+dh, 2*pw+dw
    wins = jnp.stack([xs[:, :, ki::2, kj::2] for ki in (0, 1) for kj in (0, 1)],
                     axis=-1)                            # [B, C, 3, 3, 4]  (last = ki*2+kj)
    wins = wins.transpose(0, 2, 3, 1, 4)                 # [B, 3, 3, C, 4]
    return wins.reshape(B, 9 * C * 4)


def pack_params(params):
    """One-time packing of PyTorch-layout parameters into the kernel's lane-dense layout."""
    conv_w = params["conv_w"]                            # [Cout, Cin, 2, 2]  (OIHW)
    cout = conv_w.shape[0]
    w_mat = conv_w.reshape(cout, -1).T                   # [Cin*4, Cout]
    # Block-diagonal conv weight: pooled position p selects its own 96-feature K slice
    # and writes its own 24-lane N slice -> matmul output is already flattened (p, c).
    w_bd = jnp.kron(jnp.eye(9, dtype=w_mat.dtype), w_mat)     # [864, 216]
    b_bd = jnp.tile(params["conv_b"], 9)[None, :]             # [1, 216]

    # fc_1 columns follow PyTorch flatten order (c*9 + p); permute K once to (p*24 + c).
    w1 = params["w1"]                                         # [433, 256]

    def permute(block):
        return block.reshape(CNN_DIM, 9, HIDDEN).transpose(1, 0, 2).reshape(N_BLOCK, HIDDEN)

    return dict(
        w_bd=w_bd, b_bd=b_bd,
        w1f=permute(w1[:N_BLOCK]),
        w1c=permute(w1[N_BLOCK:2 * N_BLOCK]),
        w1a=w1[2 * N_BLOCK:],                                 # [n_actions, 256]
        b1=params["b1"][None, :],
        w2=params["w2"], b2=params["b2"][None, :],
        w3=params["w3"].T,                                    # [1, 256]
        b3=params["b3"].reshape(1, 1),
    )


@jax.jit
def critic_forward(packed, obs_fine, obs_coarse, action):
    B = obs_fine.shape[0]
    offsets = ((0, 0), (0, 1), (1, 0), (1, 1))
    pf = jnp.stack([_pool_window_patches(obs_fine, dh, dw) for dh, dw in offsets], 0)
    pc = jnp.stack([_pool_window_patches(obs_coarse, dh, dw) for dh, dw in offsets], 0)

    # Single invocation (no grid); every operand is a whole array resident in VMEM
    # (total ~1.5 MiB, well under the scoped VMEM limit on v5e/v6e/v7x).
    return pl.pallas_call(
        _critic_kernel,
        out_shape=jax.ShapeDtypeStruct((B, 1), jnp.float32),
    )(pf, pc, action,
      packed["w_bd"], packed["b_bd"],
      packed["w1f"], packed["w1c"], packed["w1a"], packed["b1"],
      packed["w2"], packed["b2"],
      packed["w3"], packed["b3"])


# ----------------------------------------------------------------------------
# Parameter construction (deterministic, xavier-normal like init_weights)
# ----------------------------------------------------------------------------
def _xavier_normal(key, shape, fan_in, fan_out):
    std = math.sqrt(2.0 / (fan_in + fan_out))
    return std * jax.random.normal(key, shape, jnp.float32)


def make_params(key, input_dim=IN_DIM, cnn_dim=CNN_DIM, n_actions=N_ACTIONS):
    ks = jax.random.split(key, 8)
    flat = 2 * 9 * cnn_dim + n_actions                   # 18*cnn_dim + n_actions = 433
    p = {}
    # convpool: Conv2d(input_dim, cnn_dim, kernel_size=(2,2), stride=1)
    p["conv_w"] = _xavier_normal(ks[0], (cnn_dim, input_dim, 2, 2),
                                 input_dim * 4, cnn_dim * 4)
    p["conv_b"] = 0.01 * jax.random.normal(ks[1], (cnn_dim,), jnp.float32)
    # fc_1: Linear(433, 256)   (stored as [in, out])
    p["w1"] = _xavier_normal(ks[2], (flat, HIDDEN), flat, HIDDEN)
    p["b1"] = 0.01 * jax.random.normal(ks[3], (HIDDEN,), jnp.float32)
    # fc_2: Linear(256, 256)
    p["w2"] = _xavier_normal(ks[4], (HIDDEN, HIDDEN), HIDDEN, HIDDEN)
    p["b2"] = 0.01 * jax.random.normal(ks[5], (HIDDEN,), jnp.float32)
    # critic_head: Linear(256, 1)
    p["w3"] = _xavier_normal(ks[6], (HIDDEN, 1), HIDDEN, 1)
    p["b3"] = 0.01 * jax.random.normal(ks[7], (1,), jnp.float32)
    return p


# ----------------------------------------------------------------------------
# Pure-JAX reference (mirrors the PyTorch module exactly) for correctness check
# ----------------------------------------------------------------------------
def reference_forward(params, obs_fine, obs_coarse, action):
    hp = lax.Precision.HIGHEST

    def convpool(x):
        y = lax.conv_general_dilated(
            x, params["conv_w"], (1, 1), "VALID",
            dimension_numbers=("NCHW", "OIHW", "NCHW"), precision=hp)
        y = jax.nn.relu(y + params["conv_b"][None, :, None, None])
        y = lax.reduce_window(y, -jnp.inf, lax.max,
                              (1, 1, 2, 2), (1, 1, 2, 2), "VALID")
        return y.reshape(y.shape[0], -1)                 # Flatten(start_dim=1): (C, H, W)

    f = convpool(obs_fine)
    c = convpool(obs_coarse)
    x = jnp.concatenate([f, c, action], axis=1)          # [B, 18*cnn_dim + n_actions]
    h = jax.nn.relu(jnp.dot(x, params["w1"], precision=hp) + params["b1"])
    h = jax.nn.relu(jnp.dot(h, params["w2"], precision=hp) + params["b2"])
    return jnp.dot(h, params["w3"], precision=hp) + params["b3"]


if __name__ == "__main__":
    key = jax.random.PRNGKey(0)
    kf, kc, ka, kp = jax.random.split(key, 4)

    B = 2
    obs_fine = jax.random.normal(kf, (B, IN_DIM, H_IN, H_IN), jnp.float32)
    obs_coarse = jax.random.normal(kc, (B, IN_DIM, H_IN, H_IN), jnp.float32)
    action = jax.random.normal(ka, (B, N_ACTIONS), jnp.float32)

    params = make_params(kp)
    packed = pack_params(params)

    out = critic_forward(packed, obs_fine, obs_coarse, action)
    out = jax.block_until_ready(out)
    assert out.shape == (B, 1), out.shape

    ref = reference_forward(params, obs_fine, obs_coarse, action)
    assert jnp.allclose(out, ref, atol=1e-3, rtol=1e-3), (out, ref)

    print("KERNEL_OK")
</pallas_src>

<mosaic_0001>
module attributes {stable_mosaic.version = 11 : i64} {
  func.func @_critic_kernel(%arg0: memref<4x2x864xf32, #tpu.memory_space<vmem>>, %arg1: memref<4x2x864xf32, #tpu.memory_space<vmem>>, %arg2: memref<2x1xf32, #tpu.memory_space<vmem>>, %arg3: memref<864x216xf32, #tpu.memory_space<vmem>>, %arg4: memref<1x216xf32, #tpu.memory_space<vmem>>, %arg5: memref<216x256xf32, #tpu.memory_space<vmem>>, %arg6: memref<216x256xf32, #tpu.memory_space<vmem>>, %arg7: memref<1x256xf32, #tpu.memory_space<vmem>>, %arg8: memref<1x256xf32, #tpu.memory_space<vmem>>, %arg9: memref<256x256xf32, #tpu.memory_space<vmem>>, %arg10: memref<1x256xf32, #tpu.memory_space<vmem>>, %arg11: memref<1x256xf32, #tpu.memory_space<vmem>>, %arg12: memref<1x1xf32, #tpu.memory_space<vmem>>, %arg13: memref<2x1xf32, #tpu.memory_space<vmem>>) attributes {dimension_semantics = [], scalar_prefetch = 0 : i64, scratch_operands = 0 : i64, tpu.core_type = #tpu.core_type<tc>} {
    %c0 = arith.constant 0 : index
    %c0_0 = arith.constant 0 : index
    %c0_1 = arith.constant 0 : index
    %0 = vector.load %arg0[%c0, %c0_0, %c0_1] : memref<4x2x864xf32, #tpu.memory_space<vmem>>, vector<1x2x864xf32>
    %1 = vector.shape_cast %0 : vector<1x2x864xf32> to vector<2x864xf32>
    %c0_2 = arith.constant 0 : index
    %c0_3 = arith.constant 0 : index
    %2 = vector.load %arg3[%c0_2, %c0_3] : memref<864x216xf32, #tpu.memory_space<vmem>>, vector<864x216xf32>
    %cst = arith.constant dense<0.000000e+00> : vector<2x216xf32>
    %3 = tpu.matmul %1, %2, %cst {dimension_numbers = #tpu.dot_dimension_numbers<[1], [0], [0], [1], [0, 0, 1, 1], [], []>} : vector<2x864xf32>, vector<864x216xf32>, vector<2x216xf32> -> vector<2x216xf32>
    %c1 = arith.constant 1 : index
    %c0_4 = arith.constant 0 : index
    %c0_5 = arith.constant 0 : index
    %4 = vector.load %arg0[%c1, %c0_4, %c0_5] : memref<4x2x864xf32, #tpu.memory_space<vmem>>, vector<1x2x864xf32>
    %5 = vector.shape_cast %4 : vector<1x2x864xf32> to vector<2x864xf32>
    %c0_6 = arith.constant 0 : index
    %c0_7 = arith.constant 0 : index
    %6 = vector.load %arg3[%c0_6, %c0_7] : memref<864x216xf32, #tpu.memory_space<vmem>>, vector<864x216xf32>
    %cst_8 = arith.constant dense<0.000000e+00> : vector<2x216xf32>
    %7 = tpu.matmul %5, %6, %cst_8 {dimension_numbers = #tpu.dot_dimension_numbers<[1], [0], [0], [1], [0, 0, 1, 1], [], []>} : vector<2x864xf32>, vector<864x216xf32>, vector<2x216xf32> -> vector<2x216xf32>
    %8 = arith.maximumf %3, %7 : vector<2x216xf32>
    %c2 = arith.constant 2 : index
    %c0_9 = arith.constant 0 : index
    %c0_10 = arith.constant 0 : index
    %9 = vector.load %arg0[%c2, %c0_9, %c0_10] : memref<4x2x864xf32, #tpu.memory_space<vmem>>, vector<1x2x864xf32>
    %10 = vector.shape_cast %9 : vector<1x2x864xf32> to vector<2x864xf32>
    %c0_11 = arith.constant 0 : index
    %c0_12 = arith.constant 0 : index
    %11 = vector.load %arg3[%c0_11, %c0_12] : memref<864x216xf32, #tpu.memory_space<vmem>>, vector<864x216xf32>
    %cst_13 = arith.constant dense<0.000000e+00> : vector<2x216xf32>
    %12 = tpu.matmul %10, %11, %cst_13 {dimension_numbers = #tpu.dot_dimension_numbers<[1], [0], [0], [1], [0, 0, 1, 1], [], []>} : vector<2x864xf32>, vector<864x216xf32>, vector<2x216xf32> -> vector<2x216xf32>
    %13 = arith.maximumf %8, %12 : vector<2x216xf32>
    %c3 = arith.constant 3 : index
    %c0_14 = arith.constant 0 : index
    %c0_15 = arith.constant 0 : index
    %14 = vector.load %arg0[%c3, %c0_14, %c0_15] : memref<4x2x864xf32, #tpu.memory_space<vmem>>, vector<1x2x864xf32>
    %15 = vector.shape_cast %14 : vector<1x2x864xf32> to vector<2x864xf32>
    %c0_16 = arith.constant 0 : index
    %c0_17 = arith.constant 0 : index
    %16 = vector.load %arg3[%c0_16, %c0_17] : memref<864x216xf32, #tpu.memory_space<vmem>>, vector<864x216xf32>
    %cst_18 = arith.constant dense<0.000000e+00> : vector<2x216xf32>
    %17 = tpu.matmul %15, %16, %cst_18 {dimension_numbers = #tpu.dot_dimension_numbers<[1], [0], [0], [1], [0, 0, 1, 1], [], []>} : vector<2x864xf32>, vector<864x216xf32>, vector<2x216xf32> -> vector<2x216xf32>
    %18 = arith.maximumf %13, %17 : vector<2x216xf32>
    %c0_19 = arith.constant 0 : index
    %c0_20 = arith.constant 0 : index
    %19 = vector.load %arg4[%c0_19, %c0_20] : memref<1x216xf32, #tpu.memory_space<vmem>>, vector<1x216xf32>
    %20 = vector.broadcast %19 : vector<1x216xf32> to vector<2x216xf32>
    %21 = arith.addf %18, %20 : vector<2x216xf32>
    %cst_21 = arith.constant 0.000000e+00 : f32
    %22 = vector.broadcast %cst_21 : f32 to vector<2x216xf32>
    %23 = arith.maximumf %21, %22 : vector<2x216xf32>
    %c0_22 = arith.constant 0 : index
    %c0_23 = arith.constant 0 : index
    %c0_24 = arith.constant 0 : index
    %24 = vector.load %arg1[%c0_22, %c0_23, %c0_24] : memref<4x2x864xf32, #tpu.memory_space<vmem>>, vector<1x2x864xf32>
    %25 = vector.shape_cast %24 : vector<1x2x864xf32> to vector<2x864xf32>
    %c0_25 = arith.constant 0 : index
    %c0_26 = arith.constant 0 : index
    %26 = vector.load %arg3[%c0_25, %c0_26] : memref<864x216xf32, #tpu.memory_space<vmem>>, vector<864x216xf32>
    %cst_27 = arith.constant dense<0.000000e+00> : vector<2x216xf32>
    %27 = tpu.matmul %25, %26, %cst_27 {dimension_numbers = #tpu.dot_dimension_numbers<[1], [0], [0], [1], [0, 0, 1, 1], [], []>} : vector<2x864xf32>, vector<864x216xf32>, vector<2x216xf32> -> vector<2x216xf32>
    %c1_28 = arith.constant 1 : index
    %c0_29 = arith.constant 0 : index
    %c0_30 = arith.constant 0 : index
    %28 = vector.load %arg1[%c1_28, %c0_29, %c0_30] : memref<4x2x864xf32, #tpu.memory_space<vmem>>, vector<1x2x864xf32>
    %29 = vector.shape_cast %28 : vector<1x2x864xf32> to vector<2x864xf32>
    %c0_31 = arith.constant 0 : index
    %c0_32 = arith.constant 0 : index
    %30 = vector.load %arg3[%c0_31, %c0_32] : memref<864x216xf32, #tpu.memory_space<vmem>>, vector<864x216xf32>
    %cst_33 = arith.constant dense<0.000000e+00> : vector<2x216xf32>
    %31 = tpu.matmul %29, %30, %cst_33 {dimension_numbers = #tpu.dot_dimension_numbers<[1], [0], [0], [1], [0, 0, 1, 1], [], []>} : vector<2x864xf32>, vector<864x216xf32>, vector<2x216xf32> -> vector<2x216xf32>
    %32 = arith.maximumf %27, %31 : vector<2x216xf32>
    %c2_34 = arith.constant 2 : index
    %c0_35 = arith.constant 0 : index
    %c0_36 = arith.constant 0 : index
    %33 = vector.load %arg1[%c2_34, %c0_35, %c0_36] : memref<4x2x864xf32, #tpu.memory_space<vmem>>, vector<1x2x864xf32>
    %34 = vector.shape_cast %33 : vector<1x2x864xf32> to vector<2x864xf32>
    %c0_37 = arith.constant 0 : index
    %c0_38 = arith.constant 0 : index
    %35 = vector.load %arg3[%c0_37, %c0_38] : memref<864x216xf32, #tpu.memory_space<vmem>>, vector<864x216xf32>
    %cst_39 = arith.constant dense<0.000000e+00> : vector<2x216xf32>
    %36 = tpu.matmul %34, %35, %cst_39 {dimension_numbers = #tpu.dot_dimension_numbers<[1], [0], [0], [1], [0, 0, 1, 1], [], []>} : vector<2x864xf32>, vector<864x216xf32>, vector<2x216xf32> -> vector<2x216xf32>
    %37 = arith.maximumf %32, %36 : vector<2x216xf32>
    %c3_40 = arith.constant 3 : index
    %c0_41 = arith.constant 0 : index
    %c0_42 = arith.constant 0 : index
    %38 = vector.load %arg1[%c3_40, %c0_41, %c0_42] : memref<4x2x864xf32, #tpu.memory_space<vmem>>, vector<1x2x864xf32>
    %39 = vector.shape_cast %38 : vector<1x2x864xf32> to vector<2x864xf32>
    %c0_43 = arith.constant 0 : index
    %c0_44 = arith.constant 0 : index
    %40 = vector.load %arg3[%c0_43, %c0_44] : memref<864x216xf32, #tpu.memory_space<vmem>>, vector<864x216xf32>
    %cst_45 = arith.constant dense<0.000000e+00> : vector<2x216xf32>
    %41 = tpu.matmul %39, %40, %cst_45 {dimension_numbers = #tpu.dot_dimension_numbers<[1], [0], [0], [1], [0, 0, 1, 1], [], []>} : vector<2x864xf32>, vector<864x216xf32>, vector<2x216xf32> -> vector<2x216xf32>
    %42 = arith.maximumf %37, %41 : vector<2x216xf32>
    %c0_46 = arith.constant 0 : index
    %c0_47 = arith.constant 0 : index
    %43 = vector.load %arg4[%c0_46, %c0_47] : memref<1x216xf32, #tpu.memory_space<vmem>>, vector<1x216xf32>
    %44 = vector.broadcast %43 : vector<1x216xf32> to vector<2x216xf32>
    %45 = arith.addf %42, %44 : vector<2x216xf32>
    %cst_48 = arith.constant 0.000000e+00 : f32
    %46 = vector.broadcast %cst_48 : f32 to vector<2x216xf32>
    %47 = arith.maximumf %45, %46 : vector<2x216xf32>
    %c0_49 = arith.constant 0 : index
    %c0_50 = arith.constant 0 : index
    %48 = vector.load %arg5[%c0_49, %c0_50] : memref<216x256xf32, #tpu.memory_space<vmem>>, vector<216x256xf32>
    %cst_51 = arith.constant dense<0.000000e+00> : vector<2x256xf32>
    %49 = tpu.matmul %23, %48, %cst_51 {dimension_numbers = #tpu.dot_dimension_numbers<[1], [0], [0], [1], [0, 0, 1, 1], [], []>} : vector<2x216xf32>, vector<216x256xf32>, vector<2x256xf32> -> vector<2x256xf32>
    %c0_52 = arith.constant 0 : index
    %c0_53 = arith.constant 0 : index
    %50 = vector.load %arg6[%c0_52, %c0_53] : memref<216x256xf32, #tpu.memory_space<vmem>>, vector<216x256xf32>
    %cst_54 = arith.constant dense<0.000000e+00> : vector<2x256xf32>
    %51 = tpu.matmul %47, %50, %cst_54 {dimension_numbers = #tpu.dot_dimension_numbers<[1], [0], [0], [1], [0, 0, 1, 1], [], []>} : vector<2x216xf32>, vector<216x256xf32>, vector<2x256xf32> -> vector<2x256xf32>
    %52 = arith.addf %49, %51 : vector<2x256xf32>
    %c0_55 = arith.constant 0 : index
    %c0_56 = arith.constant 0 : index
    %53 = vector.load %arg2[%c0_55, %c0_56] : memref<2x1xf32, #tpu.memory_space<vmem>>, vector<2x1xf32>
    %c0_57 = arith.constant 0 : index
    %c0_58 = arith.constant 0 : index
    %54 = vector.load %arg7[%c0_57, %c0_58] : memref<1x256xf32, #tpu.memory_space<vmem>>, vector<1x256xf32>
    %55 = vector.broadcast %53 : vector<2x1xf32> to vector<2x256xf32>
    %56 = vector.broadcast %54 : vector<1x256xf32> to vector<2x256xf32>
    %57 = arith.mulf %55, %56 : vector<2x256xf32>
    %58 = arith.addf %52, %57 : vector<2x256xf32>
    %c0_59 = arith.constant 0 : index
    %c0_60 = arith.constant 0 : index
    %59 = vector.load %arg8[%c0_59, %c0_60] : memref<1x256xf32, #tpu.memory_space<vmem>>, vector<1x256xf32>
    %60 = vector.broadcast %59 : vector<1x256xf32> to vector<2x256xf32>
    %61 = arith.addf %58, %60 : vector<2x256xf32>
    %cst_61 = arith.constant 0.000000e+00 : f32
    %62 = vector.broadcast %cst_61 : f32 to vector<2x256xf32>
    %63 = arith.maximumf %61, %62 : vector<2x256xf32>
    %c0_62 = arith.constant 0 : index
    %c0_63 = arith.constant 0 : index
    %64 = vector.load %arg9[%c0_62, %c0_63] : memref<256x256xf32, #tpu.memory_space<vmem>>, vector<256x256xf32>
    %cst_64 = arith.constant dense<0.000000e+00> : vector<2x256xf32>
    %65 = tpu.matmul %63, %64, %cst_64 {dimension_numbers = #tpu.dot_dimension_numbers<[1], [0], [0], [1], [0, 0, 1, 1], [], []>} : vector<2x256xf32>, vector<256x256xf32>, vector<2x256xf32> -> vector<2x256xf32>
    %c0_65 = arith.constant 0 : index
    %c0_66 = arith.constant 0 : index
    %66 = vector.load %arg10[%c0_65, %c0_66] : memref<1x256xf32, #tpu.memory_space<vmem>>, vector<1x256xf32>
    %67 = vector.broadcast %66 : vector<1x256xf32> to vector<2x256xf32>
    %68 = arith.addf %65, %67 : vector<2x256xf32>
    %cst_67 = arith.constant 0.000000e+00 : f32
    %69 = vector.broadcast %cst_67 : f32 to vector<2x256xf32>
    %70 = arith.maximumf %68, %69 : vector<2x256xf32>
    %c0_68 = arith.constant 0 : index
    %c0_69 = arith.constant 0 : index
    %71 = vector.load %arg11[%c0_68, %c0_69] : memref<1x256xf32, #tpu.memory_space<vmem>>, vector<1x256xf32>
    %72 = vector.broadcast %71 : vector<1x256xf32> to vector<2x256xf32>
    %73 = arith.mulf %70, %72 : vector<2x256xf32>
    %cst_70 = arith.constant dense<0.000000e+00> : vector<2xf32>
    %74 = vector.multi_reduction <add>, %73, %cst_70 [1] : vector<2x256xf32> to vector<2xf32>
    %75 = vector.shape_cast %74 : vector<2xf32> to vector<2x1xf32>
    %c0_71 = arith.constant 0 : index
    %c0_72 = arith.constant 0 : index
    %76 = vector.load %arg12[%c0_71, %c0_72] : memref<1x1xf32, #tpu.memory_space<vmem>>, vector<1x1xf32>
    %77 = vector.broadcast %76 : vector<1x1xf32> to vector<2x1xf32>
    %78 = arith.addf %75, %77 : vector<2x1xf32>
    %c0_73 = arith.constant 0 : index
    %c0_74 = arith.constant 0 : index
    %79 = vector.load %arg13[%c0_73, %c0_74] : memref<2x1xf32, #tpu.memory_space<vmem>>, vector<2x1xf32>
    tpu.vector_store %arg13[%c0_73, %c0_74], %78 {strides = array<i32>} : memref<2x1xf32, #tpu.memory_space<vmem>>, vector<2x1xf32>,
    return
  }
}

</mosaic_0001>

<llo_original>
// kernel: critic_forward.1
$region0: #{critic_forward.1}
  #allocation0 [shape = 'u32[]', space=smem, size = 0x4, offset = 0x4, fixed_abs, tag = 'smem constant byte address 0x4 - core index']
  #allocation1 [shape = 'u32[144,128]{1,0:T(1,128)}', space=vmem, size = 0x12000, scoped, tag = 'internal scratch']
  #allocation2 [shape = 'f32[1,1]{1,0:T(1,128)S(1)}', space=vmem, size = 0x200, scoped, tag = 'scoped memory for critic_forward.1']
  %s0 = inlined_call_operand.vmem [shape: f32[4,2,864], index: 0, kind: input, shape index: {}]
  %s1 = inlined_call_operand.vmem [shape: f32[4,2,864], index: 1, kind: input, shape index: {}]
  %s2 = inlined_call_operand.vmem [shape: f32[2,1], index: 2, kind: input, shape index: {}]
  %s3 = inlined_call_operand.vmem [shape: f32[864,216], index: 3, kind: input, shape index: {}]
  %s4 = inlined_call_operand.vmem [shape: f32[1,216], index: 4, kind: input, shape index: {}]
  %s5 = inlined_call_operand.vmem [shape: f32[216,256], index: 5, kind: input, shape index: {}]
  %s6 = inlined_call_operand.vmem [shape: f32[216,256], index: 6, kind: input, shape index: {}]
  %s7 = inlined_call_operand.vmem [shape: f32[1,256], index: 7, kind: input, shape index: {}]
  %s8 = inlined_call_operand.vmem [shape: f32[1,256], index: 8, kind: input, shape index: {}]
  %s9 = inlined_call_operand.vmem [shape: f32[256,256], index: 9, kind: input, shape index: {}]
  %s10 = inlined_call_operand.vmem [shape: f32[1,256], index: 10, kind: input, shape index: {}]
  %s11 = inlined_call_operand.vmem [shape: f32[1,256], index: 11, kind: input, shape index: {}]
  %s12 = inlined_call_operand.<no memory space> [shape: f32[1,1], index: 12, kind: input, shape index: {}]
  %s13 = inlined_call_operand.vmem [shape: f32[2,1], index: 13, kind: output, shape index: {}]
  %s14 = sld [smem:[#allocation0]]
  $region62: #{critic_forward.1} parent=0
    _
  %s16 = ssub.s32 1, %s14
  %s17 = scalar_select 0, %s16, %s14
  %v18 = vstv %s12
  %19 = vst [vmem:[#allocation2] sm:$0x1] %v18
  // Predicated region
  $region2: #{critic_forward.1} parent=0 // pred_check
    _
  $region3: #{critic_forward.1} parent=0 // pred_check_branch
    %21 = sbr.rel (0) target = $region5
  $region4: #{critic_forward.1} parent=0 // pred_region
    _
  $region5: #{critic_forward.1} parent=0 // pred_fallthru
    _
  // Predicated region
  $region6: #{critic_forward.1} parent=0 // pred_check
    _
  $region7: #{critic_forward.1} parent=0 // pred_check_branch
    %23 = sbr.rel (0) target = $region9
  $region8: #{critic_forward.1} parent=0 // pred_region
    _
  $region9: #{critic_forward.1} parent=0 // pred_fallthru
    _
  // Predicated region
  $region10: #{critic_forward.1} parent=0 // pred_check
    _
  $region11: #{critic_forward.1} parent=0 // pred_check_branch
    %25 = sbr.rel (0) target = $region13
  $region12: #{critic_forward.1} parent=0 // pred_region
    _
  $region13: #{critic_forward.1} parent=0 // pred_fallthru
    _
  // Predicated region
  $region14: #{critic_forward.1} parent=0 // pred_check
    _
  $region15: #{critic_forward.1} parent=0 // pred_check_branch
    %27 = sbr.rel (0) target = $region17
  $region16: #{critic_forward.1} parent=0 // pred_region
    _
  $region17: #{critic_forward.1} parent=0 // pred_fallthru
    _
  // Predicated region
  $region18: #{critic_forward.1} parent=0 // pred_check
    _
  $region19: #{critic_forward.1} parent=0 // pred_check_branch
    %29 = sbr.rel (0) target = $region21
  $region20: #{critic_forward.1} parent=0 // pred_region
    _
  $region21: #{critic_forward.1} parent=0 // pred_fallthru
    _
  // Predicated region
  $region22: #{critic_forward.1} parent=0 // pred_check
    _
  $region23: #{critic_forward.1} parent=0 // pred_check_branch
    %31 = sbr.rel (0) target = $region25
  $region24: #{critic_forward.1} parent=0 // pred_region
    _
  $region25: #{critic_forward.1} parent=0 // pred_fallthru
    _
  // Predicated region
  $region26: #{critic_forward.1} parent=0 // pred_check
    _
  $region27: #{critic_forward.1} parent=0 // pred_check_branch
    %33 = sbr.rel (0) target = $region29
  $region28: #{critic_forward.1} parent=0 // pred_region
    _
  $region29: #{critic_forward.1} parent=0 // pred_fallthru
    _
  // Predicated region
  $region30: #{critic_forward.1} parent=0 // pred_check
    _
  $region31: #{critic_forward.1} parent=0 // pred_check_branch
    %35 = sbr.rel (0) target = $region33
  $region32: #{critic_forward.1} parent=0 // pred_region
    _
  $region33: #{critic_forward.1} parent=0 // pred_fallthru
    _
  // Predicated region
  $region34: #{critic_forward.1} parent=0 // pred_check
    _
  $region35: #{critic_forward.1} parent=0 // pred_check_branch
    %37 = sbr.rel (0) target = $region37
  $region36: #{critic_forward.1} parent=0 // pred_region
    _
  $region37: #{critic_forward.1} parent=0 // pred_fallthru
    _
  // Predicated region
  $region38: #{critic_forward.1} parent=0 // pred_check
    _
  $region39: #{critic_forward.1} parent=0 // pred_check_branch
    %39 = sbr.rel (0) target = $region41
  $region40: #{critic_forward.1} parent=0 // pred_region
    _
  $region41: #{critic_forward.1} parent=0 // pred_fallthru
    _
  // Predicated region
  $region42: #{critic_forward.1} parent=0 // pred_check
    _
  $region43: #{critic_forward.1} parent=0 // pred_check_branch
    %41 = sbr.rel (0) target = $region45
  $region44: #{critic_forward.1} parent=0 // pred_region
    _
  $region45: #{critic_forward.1} parent=0 // pred_fallthru
    _
  // Predicated region
  $region46: #{critic_forward.1} parent=0 // pred_check
    _
  $region47: #{critic_forward.1} parent=0 // pred_check_branch
    %43 = sbr.rel (0) target = $region49
  $region48: #{critic_forward.1} parent=0 // pred_region
    _
  $region49: #{critic_forward.1} parent=0 // pred_fallthru
    _
  // Predicated region
  $region50: #{critic_forward.1} parent=0 // pred_check
    _
  $region51: #{critic_forward.1} parent=0 // pred_check_branch
    %45 = sbr.rel (0) target = $region53
  $region52: #{critic_forward.1} parent=0 // pred_region
    _
  $region53: #{critic_forward.1} parent=0 // pred_fallthru
    _
  %v46 = vld [vmem:[%s0] sm:$0xff]
  %v47 = vld [vmem:[%s0 + $0x8] sm:$0x3f]
  %v48 = vld [vmem:[%s3] sm:$0xff]
  %v49 = vld [vmem:[%s3 + $0x8] sm:$0xff]
  %v50 = vld [vmem:[%s3 + $0x10] sm:$0xff]
  %v51 = vld [vmem:[%s3 + $0x18] sm:$0xff]
  %v52 = vld [vmem:[%s3 + $0x20] sm:$0xff]
  %v53 = vld [vmem:[%s3 + $0x28] sm:$0xff]
  %v54 = vld [vmem:[%s3 + $0x30] sm:$0xff]
  %v55 = vld [vmem:[%s3 + $0x38] sm:$0xff]
  %v56 = vld [vmem:[%s3 + $0x40] sm:$0xff]
  %v57 = vld [vmem:[%s3 + $0x48] sm:$0xff]
  %v58 = vld [vmem:[%s3 + $0x50] sm:$0xff]
  %v59 = vld [vmem:[%s3 + $0x58] sm:$0xff]
  %v60 = vld [vmem:[%s3 + $0x60] sm:$0xff]
  %v61 = vld [vmem:[%s3 + $0x68] sm:$0xff]
  %v62 = vld [vmem:[%s3 + $0x70] sm:$0xff]
  %v63 = vld [vmem:[%s3 + $0x78] sm:$0xff]
  %v64 = vld [vmem:[%s3 + $0x80] sm:$0xff]
  %v65 = vld [vmem:[%s3 + $0x88] sm:$0xff]
  %v66 = vld [vmem:[%s3 + $0x90] sm:$0xff]
  %v67 = vld [vmem:[%s3 + $0x98] sm:$0xff]
  %v68 = vld [vmem:[%s3 + $0xa0] sm:$0xff]
  %v69 = vld [vmem:[%s3 + $0xa8] sm:$0xff]
  %v70 = vld [vmem:[%s3 + $0xb0] sm:$0xff]
  %v71 = vld [vmem:[%s3 + $0xb8] sm:$0xff]
  %v72 = vld [vmem:[%s3 + $0xc0] sm:$0xff]
  %v73 = vld [vmem:[%s3 + $0xc8] sm:$0xff]
  %v74 = vld [vmem:[%s3 + $0xd0] sm:$0xff]
  %v75 = vld [vmem:[%s3 + $0xd8] sm:$0xff]
  %v76 = vld [vmem:[%s3 + $0xe0] sm:$0xff]
  %v77 = vld [vmem:[%s3 + $0xe8] sm:$0xff]
  %v78 = vld [vmem:[%s3 + $0xf0] sm:$0xff]
  %v79 = vld [vmem:[%s3 + $0xf8] sm:$0xff]
  %v80 = vld [vmem:[%s3 + $0x100] sm:$0xff]
  %v81 = vld [vmem:[%s3 + $0x108] sm:$0xff]
  %v82 = vld [vmem:[%s3 + $0x110] sm:$0xff]
  %v83 = vld [vmem:[%s3 + $0x118] sm:$0xff]
  %v84 = vld [vmem:[%s3 + $0x120] sm:$0xff]
  %v85 = vld [vmem:[%s3 + $0x128] sm:$0xff]
  %v86 = vld [vmem:[%s3 + $0x130] sm:$0xff]
  %v87 = vld [vmem:[%s3 + $0x138] sm:$0xff]
  %v88 = vld [vmem:[%s3 + $0x140] sm:$0xff]
  %v89 = vld [vmem:[%s3 + $0x148] sm:$0xff]
  %v90 = vld [vmem:[%s3 + $0x150] sm:$0xff]
  %v91 = vld [vmem:[%s3 + $0x158] sm:$0xff]
  %v92 = vld [vmem:[%s3 + $0x160] sm:$0xff]
  %v93 = vld [vmem:[%s3 + $0x168] sm:$0xff]
  %v94 = vld [vmem:[%s3 + $0x170] sm:$0xff]
  %v95 = vld [vmem:[%s3 + $0x178] sm:$0xff]
  %v96 = vld [vmem:[%s3 + $0x180] sm:$0xff]
  %v97 = vld [vmem:[%s3 + $0x188] sm:$0xff]
  %v98 = vld [vmem:[%s3 + $0x190] sm:$0xff]
  %v99 = vld [vmem:[%s3 + $0x198] sm:$0xff]
  %v100 = vld [vmem:[%s3 + $0x1a0] sm:$0xff]
  %v101 = vld [vmem:[%s3 + $0x1a8] sm:$0xff]
  %v102 = vld [vmem:[%s3 + $0x1b0] sm:$0xff]
  %v103 = vld [vmem:[%s3 + $0x1b8] sm:$0xff]
  %v104 = vld [vmem:[%s3 + $0x1c0] sm:$0xff]
  %v105 = vld [vmem:[%s3 + $0x1c8] sm:$0xff]
  %v106 = vld [vmem:[%s3 + $0x1d0] sm:$0xff]
  %v107 = vld [vmem:[%s3 + $0x1d8] sm:$0xff]
  %v108 = vld [vmem:[%s3 + $0x1e0] sm:$0xff]
  %v109 = vld [vmem:[%s3 + $0x1e8] sm:$0xff]
  %v110 = vld [vmem:[%s3 + $0x1f0] sm:$0xff]
  %v111 = vld [vmem:[%s3 + $0x1f8] sm:$0xff]
  %v112 = vld [vmem:[%s3 + $0x200] sm:$0xff]
  %v113 = vld [vmem:[%s3 + $0x208] sm:$0xff]
  %v114 = vld [vmem:[%s3 + $0x210] sm:$0xff]
  %v115 = vld [vmem:[%s3 + $0x218] sm:$0xff]
  %v116 = vld [vmem:[%s3 + $0x220] sm:$0xff]
  %v117 = vld [vmem:[%s3 + $0x228] sm:$0xff]
  %v118 = vld [vmem:[%s3 + $0x230] sm:$0xff]
  %v119 = vld [vmem:[%s3 + $0x238] sm:$0xff]
  %v120 = vld [vmem:[%s3 + $0x240] sm:$0xff]
  %v121 = vld [vmem:[%s3 + $0x248] sm:$0xff]
  %v122 = vld [vmem:[%s3 + $0x250] sm:$0xff]
  %v123 = vld [vmem:[%s3 + $0x258] sm:$0xff]
  %v124 = vld [vmem:[%s3 + $0x260] sm:$0xff]
  %v125 = vld [vmem:[%s3 + $0x268] sm:$0xff]
  %v126 = vld [vmem:[%s3 + $0x270] sm:$0xff]
  %v127 = vld [vmem:[%s3 + $0x278] sm:$0xff]
  %v128 = vld [vmem:[%s3 + $0x280] sm:$0xff]
  %v129 = vld [vmem:[%s3 + $0x288] sm:$0xff]
  %v130 = vld [vmem:[%s3 + $0x290] sm:$0xff]
  %v131 = vld [vmem:[%s3 + $0x298] sm:$0xff]
  %v132 = vld [vmem:[%s3 + $0x2a0] sm:$0xff]
  %v133 = vld [vmem:[%s3 + $0x2a8] sm:$0xff]
  %v134 = vld [vmem:[%s3 + $0x2b0] sm:$0xff]
  %v135 = vld [vmem:[%s3 + $0x2b8] sm:$0xff]
  %v136 = vld [vmem:[%s3 + $0x2c0] sm:$0xff]
  %v137 = vld [vmem:[%s3 + $0x2c8] sm:$0xff]
  %v138 = vld [vmem:[%s3 + $0x2d0] sm:$0xff]
  %v139 = vld [vmem:[%s3 + $0x2d8] sm:$0xff]
  %v140 = vld [vmem:[%s3 + $0x2e0] sm:$0xff]
  %v141 = vld [vmem:[%s3 + $0x2e8] sm:$0xff]
  %v142 = vld [vmem:[%s3 + $0x2f0] sm:$0xff]
  %v143 = vld [vmem:[%s3 + $0x2f8] sm:$0xff]
  %v144 = vld [vmem:[%s3 + $0x300] sm:$0xff]
  %v145 = vld [vmem:[%s3 + $0x308] sm:$0xff]
  %v146 = vld [vmem:[%s3 + $0x310] sm:$0xff]
  %v147 = vld [vmem:[%s3 + $0x318] sm:$0xff]
  %v148 = vld [vmem:[%s3 + $0x320] sm:$0xff]
  %v149 = vld [vmem:[%s3 + $0x328] sm:$0xff]
  %v150 = vld [vmem:[%s3 + $0x330] sm:$0xff]
  %v151 = vld [vmem:[%s3 + $0x338] sm:$0xff]
  %v152 = vld [vmem:[%s3 + $0x340] sm:$0xff]
  %v153 = vld [vmem:[%s3 + $0x348] sm:$0xff]
  %v154 = vld [vmem:[%s3 + $0x350] sm:$0xff]
  %v155 = vld [vmem:[%s3 + $0x358] sm:$0xff]
  %v156 = vld [vmem:[%s3 + $0x360] sm:$0xff]
  %v157 = vld [vmem:[%s3 + $0x368] sm:$0xff]
  %v158 = vld [vmem:[%s3 + $0x370] sm:$0xff]
  %v159 = vld [vmem:[%s3 + $0x378] sm:$0xff]
  %v160 = vld [vmem:[%s3 + $0x380] sm:$0xff]
  %v161 = vld [vmem:[%s3 + $0x388] sm:$0xff]
  %v162 = vld [vmem:[%s3 + $0x390] sm:$0xff]
  %v163 = vld [vmem:[%s3 + $0x398] sm:$0xff]
  %v164 = vld [vmem:[%s3 + $0x3a0] sm:$0xff]
  %v165 = vld [vmem:[%s3 + $0x3a8] sm:$0xff]
  %v166 = vld [vmem:[%s3 + $0x3b0] sm:$0xff]
  %v167 = vld [vmem:[%s3 + $0x3b8] sm:$0xff]
  %v168 = vld [vmem:[%s3 + $0x3c0] sm:$0xff]
  %v169 = vld [vmem:[%s3 + $0x3c8] sm:$0xff]
  %v170 = vld [vmem:[%s3 + $0x3d0] sm:$0xff]
  %v171 = vld [vmem:[%s3 + $0x3d8] sm:$0xff]
  %v172 = vld [vmem:[%s3 + $0x3e0] sm:$0xff]
  %v173 = vld [vmem:[%s3 + $0x3e8] sm:$0xff]
  %v174 = vld [vmem:[%s3 + $0x3f0] sm:$0xff]
  %v175 = vld [vmem:[%s3 + $0x3f8] sm:$0xff]
  %v176 = vld [vmem:[%s3 + $0x400] sm:$0xff]
  %v177 = vld [vmem:[%s3 + $0x408] sm:$0xff]
  %v178 = vld [vmem:[%s3 + $0x410] sm:$0xff]
  %v179 = vld [vmem:[%s3 + $0x418] sm:$0xff]
  %v180 = vld [vmem:[%s3 + $0x420] sm:$0xff]
  %v181 = vld [vmem:[%s3 + $0x428] sm:$0xff]
  %v182 = vld [vmem:[%s3 + $0x430] sm:$0xff]
  %v183 = vld [vmem:[%s3 + $0x438] sm:$0xff]
  %v184 = vld [vmem:[%s3 + $0x440] sm:$0xff]
  %v185 = vld [vmem:[%s3 + $0x448] sm:$0xff]
  %v186 = vld [vmem:[%s3 + $0x450] sm:$0xff]
  %v187 = vld [vmem:[%s3 + $0x458] sm:$0xff]
  %v188 = vld [vmem:[%s3 + $0x460] sm:$0xff]
  %v189 = vld [vmem:[%s3 + $0x468] sm:$0xff]
  %v190 = vld [vmem:[%s3 + $0x470] sm:$0xff]
  %v191 = vld [vmem:[%s3 + $0x478] sm:$0xff]
  %v192 = vld [vmem:[%s3 + $0x480] sm:$0xff]
  %v193 = vld [vmem:[%s3 + $0x488] sm:$0xff]
  %v194 = vld [vmem:[%s3 + $0x490] sm:$0xff]
  %v195 = vld [vmem:[%s3 + $0x498] sm:$0xff]
  %v196 = vld [vmem:[%s3 + $0x4a0] sm:$0xff]
  %v197 = vld [vmem:[%s3 + $0x4a8] sm:$0xff]
  %v198 = vld [vmem:[%s3 + $0x4b0] sm:$0xff]
  %v199 = vld [vmem:[%s3 + $0x4b8] sm:$0xff]
  %v200 = vld [vmem:[%s3 + $0x4c0] sm:$0xff]
  %v201 = vld [vmem:[%s3 + $0x4c8] sm:$0xff]
  %v202 = vld [vmem:[%s3 + $0x4d0] sm:$0xff]
  %v203 = vld [vmem:[%s3 + $0x4d8] sm:$0xff]
  %v204 = vld [vmem:[%s3 + $0x4e0] sm:$0xff]
  %v205 = vld [vmem:[%s3 + $0x4e8] sm:$0xff]
  %v206 = vld [vmem:[%s3 + $0x4f0] sm:$0xff]
  %v207 = vld [vmem:[%s3 + $0x4f8] sm:$0xff]
  %v208 = vld [vmem:[%s3 + $0x500] sm:$0xff]
  %v209 = vld [vmem:[%s3 + $0x508] sm:$0xff]
  %v210 = vld [vmem:[%s3 + $0x510] sm:$0xff]
  %v211 = vld [vmem:[%s3 + $0x518] sm:$0xff]
  %v212 = vld [vmem:[%s3 + $0x520] sm:$0xff]
  %v213 = vld [vmem:[%s3 + $0x528] sm:$0xff]
  %v214 = vld [vmem:[%s3 + $0x530] sm:$0xff]
  %v215 = vld [vmem:[%s3 + $0x538] sm:$0xff]
  %v216 = vld [vmem:[%s3 + $0x540] sm:$0xff]
  %v217 = vld [vmem:[%s3 + $0x548] sm:$0xff]
  %v218 = vld [vmem:[%s3 + $0x550] sm:$0xff]
  %v219 = vld [vmem:[%s3 + $0x558] sm:$0xff]
  %v220 = vld [vmem:[%s3 + $0x560] sm:$0xff]
  %v221 = vld [vmem:[%s3 + $0x568] sm:$0xff]
  %v222 = vld [vmem:[%s3 + $0x570] sm:$0xff]
  %v223 = vld [vmem:[%s3 + $0x578] sm:$0xff]
  %v224 = vld [vmem:[%s3 + $0x580] sm:$0xff]
  %v225 = vld [vmem:[%s3 + $0x588] sm:$0xff]
  %v226 = vld [vmem:[%s3 + $0x590] sm:$0xff]
  %v227 = vld [vmem:[%s3 + $0x598] sm:$0xff]
  %v228 = vld [vmem:[%s3 + $0x5a0] sm:$0xff]
  %v229 = vld [vmem:[%s3 + $0x5a8] sm:$0xff]
  %v230 = vld [vmem:[%s3 + $0x5b0] sm:$0xff]
  %v231 = vld [vmem:[%s3 + $0x5b8] sm:$0xff]
  %v232 = vld [vmem:[%s3 + $0x5c0] sm:$0xff]
  %v233 = vld [vmem:[%s3 + $0x5c8] sm:$0xff]
  %v234 = vld [vmem:[%s3 + $0x5d0] sm:$0xff]
  %v235 = vld [vmem:[%s3 + $0x5d8] sm:$0xff]
  %v236 = vld [vmem:[%s3 + $0x5e0] sm:$0xff]
  %v237 = vld [vmem:[%s3 + $0x5e8] sm:$0xff]
  %v238 = vld [vmem:[%s3 + $0x5f0] sm:$0xff]
  %v239 = vld [vmem:[%s3 + $0x5f8] sm:$0xff]
  %v240 = vld [vmem:[%s3 + $0x600] sm:$0xff]
  %v241 = vld [vmem:[%s3 + $0x608] sm:$0xff]
  %v242 = vld [vmem:[%s3 + $0x610] sm:$0xff]
  %v243 = vld [vmem:[%s3 + $0x618] sm:$0xff]
  %v244 = vld [vmem:[%s3 + $0x620] sm:$0xff]
  %v245 = vld [vmem:[%s3 + $0x628] sm:$0xff]
  %v246 = vld [vmem:[%s3 + $0x630] sm:$0xff]
  %v247 = vld [vmem:[%s3 + $0x638] sm:$0xff]
  %v248 = vld [vmem:[%s3 + $0x640] sm:$0xff]
  %v249 = vld [vmem:[%s3 + $0x648] sm:$0xff]
  %v250 = vld [vmem:[%s3 + $0x650] sm:$0xff]
  %v251 = vld [vmem:[%s3 + $0x658] sm:$0xff]
  %v252 = vld [vmem:[%s3 + $0x660] sm:$0xff]
  %v253 = vld [vmem:[%s3 + $0x668] sm:$0xff]
  %v254 = vld [vmem:[%s3 + $0x670] sm:$0xff]
  %v255 = vld [vmem:[%s3 + $0x678] sm:$0xff]
  %v256 = vld [vmem:[%s3 + $0x680] sm:$0xff]
  %v257 = vld [vmem:[%s3 + $0x688] sm:$0xff]
  %v258 = vld [vmem:[%s3 + $0x690] sm:$0xff]
  %v259 = vld [vmem:[%s3 + $0x698] sm:$0xff]
  %v260 = vld [vmem:[%s3 + $0x6a0] sm:$0xff]
  %v261 = vld [vmem:[%s3 + $0x6a8] sm:$0xff]
  %v262 = vld [vmem:[%s3 + $0x6b0] sm:$0xff]
  %v263 = vld [vmem:[%s3 + $0x6b8] sm:$0xff]
  %v266 = vcombine.high %v46, %v46
  %v268 = vunpack.c.l.s4 1983009808
  %v269 = vunpack.c.0.s8 %v268
  %v270 = vlaneseq
  %v271 = vshrl.u32 %v270, 7
  %v272 = vsub.s32 %v269, %v271
  %v273 = vrot.slane %v46, %v272
  %v275 = vunpack.c.l.s4 1983009808
  %v276 = vunpack.c.0.s8 %v275
  %v277 = vlaneseq
  %v278 = vshrl.u32 %v277, 7
  %v279 = vsub.s32 %v276, %v278
  %v280 = vrot.slane %v266, %v279
  %v281 = vcombine.high %v273, %v273
  %v282 = vcombine.high %v280, %v280
  %v283 = vcombine.high %v47, %v47
  %v285 = vunpack.c.l.s4 1983009808
  %v286 = vunpack.c.0.s8 %v285
  %v287 = vlaneseq
  %v288 = vshrl.u32 %v287, 7
  %v289 = vsub.s32 %v286, %v288
  %v290 = vrot.slane %v47, %v289
  %v292 = vunpack.c.l.s4 1983009808
  %v293 = vunpack.c.0.s8 %v292
  %v294 = vlaneseq
  %v295 = vshrl.u32 %v294, 7
  %v296 = vsub.s32 %v293, %v295
  %v297 = vrot.slane %v283, %v296
  %v298 = vcombine.high %v290, %v290
  %vm305 = vcmask 785408
  %v306 = vsel %vm305, %v297, 0
  %308 = vmatprep.subr.mxu0 %v49
  %309 = vmatpush1.msra.mxu0 %v48
  %310 = vmatprep.subr.mxu0 %v51
  %311 = vmatpush1.msra.mxu0 %v50
  %312 = vmatprep.subr.mxu0 %v53
  %313 = vmatpush1.msra.mxu0 %v52
  %314 = vmatprep.subr.mxu0 %v55
  %315 = vmatpush1.msra.mxu0 %v54
  %316 = vmatprep.subr.mxu0 %v57
  %317 = vmatpush1.msra.mxu0 %v56
  %318 = vmatprep.subr.mxu0 %v59
  %319 = vmatpush1.msra.mxu0 %v58
  %320 = vmatprep.subr.mxu0 %v61
  %321 = vmatpush1.msra.mxu0 %v60
  %322 = vmatprep.subr.mxu0 %v63
  %323 = vmatpush1.msra.mxu0 %v62
  %324 = vmatprep.subr.mxu0 %v65
  %325 = vmatpush1.msra.mxu0 %v64
  %326 = vmatprep.subr.mxu0 %v67
  %327 = vmatpush1.msra.mxu0 %v66
  %328 = vmatprep.subr.mxu0 %v69
  %329 = vmatpush1.msra.mxu0 %v68
  %330 = vmatprep.subr.mxu0 %v71
  %331 = vmatpush1.msra.mxu0 %v70
  %332 = vmatprep.subr.mxu0 %v73
  %333 = vmatpush1.msra.mxu0 %v72
  %334 = vmatprep.subr.mxu0 %v75
  %335 = vmatpush1.msra.mxu0 %v74
  %336 = vmatprep.subr.mxu0 %v77
  %337 = vmatpush1.msra.mxu0 %v76
  %338 = vmatprep.subr.mxu0 %v79
  %339 = vmatpush1.msra.mxu0 %v78
  %340 = vmatprep.subr.mxu0 %v81
  %341 = vmatpush1.msra.mxu0 %v80
  %342 = vmatprep.subr.mxu0 %v83
  %343 = vmatpush1.msra.mxu0 %v82
  %344 = vmatprep.subr.mxu0 %v85
  %345 = vmatpush1.msra.mxu0 %v84
  %346 = vmatprep.subr.mxu0 %v87
  %347 = vmatpush1.msra.mxu0 %v86
  %348 = vmatprep.subr.mxu0 %v89
  %349 = vmatpush1.msra.mxu0 %v88
  %350 = vmatprep.subr.mxu0 %v91
  %351 = vmatpush1.msra.mxu0 %v90
  %352 = vmatprep.subr.mxu0 %v93
  %353 = vmatpush1.msra.mxu0 %v92
  %354 = vmatprep.subr.mxu0 %v95
  %355 = vmatpush1.msra.mxu0 %v94
  %356 = vmatprep.subr.mxu0 %v97
  %357 = vmatpush1.msra.mxu0 %v96
  %358 = vmatprep.subr.mxu0 %v99
  %359 = vmatpush1.msra.mxu0 %v98
  %360 = vmatprep.subr.mxu0 %v101
  %361 = vmatpush1.msra.mxu0 %v100
  %362 = vmatprep.subr.mxu0 %v103
  %363 = vmatpush1.msra.mxu0 %v102
  %364 = vmatprep.subr.mxu0 %v105
  %365 = vmatpush1.msra.mxu0 %v104
  %366 = vmatprep.subr.mxu0 %v107
  %367 = vmatpush1.msra.mxu0 %v106
  %368 = vmatprep.subr.mxu0 %v109
  %369 = vmatpush1.msra.mxu0 %v108
  %370 = vmatprep.subr.mxu0 %v111
  %371 = vmatpush1.msra.mxu0 %v110
  %372 = vmatprep.mubr.f32.mxu0 %v281
  %373 = vmatmul.mubr.f32.gmra.mrb[0].mxu0 %v273
  %v374 = vpop.f32.mrb[0].mxu0
  %v375 = vadd.f32 0.0, %v374
  %v376 = vpop.f32.mrb[0].mxu0
  %v377 = vadd.f32 0.0, %v376
  %378 = vdwg.mxu0
  %379 = vmatprep.subr.mxu0 %v113
  %380 = vmatpush1.msra.mxu0 %v112
  %381 = vmatprep.subr.mxu0 %v115
  %382 = vmatpush1.msra.mxu0 %v114
  %383 = vmatprep.subr.mxu0 %v117
  %384 = vmatpush1.msra.mxu0 %v116
  %385 = vmatprep.subr.mxu0 %v119
  %386 = vmatpush1.msra.mxu0 %v118
  %387 = vmatprep.subr.mxu0 %v121
  %388 = vmatpush1.msra.mxu0 %v120
  %389 = vmatprep.subr.mxu0 %v123
  %390 = vmatpush1.msra.mxu0 %v122
  %391 = vmatprep.subr.mxu0 %v125
  %392 = vmatpush1.msra.mxu0 %v124
  %393 = vmatprep.subr.mxu0 %v127
  %394 = vmatpush1.msra.mxu0 %v126
  %395 = vmatprep.subr.mxu0 %v129
  %396 = vmatpush1.msra.mxu0 %v128
  %397 = vmatprep.subr.mxu0 %v131
  %398 = vmatpush1.msra.mxu0 %v130
  %399 = vmatprep.subr.mxu0 %v133
  %400 = vmatpush1.msra.mxu0 %v132
  %401 = vmatprep.subr.mxu0 %v135
  %402 = vmatpush1.msra.mxu0 %v134
  %403 = vmatprep.subr.mxu0 %v137
  %404 = vmatpush1.msra.mxu0 %v136
  %405 = vmatprep.subr.mxu0 %v139
  %406 = vmatpush1.msra.mxu0 %v138
  %407 = vmatprep.subr.mxu0 %v141
  %408 = vmatpush1.msra.mxu0 %v140
  %409 = vmatprep.subr.mxu0 %v143
  %410 = vmatpush1.msra.mxu0 %v142
  %411 = vmatprep.subr.mxu0 %v145
  %412 = vmatpush1.msra.mxu0 %v144
  %413 = vmatprep.subr.mxu0 %v147
  %414 = vmatpush1.msra.mxu0 %v146
  %415 = vmatprep.subr.mxu0 %v149
  %416 = vmatpush1.msra.mxu0 %v148
  %417 = vmatprep.subr.mxu0 %v151
  %418 = vmatpush1.msra.mxu0 %v150
  %419 = vmatprep.subr.mxu0 %v153
  %420 = vmatpush1.msra.mxu0 %v152
  %421 = vmatprep.subr.mxu0 %v155
  %422 = vmatpush1.msra.mxu0 %v154
  %423 = vmatprep.subr.mxu0 %v157
  %424 = vmatpush1.msra.mxu0 %v156
  %425 = vmatprep.subr.mxu0 %v159
  %426 = vmatpush1.msra.mxu0 %v158
  %427 = vmatprep.subr.mxu0 %v161
  %428 = vmatpush1.msra.mxu0 %v160
  %429 = vmatprep.subr.mxu0 %v163
  %430 = vmatpush1.msra.mxu0 %v162
  %431 = vmatprep.subr.mxu0 %v165
  %432 = vmatpush1.msra.mxu0 %v164
  %433 = vmatprep.subr.mxu0 %v167
  %434 = vmatpush1.msra.mxu0 %v166
  %435 = vmatprep.subr.mxu0 %v169
  %436 = vmatpush1.msra.mxu0 %v168
  %437 = vmatprep.subr.mxu0 %v171
  %438 = vmatpush1.msra.mxu0 %v170
  %439 = vmatprep.subr.mxu0 %v173
  %440 = vmatpush1.msra.mxu0 %v172
  %441 = vmatprep.subr.mxu0 %v175
  %442 = vmatpush1.msra.mxu0 %v174
  %443 = vmatprep.mubr.f32.mxu0 %v282
  %444 = vmatmul.mubr.f32.gmra.mrb[0].mxu0 %v280
  %v445 = vpop.f32.mrb[0].mxu0
  %v446 = vadd.f32 %v375, %v445
  %v447 = vpop.f32.mrb[0].mxu0
  %v448 = vadd.f32 %v377, %v447
  %449 = vdwg.mxu0
  %450 = vmatprep.subr.mxu0 %v177
  %451 = vmatpush1.msra.mxu0 %v176
  %452 = vmatprep.subr.mxu0 %v179
  %453 = vmatpush1.msra.mxu0 %v178
  %454 = vmatprep.subr.mxu0 %v181
  %455 = vmatpush1.msra.mxu0 %v180
  %456 = vmatprep.subr.mxu0 %v183
  %457 = vmatpush1.msra.mxu0 %v182
  %458 = vmatprep.subr.mxu0 %v185
  %459 = vmatpush1.msra.mxu0 %v184
  %460 = vmatprep.subr.mxu0 %v187
  %461 = vmatpush1.msra.mxu0 %v186
  %462 = vmatprep.subr.mxu0 %v189
  %463 = vmatpush1.msra.mxu0 %v188
  %464 = vmatprep.subr.mxu0 %v191
  %465 = vmatpush1.msra.mxu0 %v190
  %466 = vmatprep.subr.mxu0 %v193
  %467 = vmatpush1.msra.mxu0 %v192
  %468 = vmatprep.subr.mxu0 %v195
  %469 = vmatpush1.msra.mxu0 %v194
  %470 = vmatprep.subr.mxu0 %v197
  %471 = vmatpush1.msra.mxu0 %v196
  %472 = vmatprep.subr.mxu0 %v199
  %473 = vmatpush1.msra.mxu0 %v198
  %474 = vmatprep.subr.mxu0 %v201
  %475 = vmatpush1.msra.mxu0 %v200
  %476 = vmatprep.subr.mxu0 %v203
  %477 = vmatpush1.msra.mxu0 %v202
  %478 = vmatprep.subr.mxu0 %v205
  %479 = vmatpush1.msra.mxu0 %v204
  %480 = vmatprep.subr.mxu0 %v207
  %481 = vmatpush1.msra.mxu0 %v206
  %482 = vmatprep.subr.mxu0 %v209
  %483 = vmatpush1.msra.mxu0 %v208
  %484 = vmatprep.subr.mxu0 %v211
  %485 = vmatpush1.msra.mxu0 %v210
  %486 = vmatprep.subr.mxu0 %v213
  %487 = vmatpush1.msra.mxu0 %v212
  %488 = vmatprep.subr.mxu0 %v215
  %489 = vmatpush1.msra.mxu0 %v214
  %490 = vmatprep.subr.mxu0 %v217
  %491 = vmatpush1.msra.mxu0 %v216
  %492 = vmatprep.subr.mxu0 %v219
  %493 = vmatpush1.msra.mxu0 %v218
  %494 = vmatprep.subr.mxu0 %v221
  %495 = vmatpush1.msra.mxu0 %v220
  %496 = vmatprep.subr.mxu0 %v223
  %497 = vmatpush1.msra.mxu0 %v222
  %498 = vmatprep.subr.mxu0 %v225
  %499 = vmatpush1.msra.mxu0 %v224
  %500 = vmatprep.subr.mxu0 %v227
  %501 = vmatpush1.msra.mxu0 %v226
  %502 = vmatprep.subr.mxu0 %v229
  %503 = vmatpush1.msra.mxu0 %v228
  %504 = vmatprep.subr.mxu0 %v231
  %505 = vmatpush1.msra.mxu0 %v230
  %506 = vmatprep.subr.mxu0 %v233
  %507 = vmatpush1.msra.mxu0 %v232
  %508 = vmatprep.subr.mxu0 %v235
  %509 = vmatpush1.msra.mxu0 %v234
  %510 = vmatprep.subr.mxu0 %v237
  %511 = vmatpush1.msra.mxu0 %v236
  %512 = vmatprep.subr.mxu0 %v239
  %513 = vmatpush1.msra.mxu0 %v238
  %514 = vmatprep.mubr.f32.mxu0 %v298
  %515 = vmatmul.mubr.f32.gmra.mrb[0].mxu0 %v290
  %v516 = vpop.f32.mrb[0].mxu0
  %v517 = vadd.f32 %v446, %v516
  %v518 = vpop.f32.mrb[0].mxu0
  %v519 = vadd.f32 %v448, %v518
  %520 = vdwg.mxu0
  %521 = vmatprep.subr.mxu0 %v241
  %522 = vmatpush1.msra.mxu0 %v240
  %523 = vmatprep.subr.mxu0 %v243
  %524 = vmatpush1.msra.mxu0 %v242
  %525 = vmatprep.subr.mxu0 %v245
  %526 = vmatpush1.msra.mxu0 %v244
  %527 = vmatprep.subr.mxu0 %v247
  %528 = vmatpush1.msra.mxu0 %v246
  %529 = vmatprep.subr.mxu0 %v249
  %530 = vmatpush1.msra.mxu0 %v248
  %531 = vmatprep.subr.mxu0 %v251
  %532 = vmatpush1.msra.mxu0 %v250
  %533 = vmatprep.subr.mxu0 %v253
  %534 = vmatpush1.msra.mxu0 %v252
  %535 = vmatprep.subr.mxu0 %v255
  %536 = vmatpush1.msra.mxu0 %v254
  %537 = vmatprep.subr.mxu0 %v257
  %538 = vmatpush1.msra.mxu0 %v256
  %539 = vmatprep.subr.mxu0 %v259
  %540 = vmatpush1.msra.mxu0 %v258
  %541 = vmatprep.subr.mxu0 %v261
  %542 = vmatpush1.msra.mxu0 %v260
  %543 = vmatprep.subr.mxu0 %v263
  %544 = vmatpush1.msra.mxu0 %v262
  %545 = vmatprep.subr.mxu0 0.0
  %546 = vmatpush1.msra.mxu0 0.0
  %547 = vmatprep.subr.mxu0 0.0
  %548 = vmatpush1.msra.mxu0 0.0
  %549 = vmatprep.subr.mxu0 0.0
  %550 = vmatpush1.msra.mxu0 0.0
  %551 = vmatprep.subr.mxu0 0.0
  %552 = vmatpush1.msra.mxu0 0.0
  %553 = vmatprep.subr.mxu0 0.0
  %554 = vmatpush1.msra.mxu0 0.0
  %555 = vmatprep.subr.mxu0 0.0
  %556 = vmatpush1.msra.mxu0 0.0
  %557 = vmatprep.subr.mxu0 0.0
  %558 = vmatpush1.msra.mxu0 0.0
  %559 = vmatprep.subr.mxu0 0.0
  %560 = vmatpush1.msra.mxu0 0.0
  %561 = vmatprep.subr.mxu0 0.0
  %562 = vmatpush1.msra.mxu0 0.0
  %563 = vmatprep.subr.mxu0 0.0
  %564 = vmatpush1.msra.mxu0 0.0
  %565 = vmatprep.subr.mxu0 0.0
  %566 = vmatpush1.msra.mxu0 0.0
  %567 = vmatprep.subr.mxu0 0.0
  %568 = vmatpush1.msra.mxu0 0.0
  %569 = vmatprep.subr.mxu0 0.0
  %570 = vmatpush1.msra.mxu0 0.0
  %571 = vmatprep.subr.mxu0 0.0
  %572 = vmatpush1.msra.mxu0 0.0
  %573 = vmatprep.subr.mxu0 0.0
  %574 = vmatpush1.msra.mxu0 0.0
  %575 = vmatprep.subr.mxu0 0.0
  %576 = vmatpush1.msra.mxu0 0.0
  %577 = vmatprep.subr.mxu0 0.0
  %578 = vmatpush1.msra.mxu0 0.0
  %579 = vmatprep.subr.mxu0 0.0
  %580 = vmatpush1.msra.mxu0 0.0
  %581 = vmatprep.subr.mxu0 0.0
  %582 = vmatpush1.msra.mxu0 0.0
  %583 = vmatprep.subr.mxu0 0.0
  %584 = vmatpush1.msra.mxu0 0.0
  %585 = vmatprep.mubr.f32.mxu0 0.0
  %586 = vmatmul.mubr.f32.gmra.mrb[0].mxu0 %v306
  %v587 = vpop.f32.mrb[0].mxu0
  %v588 = vadd.f32 %v517, %v587
  %v589 = vpop.f32.mrb[0].mxu0
  %v590 = vadd.f32 %v519, %v589
  %591 = vdwg.mxu0
  %s592 = scalar_lea.vmem %s0, 14
  %v593 = vld [vmem:[%s592] sm:$0xff]
  %v594 = vld [vmem:[%s592 + $0x8] sm:$0x3f]
  %v597 = vcombine.high %v593, %v593
  %v599 = vunpack.c.l.s4 1983009808
  %v600 = vunpack.c.0.s8 %v599
  %v601 = vlaneseq
  %v602 = vshrl.u32 %v601, 7
  %v603 = vsub.s32 %v600, %v602
  %v604 = vrot.slane %v593, %v603
  %v606 = vunpack.c.l.s4 1983009808
  %v607 = vunpack.c.0.s8 %v606
  %v608 = vlaneseq
  %v609 = vshrl.u32 %v608, 7
  %v610 = vsub.s32 %v607, %v609
  %v611 = vrot.slane %v597, %v610
  %v612 = vcombine.high %v604, %v604
  %v613 = vcombine.high %v611, %v611
  %v614 = vcombine.high %v594, %v594
  %v616 = vunpack.c.l.s4 1983009808
  %v617 = vunpack.c.0.s8 %v616
  %v618 = vlaneseq
  %v619 = vshrl.u32 %v618, 7
  %v620 = vsub.s32 %v617, %v619
  %v621 = vrot.slane %v594, %v620
  %v623 = vunpack.c.l.s4 1983009808
  %v624 = vunpack.c.0.s8 %v623
  %v625 = vlaneseq
  %v626 = vshrl.u32 %v625, 7
  %v627 = vsub.s32 %v624, %v626
  %v628 = vrot.slane %v614, %v627
  %v629 = vcombine.high %v621, %v621
  %v636 = vsel %vm305, %v628, 0
  %638 = vmatprep.subr.mxu0 %v49
  %639 = vmatpush1.msra.mxu0 %v48
  %640 = vmatprep.subr.mxu0 %v51
  %641 = vmatpush1.msra.mxu0 %v50
  %642 = vmatprep.subr.mxu0 %v53
  %643 = vmatpush1.msra.mxu0 %v52
  %644 = vmatprep.subr.mxu0 %v55
  %645 = vmatpush1.msra.mxu0 %v54
  %646 = vmatprep.subr.mxu0 %v57
  %647 = vmatpush1.msra.mxu0 %v56
  %648 = vmatprep.subr.mxu0 %v59
  %649 = vmatpush1.msra.mxu0 %v58
  %650 = vmatprep.subr.mxu0 %v61
  %651 = vmatpush1.msra.mxu0 %v60
  %652 = vmatprep.subr.mxu0 %v63
  %653 = vmatpush1.msra.mxu0 %v62
  %654 = vmatprep.subr.mxu0 %v65
  %655 = vmatpush1.msra.mxu0 %v64
  %656 = vmatprep.subr.mxu0 %v67
  %657 = vmatpush1.msra.mxu0 %v66
  %658 = vmatprep.subr.mxu0 %v69
  %659 = vmatpush1.msra.mxu0 %v68
  %660 = vmatprep.subr.mxu0 %v71
  %661 = vmatpush1.msra.mxu0 %v70
  %662 = vmatprep.subr.mxu0 %v73
  %663 = vmatpush1.msra.mxu0 %v72
  %664 = vmatprep.subr.mxu0 %v75
  %665 = vmatpush1.msra.mxu0 %v74
  %666 = vmatprep.subr.mxu0 %v77
  %667 = vmatpush1.msra.mxu0 %v76
  %668 = vmatprep.subr.mxu0 %v79
  %669 = vmatpush1.msra.mxu0 %v78
  %670 = vmatprep.subr.mxu0 %v81
  %671 = vmatpush1.msra.mxu0 %v80
  %672 = vmatprep.subr.mxu0 %v83
  %673 = vmatpush1.msra.mxu0 %v82
  %674 = vmatprep.subr.mxu0 %v85
  %675 = vmatpush1.msra.mxu0 %v84
  %676 = vmatprep.subr.mxu0 %v87
  %677 = vmatpush1.msra.mxu0 %v86
  %678 = vmatprep.subr.mxu0 %v89
  %679 = vmatpush1.msra.mxu0 %v88
  %680 = vmatprep.subr.mxu0 %v91
  %681 = vmatpush1.msra.mxu0 %v90
  %682 = vmatprep.subr.mxu0 %v93
  %683 = vmatpush1.msra.mxu0 %v92
  %684 = vmatprep.subr.mxu0 %v95
  %685 = vmatpush1.msra.mxu0 %v94
  %686 = vmatprep.subr.mxu0 %v97
  %687 = vmatpush1.msra.mxu0 %v96
  %688 = vmatprep.subr.mxu0 %v99
  %689 = vmatpush1.msra.mxu0 %v98
  %690 = vmatprep.subr.mxu0 %v101
  %691 = vmatpush1.msra.mxu0 %v100
  %692 = vmatprep.subr.mxu0 %v103
  %693 = vmatpush1.msra.mxu0 %v102
  %694 = vmatprep.subr.mxu0 %v105
  %695 = vmatpush1.msra.mxu0 %v104
  %696 = vmatprep.subr.mxu0 %v107
  %697 = vmatpush1.msra.mxu0 %v106
  %698 = vmatprep.subr.mxu0 %v109
  %699 = vmatpush1.msra.mxu0 %v108
  %700 = vmatprep.subr.mxu0 %v111
  %701 = vmatpush1.msra.mxu0 %v110
  %702 = vmatprep.mubr.f32.mxu0 %v612
  %703 = vmatmul.mubr.f32.gmra.mrb[0].mxu0 %v604
  %v704 = vpop.f32.mrb[0].mxu0
  %v705 = vadd.f32 0.0, %v704
  %v706 = vpop.f32.mrb[0].mxu0
  %v707 = vadd.f32 0.0, %v706
  %708 = vdwg.mxu0
  %709 = vmatprep.subr.mxu0 %v113
  %710 = vmatpush1.msra.mxu0 %v112
  %711 = vmatprep.subr.mxu0 %v115
  %712 = vmatpush1.msra.mxu0 %v114
  %713 = vmatprep.subr.mxu0 %v117
  %714 = vmatpush1.msra.mxu0 %v116
  %715 = vmatprep.subr.mxu0 %v119
  %716 = vmatpush1.msra.mxu0 %v118
  %717 = vmatprep.subr.mxu0 %v121
  %718 = vmatpush1.msra.mxu0 %v120
  %719 = vmatprep.subr.mxu0 %v123
  %720 = vmatpush1.msra.mxu0 %v122
  %721 = vmatprep.subr.mxu0 %v125
  %722 = vmatpush1.msra.mxu0 %v124
  %723 = vmatprep.subr.mxu0 %v127
  %724 = vmatpush1.msra.mxu0 %v126
  %725 = vmatprep.subr.mxu0 %v129
  %726 = vmatpush1.msra.mxu0 %v128
  %727 = vmatprep.subr.mxu0 %v131
  %728 = vmatpush1.msra.mxu0 %v130
  %729 = vmatprep.subr.mxu0 %v133
  %730 = vmatpush1.msra.mxu0 %v132
  %731 = vmatprep.subr.mxu0 %v135
  %732 = vmatpush1.msra.mxu0 %v134
  %733 = vmatprep.subr.mxu0 %v137
  %734 = vmatpush1.msra.mxu0 %v136
  %735 = vmatprep.subr.mxu0 %v139
  %736 = vmatpush1.msra.mxu0 %v138
  %737 = vmatprep.subr.mxu0 %v141
  %738 = vmatpush1.msra.mxu0 %v140
  %739 = vmatprep.subr.mxu0 %v143
  %740 = vmatpush1.msra.mxu0 %v142
  %741 = vmatprep.subr.mxu0 %v145
  %742 = vmatpush1.msra.mxu0 %v144
  %743 = vmatprep.subr.mxu0 %v147
  %744 = vmatpush1.msra.mxu0 %v146
  %745 = vmatprep.subr.mxu0 %v149
  %746 = vmatpush1.msra.mxu0 %v148
  %747 = vmatprep.subr.mxu0 %v151
  %748 = vmatpush1.msra.mxu0 %v150
  %749 = vmatprep.subr.mxu0 %v153
  %750 = vmatpush1.msra.mxu0 %v152
  %751 = vmatprep.subr.mxu0 %v155
  %752 = vmatpush1.msra.mxu0 %v154
  %753 = vmatprep.subr.mxu0 %v157
  %754 = vmatpush1.msra.mxu0 %v156
  %755 = vmatprep.subr.mxu0 %v159
  %756 = vmatpush1.msra.mxu0 %v158
  %757 = vmatprep.subr.mxu0 %v161
  %758 = vmatpush1.msra.mxu0 %v160
  %759 = vmatprep.subr.mxu0 %v163
  %760 = vmatpush1.msra.mxu0 %v162
  %761 = vmatprep.subr.mxu0 %v165
  %762 = vmatpush1.msra.mxu0 %v164
  %763 = vmatprep.subr.mxu0 %v167
  %764 = vmatpush1.msra.mxu0 %v166
  %765 = vmatprep.subr.mxu0 %v169
  %766 = vmatpush1.msra.mxu0 %v168
  %767 = vmatprep.subr.mxu0 %v171
  %768 = vmatpush1.msra.mxu0 %v170
  %769 = vmatprep.subr.mxu0 %v173
  %770 = vmatpush1.msra.mxu0 %v172
  %771 = vmatprep.subr.mxu0 %v175
  %772 = vmatpush1.msra.mxu0 %v174
  %773 = vmatprep.mubr.f32.mxu0 %v613
  %774 = vmatmul.mubr.f32.gmra.mrb[0].mxu0 %v611
  %v775 = vpop.f32.mrb[0].mxu0
  %v776 = vadd.f32 %v705, %v775
  %v777 = vpop.f32.mrb[0].mxu0
  %v778 = vadd.f32 %v707, %v777
  %779 = vdwg.mxu0
  %780 = vmatprep.subr.mxu0 %v177
  %781 = vmatpush1.msra.mxu0 %v176
  %782 = vmatprep.subr.mxu0 %v179
  %783 = vmatpush1.msra.mxu0 %v178
  %784 = vmatprep.subr.mxu0 %v181
  %785 = vmatpush1.msra.mxu0 %v180
  %786 = vmatprep.subr.mxu0 %v183
  %787 = vmatpush1.msra.mxu0 %v182
  %788 = vmatprep.subr.mxu0 %v185
  %789 = vmatpush1.msra.mxu0 %v184
  %790 = vmatprep.subr.mxu0 %v187
  %791 = vmatpush1.msra.mxu0 %v186
  %792 = vmatprep.subr.mxu0 %v189
  %793 = vmatpush1.msra.mxu0 %v188
  %794 = vmatprep.subr.mxu0 %v191
  %795 = vmatpush1.msra.mxu0 %v190
  %796 = vmatprep.subr.mxu0 %v193
  %797 = vmatpush1.msra.mxu0 %v192
  %798 = vmatprep.subr.mxu0 %v195
  %799 = vmatpush1.msra.mxu0 %v194
  %800 = vmatprep.subr.mxu0 %v197
  %801 = vmatpush1.msra.mxu0 %v196
  %802 = vmatprep.subr.mxu0 %v199
  %803 = vmatpush1.msra.mxu0 %v198
  %804 = vmatprep.subr.mxu0 %v201
  %805 = vmatpush1.msra.mxu0 %v200
  %806 = vmatprep.subr.mxu0 %v203
  %807 = vmatpush1.msra.mxu0 %v202
  %808 = vmatprep.subr.mxu0 %v205
  %809 = vmatpush1.msra.mxu0 %v204
  %810 = vmatprep.subr.mxu0 %v207
  %811 = vmatpush1.msra.mxu0 %v206
  %812 = vmatprep.subr.mxu0 %v209
  %813 = vmatpush1.msra.mxu0 %v208
  %814 = vmatprep.subr.mxu0 %v211
  %815 = vmatpush1.msra.mxu0 %v210
  %816 = vmatprep.subr.mxu0 %v213
  %817 = vmatpush1.msra.mxu0 %v212
  %818 = vmatprep.subr.mxu0 %v215
  %819 = vmatpush1.msra.mxu0 %v214
  %820 = vmatprep.subr.mxu0 %v217
  %821 = vmatpush1.msra.mxu0 %v216
  %822 = vmatprep.subr.mxu0 %v219
  %823 = vmatpush1.msra.mxu0 %v218
  %824 = vmatprep.subr.mxu0 %v221
  %825 = vmatpush1.msra.mxu0 %v220
  %826 = vmatprep.subr.mxu0 %v223
  %827 = vmatpush1.msra.mxu0 %v222
  %828 = vmatprep.subr.mxu0 %v225
  %829 = vmatpush1.msra.mxu0 %v224
  %830 = vmatprep.subr.mxu0 %v227
  %831 = vmatpush1.msra.mxu0 %v226
  %832 = vmatprep.subr.mxu0 %v229
  %833 = vmatpush1.msra.mxu0 %v228
  %834 = vmatprep.subr.mxu0 %v231
  %835 = vmatpush1.msra.mxu0 %v230
  %836 = vmatprep.subr.mxu0 %v233
  %837 = vmatpush1.msra.mxu0 %v232
  %838 = vmatprep.subr.mxu0 %v235
  %839 = vmatpush1.msra.mxu0 %v234
  %840 = vmatprep.subr.mxu0 %v237
  %841 = vmatpush1.msra.mxu0 %v236
  %842 = vmatprep.subr.mxu0 %v239
  %843 = vmatpush1.msra.mxu0 %v238
  %844 = vmatprep.mubr.f32.mxu0 %v629
  %845 = vmatmul.mubr.f32.gmra.mrb[0].mxu0 %v621
  %v846 = vpop.f32.mrb[0].mxu0
  %v847 = vadd.f32 %v776, %v846
  %v848 = vpop.f32.mrb[0].mxu0
  %v849 = vadd.f32 %v778, %v848
  %850 = vdwg.mxu0
  %851 = vmatprep.subr.mxu0 %v241
  %852 = vmatpush1.msra.mxu0 %v240
  %853 = vmatprep.subr.mxu0 %v243
  %854 = vmatpush1.msra.mxu0 %v242
  %855 = vmatprep.subr.mxu0 %v245
  %856 = vmatpush1.msra.mxu0 %v244
  %857 = vmatprep.subr.mxu0 %v247
  %858 = vmatpush1.msra.mxu0 %v246
  %859 = vmatprep.subr.mxu0 %v249
  %860 = vmatpush1.msra.mxu0 %v248
  %861 = vmatprep.subr.mxu0 %v251
  %862 = vmatpush1.msra.mxu0 %v250
  %863 = vmatprep.subr.mxu0 %v253
  %864 = vmatpush1.msra.mxu0 %v252
  %865 = vmatprep.subr.mxu0 %v255
  %866 = vmatpush1.msra.mxu0 %v254
  %867 = vmatprep.subr.mxu0 %v257
  %868 = vmatpush1.msra.mxu0 %v256
  %869 = vmatprep.subr.mxu0 %v259
  %870 = vmatpush1.msra.mxu0 %v258
  %871 = vmatprep.subr.mxu0 %v261
  %872 = vmatpush1.msra.mxu0 %v260
  %873 = vmatprep.subr.mxu0 %v263
  %874 = vmatpush1.msra.mxu0 %v262
  %875 = vmatprep.subr.mxu0 0.0
  %876 = vmatpush1.msra.mxu0 0.0
  %877 = vmatprep.subr.mxu0 0.0
  %878 = vmatpush1.msra.mxu0 0.0
  %879 = vmatprep.subr.mxu0 0.0
  %880 = vmatpush1.msra.mxu0 0.0
  %881 = vmatprep.subr.mxu0 0.0
  %882 = vmatpush1.msra.mxu0 0.0
  %883 = vmatprep.subr.mxu0 0.0
  %884 = vmatpush1.msra.mxu0 0.0
  %885 = vmatprep.subr.mxu0 0.0
  %886 = vmatpush1.msra.mxu0 0.0
  %887 = vmatprep.subr.mxu0 0.0
  %888 = vmatpush1.msra.mxu0 0.0
  %889 = vmatprep.subr.mxu0 0.0
  %890 = vmatpush1.msra.mxu0 0.0
  %891 = vmatprep.subr.mxu0 0.0
  %892 = vmatpush1.msra.mxu0 0.0
  %893 = vmatprep.subr.mxu0 0.0
  %894 = vmatpush1.msra.mxu0 0.0
  %895 = vmatprep.subr.mxu0 0.0
  %896 = vmatpush1.msra.mxu0 0.0
  %897 = vmatprep.subr.mxu0 0.0
  %898 = vmatpush1.msra.mxu0 0.0
  %899 = vmatprep.subr.mxu0 0.0
  %900 = vmatpush1.msra.mxu0 0.0
  %901 = vmatprep.subr.mxu0 0.0
  %902 = vmatpush1.msra.mxu0 0.0
  %903 = vmatprep.subr.mxu0 0.0
  %904 = vmatpush1.msra.mxu0 0.0
  %905 = vmatprep.subr.mxu0 0.0
  %906 = vmatpush1.msra.mxu0 0.0
  %907 = vmatprep.subr.mxu0 0.0
  %908 = vmatpush1.msra.mxu0 0.0
  %909 = vmatprep.subr.mxu0 0.0
  %910 = vmatpush1.msra.mxu0 0.0
  %911 = vmatprep.subr.mxu0 0.0
  %912 = vmatpush1.msra.mxu0 0.0
  %913 = vmatprep.subr.mxu0 0.0
  %914 = vmatpush1.msra.mxu0 0.0
  %915 = vmatprep.mubr.f32.mxu0 0.0
  %916 = vmatmul.mubr.f32.gmra.mrb[0].mxu0 %v636
  %v917 = vpop.f32.mrb[0].mxu0
  %v918 = vadd.f32 %v847, %v917
  %v919 = vpop.f32.mrb[0].mxu0
  %v920 = vadd.f32 %v849, %v919
  %921 = vdwg.mxu0
  %v922 = vmax.f32 %v588, %v918
  %v923 = vmax.f32 %v590, %v920
  %s924 = scalar_lea.vmem %s0, 28
  %v925 = vld [vmem:[%s924] sm:$0xff]
  %v926 = vld [vmem:[%s924 + $0x8] sm:$0x3f]
  %v929 = vcombine.high %v925, %v925
  %v931 = vunpack.c.l.s4 1983009808
  %v932 = vunpack.c.0.s8 %v931
  %v933 = vlaneseq
  %v934 = vshrl.u32 %v933, 7
  %v935 = vsub.s32 %v932, %v934
  %v936 = vrot.slane %v925, %v935
  %v938 = vunpack.c.l.s4 1983009808
  %v939 = vunpack.c.0.s8 %v938
  %v940 = vlaneseq
  %v941 = vshrl.u32 %v940, 7
  %v942 = vsub.s32 %v939, %v941
  %v943 = vrot.slane %v929, %v942
  %v944 = vcombine.high %v936, %v936
  %v945 = vcombine.high %v943, %v943
  %v946 = vcombine.high %v926, %v926
  %v948 = vunpack.c.l.s4 1983009808
  %v949 = vunpack.c.0.s8 %v948
  %v950 = vlaneseq
  %v951 = vshrl.u32 %v950, 7
  %v952 = vsub.s32 %v949, %v951
  %v953 = vrot.slane %v926, %v952
  %v955 = vunpack.c.l.s4 1983009808
  %v956 = vunpack.c.0.s8 %v955
  %v957 = vlaneseq
  %v958 = vshrl.u32 %v957, 7
  %v959 = vsub.s32 %v956, %v958
  %v960 = vrot.slane %v946, %v959
  %v961 = vcombine.high %v953, %v953
  %v968 = vsel %vm305, %v960, 0
  %970 = vmatprep.subr.mxu0 %v49
  %971 = vmatpush1.msra.mxu0 %v48
  %972 = vmatprep.subr.mxu0 %v51
  %973 = vmatpush1.msra.mxu0 %v50
  %974 = vmatprep.subr.mxu0 %v53
  %975 = vmatpush1.msra.mxu0 %v52
  %976 = vmatprep.subr.mxu0 %v55
  %977 = vmatpush1.msra.mxu0 %v54
  %978 = vmatprep.subr.mxu0 %v57
  %979 = vmatpush1.msra.mxu0 %v56
  %980 = vmatprep.subr.mxu0 %v59
  %981 = vmatpush1.msra.mxu0 %v58
  %982 = vmatprep.subr.mxu0 %v61
  %983 = vmatpush1.msra.mxu0 %v60
  %984 = vmatprep.subr.mxu0 %v63
  %985 = vmatpush1.msra.mxu0 %v62
  %986 = vmatprep.subr.mxu0 %v65
  %987 = vmatpush1.msra.mxu0 %v64
  %988 = vmatprep.subr.mxu0 %v67
  %989 = vmatpush1.msra.mxu0 %v66
  %990 = vmatprep.subr.mxu0 %v69
  %991 = vmatpush1.msra.mxu0 %v68
  %992 = vmatprep.subr.mxu0 %v71
  %993 = vmatpush1.msra.mxu0 %v70
  %994 = vmatprep.subr.mxu0 %v73
  %995 = vmatpush1.msra.mxu0 %v72
  %996 = vmatprep.subr.mxu0 %v75
  %997 = vmatpush1.msra.mxu0 %v74
  %998 = vmatprep.subr.mxu0 %v77
  %999 = vmatpush1.msra.mxu0 %v76
  %1000 = vmatprep.subr.mxu0 %v79
  %1001 = vmatpush1.msra.mxu0 %v78
  %1002 = vmatprep.subr.mxu0 %v81
  %1003 = vmatpush1.msra.mxu0 %v80
  %1004 = vmatprep.subr.mxu0 %v83
  %1005 = vmatpush1.msra.mxu0 %v82
  %1006 = vmatprep.subr.mxu0 %v85
  %1007 = vmatpush1.msra.mxu0 %v84
  %1008 = vmatprep.subr.mxu0 %v87
  %1009 = vmatpush1.msra.mxu0 %v86
  %1010 = vmatprep.subr.mxu0 %v89
  %1011 = vmatpush1.msra.mxu0 %v88
  %1012 = vmatprep.subr.mxu0 %v91
  %1013 = vmatpush1.msra.mxu0 %v90
  %1014 = vmatprep.subr.mxu0 %v93
  %1015 = vmatpush1.msra.mxu0 %v92
  %1016 = vmatprep.subr.mxu0 %v95
  %1017 = vmatpush1.msra.mxu0 %v94
  %1018 = vmatprep.subr.mxu0 %v97
  %1019 = vmatpush1.msra.mxu0 %v96
  %1020 = vmatprep.subr.mxu0 %v99
  %1021 = vmatpush1.msra.mxu0 %v98
  %1022 = vmatprep.subr.mxu0 %v101
  %1023 = vmatpush1.msra.mxu0 %v100
  %1024 = vmatprep.subr.mxu0 %v103
  %1025 = vmatpush1.msra.mxu0 %v102
  %1026 = vmatprep.subr.mxu0 %v105
  %1027 = vmatpush1.msra.mxu0 %v104
  %1028 = vmatprep.subr.mxu0 %v107
  %1029 = vmatpush1.msra.mxu0 %v106
  %1030 = vmatprep.subr.mxu0 %v109
  %1031 = vmatpush1.msra.mxu0 %v108
  %1032 = vmatprep.subr.mxu0 %v111
  %1033 = vmatpush1.msra.mxu0 %v110
  %1034 = vmatprep.mubr.f32.mxu0 %v944
  %1035 = vmatmul.mubr.f32.gmra.mrb[0].mxu0 %v936
  %v1036 = vpop.f32.mrb[0].mxu0
  %v1037 = vadd.f32 0.0, %v1036
  %v1038 = vpop.f32.mrb[0].mxu0
  %v1039 = vadd.f32 0.0, %v1038
  %1040 = vdwg.mxu0
  %1041 = vmatprep.subr.mxu0 %v113
  %1042 = vmatpush1.msra.mxu0 %v112
  %1043 = vmatprep.subr.mxu0 %v115
  %1044 = vmatpush1.msra.mxu0 %v114
  %1045 = vmatprep.subr.mxu0 %v117
  %1046 = vmatpush1.msra.mxu0 %v116
  %1047 = vmatprep.subr.mxu0 %v119
  %1048 = vmatpush1.msra.mxu0 %v118
  %1049 = vmatprep.subr.mxu0 %v121
  %1050 = vmatpush1.msra.mxu0 %v120
  %1051 = vmatprep.subr.mxu0 %v123
  %1052 = vmatpush1.msra.mxu0 %v122
  %1053 = vmatprep.subr.mxu0 %v125
  %1054 = vmatpush1.msra.mxu0 %v124
  %1055 = vmatprep.subr.mxu0 %v127
  %1056 = vmatpush1.msra.mxu0 %v126
  %1057 = vmatprep.subr.mxu0 %v129
  %1058 = vmatpush1.msra.mxu0 %v128
  %1059 = vmatprep.subr.mxu0 %v131
  %1060 = vmatpush1.msra.mxu0 %v130
  %1061 = vmatprep.subr.mxu0 %v133
  %1062 = vmatpush1.msra.mxu0 %v132
  %1063 = vmatprep.subr.mxu0 %v135
  %1064 = vmatpush1.msra.mxu0 %v134
  %1065 = vmatprep.subr.mxu0 %v137
  %1066 = vmatpush1.msra.mxu0 %v136
  %1067 = vmatprep.subr.mxu0 %v139
  %1068 = vmatpush1.msra.mxu0 %v138
  %1069 = vmatprep.subr.mxu0 %v141
  %1070 = vmatpush1.msra.mxu0 %v140
  %1071 = vmatprep.subr.mxu0 %v143
  %1072 = vmatpush1.msra.mxu0 %v142
  %1073 = vmatprep.subr.mxu0 %v145
  %1074 = vmatpush1.msra.mxu0 %v144
  %1075 = vmatprep.subr.mxu0 %v147
  %1076 = vmatpush1.msra.mxu0 %v146
  %1077 = vmatprep.subr.mxu0 %v149
  %1078 = vmatpush1.msra.mxu0 %v148
  %1079 = vmatprep.subr.mxu0 %v151
  %1080 = vmatpush1.msra.mxu0 %v150
  %1081 = vmatprep.subr.mxu0 %v153
  %1082 = vmatpush1.msra.mxu0 %v152
  %1083 = vmatprep.subr.mxu0 %v155
  %1084 = vmatpush1.msra.mxu0 %v154
  %1085 = vmatprep.subr.mxu0 %v157
  %1086 = vmatpush1.msra.mxu0 %v156
  %1087 = vmatprep.subr.mxu0 %v159
  %1088 = vmatpush1.msra.mxu0 %v158
  %1089 = vmatprep.subr.mxu0 %v161
  %1090 = vmatpush1.msra.mxu0 %v160
  %1091 = vmatprep.subr.mxu0 %v163
  %1092 = vmatpush1.msra.mxu0 %v162
  %1093 = vmatprep.subr.mxu0 %v165
  %1094 = vmatpush1.msra.mxu0 %v164
  %1095 = vmatprep.subr.mxu0 %v167
  %1096 = vmatpush1.msra.mxu0 %v166
  %1097 = vmatprep.subr.mxu0 %v169
  %1098 = vmatpush1.msra.mxu0 %v168
  %1099 = vmatprep.subr.mxu0 %v171
  %1100 = vmatpush1.msra.mxu0 %v170
  %1101 = vmatprep.subr.mxu0 %v173
  %1102 = vmatpush1.msra.mxu0 %v172
  %1103 = vmatprep.subr.mxu0 %v175
  %1104 = vmatpush1.msra.mxu0 %v174
  %1105 = vmatprep.mubr.f32.mxu0 %v945
  %1106 = vmatmul.mubr.f32.gmra.mrb[0].mxu0 %v943
  %v1107 = vpop.f32.mrb[0].mxu0
  %v1108 = vadd.f32 %v1037, %v1107
  %v1109 = vpop.f32.mrb[0].mxu0
  %v1110 = vadd.f32 %v1039, %v1109
  %1111 = vdwg.mxu0
  %1112 = vmatprep.subr.mxu0 %v177
  %1113 = vmatpush1.msra.mxu0 %v176
  %1114 = vmatprep.subr.mxu0 %v179
  %1115 = vmatpush1.msra.mxu0 %v178
  %1116 = vmatprep.subr.mxu0 %v181
  %1117 = vmatpush1.msra.mxu0 %v180
  %1118 = vmatprep.subr.mxu0 %v183
  %1119 = vmatpush1.msra.mxu0 %v182
  %1120 = vmatprep.subr.mxu0 %v185
  %1121 = vmatpush1.msra.mxu0 %v184
  %1122 = vmatprep.subr.mxu0 %v187
  %1123 = vmatpush1.msra.mxu0 %v186
  %1124 = vmatprep.subr.mxu0 %v189
  %1125 = vmatpush1.msra.mxu0 %v188
  %1126 = vmatprep.subr.mxu0 %v191
  %1127 = vmatpush1.msra.mxu0 %v190
  %1128 = vmatprep.subr.mxu0 %v193
  %1129 = vmatpush1.msra.mxu0 %v192
  %1130 = vmatprep.subr.mxu0 %v195
  %1131 = vmatpush1.msra.mxu0 %v194
  %1132 = vmatprep.subr.mxu0 %v197
  %1133 = vmatpush1.msra.mxu0 %v196
  %1134 = vmatprep.subr.mxu0 %v199
  %1135 = vmatpush1.msra.mxu0 %v198
  %1136 = vmatprep.subr.mxu0 %v201
  %1137 = vmatpush1.msra.mxu0 %v200
  %1138 = vmatprep.subr.mxu0 %v203
  %1139 = vmatpush1.msra.mxu0 %v202
  %1140 = vmatprep.subr.mxu0 %v205
  %1141 = vmatpush1.msra.mxu0 %v204
  %1142 = vmatprep.subr.mxu0 %v207
  %1143 = vmatpush1.msra.mxu0 %v206
  %1144 = vmatprep.subr.mxu0 %v209
  %1145 = vmatpush1.msra.mxu0 %v208
  %1146 = vmatprep.subr.mxu0 %v211
  %1147 = vmatpush1.msra.mxu0 %v210
  %1148 = vmatprep.subr.mxu0 %v213
  %1149 = vmatpush1.msra.mxu0 %v212
  %1150 = vmatprep.subr.mxu0 %v215
  %1151 = vmatpush1.msra.mxu0 %v214
  %1152 = vmatprep.subr.mxu0 %v217
  %1153 = vmatpush1.msra.mxu0 %v216
  %1154 = vmatprep.subr.mxu0 %v219
  %1155 = vmatpush1.msra.mxu0 %v218
  %1156 = vmatprep.subr.mxu0 %v221
  %1157 = vmatpush1.msra.mxu0 %v220
  %1158 = vmatprep.subr.mxu0 %v223
  %1159 = vmatpush1.msra.mxu0 %v222
  %1160 = vmatprep.subr.mxu0 %v225
  %1161 = vmatpush1.msra.mxu0 %v224
  %1162 = vmatprep.subr.mxu0 %v227
  %1163 = vmatpush1.msra.mxu0 %v226
  %1164 = vmatprep.subr.mxu0 %v229
  %1165 = vmatpush1.msra.mxu0 %v228
  %1166 = vmatprep.subr.mxu0 %v231
  %1167 = vmatpush1.msra.mxu0 %v230
  %1168 = vmatprep.subr.mxu0 %v233
  %1169 = vmatpush1.msra.mxu0 %v232
  %1170 = vmatprep.subr.mxu0 %v235
  %1171 = vmatpush1.msra.mxu0 %v234
  %1172 = vmatprep.subr.mxu0 %v237
  %1173 = vmatpush1.msra.mxu0 %v236
  %1174 = vmatprep.subr.mxu0 %v239
  %1175 = vmatpush1.msra.mxu0 %v238
  %1176 = vmatprep.mubr.f32.mxu0 %v961
  %1177 = vmatmul.mubr.f32.gmra.mrb[0].mxu0 %v953
  %v1178 = vpop.f32.mrb[0].mxu0
  %v1179 = vadd.f32 %v1108, %v1178
  %v1180 = vpop.f32.mrb[0].mxu0
  %v1181 = vadd.f32 %v1110, %v1180
  %1182 = vdwg.mxu0
  %1183 = vmatprep.subr.mxu0 %v241
  %1184 = vmatpush1.msra.mxu0 %v240
  %1185 = vmatprep.subr.mxu0 %v243
  %1186 = vmatpush1.msra.mxu0 %v242
  %1187 = vmatprep.subr.mxu0 %v245
  %1188 = vmatpush1.msra.mxu0 %v244
  %1189 = vmatprep.subr.mxu0 %v247
  %1190 = vmatpush1.msra.mxu0 %v246
  %1191 = vmatprep.subr.mxu0 %v249
  %1192 = vmatpush1.msra.mxu0 %v248
  %1193 = vmatprep.subr.mxu0 %v251
  %1194 = vmatpush1.msra.mxu0 %v250
  %1195 = vmatprep.subr.mxu0 %v253
  %1196 = vmatpush1.msra.mxu0 %v252
  %1197 = vmatprep.subr.mxu0 %v255
  %1198 = vmatpush1.msra.mxu0 %v254
  %1199 = vmatprep.subr.mxu0 %v257
  %1200 = vmatpush1.msra.mxu0 %v256
  %1201 = vmatprep.subr.mxu0 %v259
  %1202 = vmatpush1.msra.mxu0 %v258
  %1203 = vmatprep.subr.mxu0 %v261
  %1204 = vmatpush1.msra.mxu0 %v260
  %1205 = vmatprep.subr.mxu0 %v263
  %1206 = vmatpush1.msra.mxu0 %v262
  %1207 = vmatprep.subr.mxu0 0.0
  %1208 = vmatpush1.msra.mxu0 0.0
  %1209 = vmatprep.subr.mxu0 0.0
  %1210 = vmatpush1.msra.mxu0 0.0
  %1211 = vmatprep.subr.mxu0 0.0
  %1212 = vmatpush1.msra.mxu0 0.0
  %1213 = vmatprep.subr.mxu0 0.0
  %1214 = vmatpush1.msra.mxu0 0.0
  %1215 = vmatprep.subr.mxu0 0.0
  %1216 = vmatpush1.msra.mxu0 0.0
  %1217 = vmatprep.subr.mxu0 0.0
  %1218 = vmatpush1.msra.mxu0 0.0
  %1219 = vmatprep.subr.mxu0 0.0
  %1220 = vmatpush1.msra.mxu0 0.0
  %1221 = vmatprep.subr.mxu0 0.0
  %1222 = vmatpush1.msra.mxu0 0.0
  %1223 = vmatprep.subr.mxu0 0.0
  %1224 = vmatpush1.msra.mxu0 0.0
  %1225 = vmatprep.subr.mxu0 0.0
  %1226 = vmatpush1.msra.mxu0 0.0
  %1227 = vmatprep.subr.mxu0 0.0
  %1228 = vmatpush1.msra.mxu0 0.0
  %1229 = vmatprep.subr.mxu0 0.0
  %1230 = vmatpush1.msra.mxu0 0.0
  %1231 = vmatprep.subr.mxu0 0.0
  %1232 = vmatpush1.msra.mxu0 0.0
  %1233 = vmatprep.subr.mxu0 0.0
  %1234 = vmatpush1.msra.mxu0 0.0
  %1235 = vmatprep.subr.mxu0 0.0
  %1236 = vmatpush1.msra.mxu0 0.0
  %1237 = vmatprep.subr.mxu0 0.0
  %1238 = vmatpush1.msra.mxu0 0.0
  %1239 = vmatprep.subr.mxu0 0.0
  %1240 = vmatpush1.msra.mxu0 0.0
  %1241 = vmatprep.subr.mxu0 0.0
  %1242 = vmatpush1.msra.mxu0 0.0
  %1243 = vmatprep.subr.mxu0 0.0
  %1244 = vmatpush1.msra.mxu0 0.0
  %1245 = vmatprep.subr.mxu0 0.0
  %1246 = vmatpush1.msra.mxu0 0.0
  %1247 = vmatprep.mubr.f32.mxu0 0.0
  %1248 = vmatmul.mubr.f32.gmra.mrb[0].mxu0 %v968
  %v1249 = vpop.f32.mrb[0].mxu0
  %v1250 = vadd.f32 %v1179, %v1249
  %v1251 = vpop.f32.mrb[0].mxu0
  %v1252 = vadd.f32 %v1181, %v1251
  %1253 = vdwg.mxu0
  %v1254 = vmax.f32 %v922, %v1250
  %v1255 = vmax.f32 %v923, %v1252
  %s1256 = scalar_lea.vmem %s0, 42
  %v1257 = vld [vmem:[%s1256] sm:$0xff]
  %v1258 = vld [vmem:[%s1256 + $0x8] sm:$0x3f]
  %v1261 = vcombine.high %v1257, %v1257
  %v1263 = vunpack.c.l.s4 1983009808
  %v1264 = vunpack.c.0.s8 %v1263
  %v1265 = vlaneseq
  %v1266 = vshrl.u32 %v1265, 7
  %v1267 = vsub.s32 %v1264, %v1266
  %v1268 = vrot.slane %v1257, %v1267
  %v1270 = vunpack.c.l.s4 1983009808
  %v1271 = vunpack.c.0.s8 %v1270
  %v1272 = vlaneseq
  %v1273 = vshrl.u32 %v1272, 7
  %v1274 = vsub.s32 %v1271, %v1273
  %v1275 = vrot.slane %v1261, %v1274
  %v1276 = vcombine.high %v1268, %v1268
  %v1277 = vcombine.high %v1275, %v1275
  %v1278 = vcombine.high %v1258, %v1258
  %v1280 = vunpack.c.l.s4 1983009808
  %v1281 = vunpack.c.0.s8 %v1280
  %v1282 = vlaneseq
  %v1283 = vshrl.u32 %v1282, 7
  %v1284 = vsub.s32 %v1281, %v1283
  %v1285 = vrot.slane %v1258, %v1284
  %v1287 = vunpack.c.l.s4 1983009808
  %v1288 = vunpack.c.0.s8 %v1287
  %v1289 = vlaneseq
  %v1290 = vshrl.u32 %v1289, 7
  %v1291 = vsub.s32 %v1288, %v1290
  %v1292 = vrot.slane %v1278, %v1291
  %v1293 = vcombine.high %v1285, %v1285
  %v1300 = vsel %vm305, %v1292, 0
  %1302 = vmatprep.subr.mxu0 %v49
  %1303 = vmatpush1.msra.mxu0 %v48
  %1304 = vmatprep.subr.mxu0 %v51
  %1305 = vmatpush1.msra.mxu0 %v50
  %1306 = vmatprep.subr.mxu0 %v53
  %1307 = vmatpush1.msra.mxu0 %v52
  %1308 = vmatprep.subr.mxu0 %v55
  %1309 = vmatpush1.msra.mxu0 %v54
  %1310 = vmatprep.subr.mxu0 %v57
  %1311 = vmatpush1.msra.mxu0 %v56
  %1312 = vmatprep.subr.mxu0 %v59
  %1313 = vmatpush1.msra.mxu0 %v58
  %1314 = vmatprep.subr.mxu0 %v61
  %1315 = vmatpush1.msra.mxu0 %v60
  %1316 = vmatprep.subr.mxu0 %v63
  %1317 = vmatpush1.msra.mxu0 %v62
  %1318 = vmatprep.subr.mxu0 %v65
  %1319 = vmatpush1.msra.mxu0 %v64
  %1320 = vmatprep.subr.mxu0 %v67
  %1321 = vmatpush1.msra.mxu0 %v66
  %1322 = vmatprep.subr.mxu0 %v69
  %1323 = vmatpush1.msra.mxu0 %v68
  %1324 = vmatprep.subr.mxu0 %v71
  %1325 = vmatpush1.msra.mxu0 %v70
  %1326 = vmatprep.subr.mxu0 %v73
  %1327 = vmatpush1.msra.mxu0 %v72
  %1328 = vmatprep.subr.mxu0 %v75
  %1329 = vmatpush1.msra.mxu0 %v74
  %1330 = vmatprep.subr.mxu0 %v77
  %1331 = vmatpush1.msra.mxu0 %v76
  %1332 = vmatprep.subr.mxu0 %v79
  %1333 = vmatpush1.msra.mxu0 %v78
  %1334 = vmatprep.subr.mxu0 %v81
  %1335 = vmatpush1.msra.mxu0 %v80
  %1336 = vmatprep.subr.mxu0 %v83
  %1337 = vmatpush1.msra.mxu0 %v82
  %1338 = vmatprep.subr.mxu0 %v85
  %1339 = vmatpush1.msra.mxu0 %v84
  %1340 = vmatprep.subr.mxu0 %v87
  %1341 = vmatpush1.msra.mxu0 %v86
  %1342 = vmatprep.subr.mxu0 %v89
  %1343 = vmatpush1.msra.mxu0 %v88
  %1344 = vmatprep.subr.mxu0 %v91
  %1345 = vmatpush1.msra.mxu0 %v90
  %1346 = vmatprep.subr.mxu0 %v93
  %1347 = vmatpush1.msra.mxu0 %v92
  %1348 = vmatprep.subr.mxu0 %v95
  %1349 = vmatpush1.msra.mxu0 %v94
  %1350 = vmatprep.subr.mxu0 %v97
  %1351 = vmatpush1.msra.mxu0 %v96
  %1352 = vmatprep.subr.mxu0 %v99
  %1353 = vmatpush1.msra.mxu0 %v98
  %1354 = vmatprep.subr.mxu0 %v101
  %1355 = vmatpush1.msra.mxu0 %v100
  %1356 = vmatprep.subr.mxu0 %v103
  %1357 = vmatpush1.msra.mxu0 %v102
  %1358 = vmatprep.subr.mxu0 %v105
  %1359 = vmatpush1.msra.mxu0 %v104
  %1360 = vmatprep.subr.mxu0 %v107
  %1361 = vmatpush1.msra.mxu0 %v106
  %1362 = vmatprep.subr.mxu0 %v109
  %1363 = vmatpush1.msra.mxu0 %v108
  %1364 = vmatprep.subr.mxu0 %v111
  %1365 = vmatpush1.msra.mxu0 %v110
  %1366 = vmatprep.mubr.f32.mxu0 %v1276
  %1367 = vmatmul.mubr.f32.gmra.mrb[0].mxu0 %v1268
  %v1368 = vpop.f32.mrb[0].mxu0
  %v1369 = vadd.f32 0.0, %v1368
  %v1370 = vpop.f32.mrb[0].mxu0
  %v1371 = vadd.f32 0.0, %v1370
  %1372 = vdwg.mxu0
  %1373 = vmatprep.subr.mxu0 %v113
  %1374 = vmatpush1.msra.mxu0 %v112
  %1375 = vmatprep.subr.mxu0 %v115
  %1376 = vmatpush1.msra.mxu0 %v114
  %1377 = vmatprep.subr.mxu0 %v117
  %1378 = vmatpush1.msra.mxu0 %v116
  %1379 = vmatprep.subr.mxu0 %v119
  %1380 = vmatpush1.msra.mxu0 %v118
  %1381 = vmatprep.subr.mxu0 %v121
  %1382 = vmatpush1.msra.mxu0 %v120
  %1383 = vmatprep.subr.mxu0 %v123
  %1384 = vmatpush1.msra.mxu0 %v122
  %1385 = vmatprep.subr.mxu0 %v125
  %1386 = vmatpush1.msra.mxu0 %v124
  %1387 = vmatprep.subr.mxu0 %v127
  %1388 = vmatpush1.msra.mxu0 %v126
  %1389 = vmatprep.subr.mxu0 %v129
  %1390 = vmatpush1.msra.mxu0 %v128
  %1391 = vmatprep.subr.mxu0 %v131
  %1392 = vmatpush1.msra.mxu0 %v130
  %1393 = vmatprep.subr.mxu0 %v133
  %1394 = vmatpush1.msra.mxu0 %v132
  %1395 = vmatprep.subr.mxu0 %v135
  %1396 = vmatpush1.msra.mxu0 %v134
  %1397 = vmatprep.subr.mxu0 %v137
  %1398 = vmatpush1.msra.mxu0 %v136
  %1399 = vmatprep.subr.mxu0 %v139
  %1400 = vmatpush1.msra.mxu0 %v138
  %1401 = vmatprep.subr.mxu0 %v141
  %1402 = vmatpush1.msra.mxu0 %v140
  %1403 = vmatprep.subr.mxu0 %v143
  %1404 = vmatpush1.msra.mxu0 %v142
  %1405 = vmatprep.subr.mxu0 %v145
  %1406 = vmatpush1.msra.mxu0 %v144
  %1407 = vmatprep.subr.mxu0 %v147
  %1408 = vmatpush1.msra.mxu0 %v146
  %1409 = vmatprep.subr.mxu0 %v149
  %1410 = vmatpush1.msra.mxu0 %v148
  %1411 = vmatprep.subr.mxu0 %v151
  %1412 = vmatpush1.msra.mxu0 %v150
  %1413 = vmatprep.subr.mxu0 %v153
  %1414 = vmatpush1.msra.mxu0 %v152
  %1415 = vmatprep.subr.mxu0 %v155
  %1416 = vmatpush1.msra.mxu0 %v154
  %1417 = vmatprep.subr.mxu0 %v157
  %1418 = vmatpush1.msra.mxu0 %v156
  %1419 = vmatprep.subr.mxu0 %v159
  %1420 = vmatpush1.msra.mxu0 %v158
  %1421 = vmatprep.subr.mxu0 %v161
  %1422 = vmatpush1.msra.mxu0 %v160
  %1423 = vmatprep.subr.mxu0 %v163
  %1424 = vmatpush1.msra.mxu0 %v162
  %1425 = vmatprep.subr.mxu0 %v165
  %1426 = vmatpush1.msra.mxu0 %v164
  %1427 = vmatprep.subr.mxu0 %v167
  %1428 = vmatpush1.msra.mxu0 %v166
  %1429 = vmatprep.subr.mxu0 %v169
  %1430 = vmatpush1.msra.mxu0 %v168
  %1431 = vmatprep.subr.mxu0 %v171
  %1432 = vmatpush1.msra.mxu0 %v170
  %1433 = vmatprep.subr.mxu0 %v173
  %1434 = vmatpush1.msra.mxu0 %v172
  %1435 = vmatprep.subr.mxu0 %v175
  %1436 = vmatpush1.msra.mxu0 %v174
  %1437 = vmatprep.mubr.f32.mxu0 %v1277
  %1438 = vmatmul.mubr.f32.gmra.mrb[0].mxu0 %v1275
  %v1439 = vpop.f32.mrb[0].mxu0
  %v1440 = vadd.f32 %v1369, %v1439
  %v1441 = vpop.f32.mrb[0].mxu0
  %v1442 = vadd.f32 %v1371, %v1441
  %1443 = vdwg.mxu0
  %1444 = vmatprep.subr.mxu0 %v177
  %1445 = vmatpush1.msra.mxu0 %v176
  %1446 = vmatprep.subr.mxu0 %v179
  %1447 = vmatpush1.msra.mxu0 %v178
  %1448 = vmatprep.subr.mxu0 %v181
  %1449 = vmatpush1.msra.mxu0 %v180
  %1450 = vmatprep.subr.mxu0 %v183
  %1451 = vmatpush1.msra.mxu0 %v182
  %1452 = vmatprep.subr.mxu0 %v185
  %1453 = vmatpush1.msra.mxu0 %v184
  %1454 = vmatprep.subr.mxu0 %v187
  %1455 = vmatpush1.msra.mxu0 %v186
  %1456 = vmatprep.subr.mxu0 %v189
  %1457 = vmatpush1.msra.mxu0 %v188
  %1458 = vmatprep.subr.mxu0 %v191
  %1459 = vmatpush1.msra.mxu0 %v190
  %1460 = vmatprep.subr.mxu0 %v193
  %1461 = vmatpush1.msra.mxu0 %v192
  %1462 = vmatprep.subr.mxu0 %v195
  %1463 = vmatpush1.msra.mxu0 %v194
  %1464 = vmatprep.subr.mxu0 %v197
  %1465 = vmatpush1.msra.mxu0 %v196
  %1466 = vmatprep.subr.mxu0 %v199
  %1467 = vmatpush1.msra.mxu0 %v198
  %1468 = vmatprep.subr.mxu0 %v201
  %1469 = vmatpush1.msra.mxu0 %v200
  %1470 = vmatprep.subr.mxu0 %v203
  %1471 = vmatpush1.msra.mxu0 %v202
  %1472 = vmatprep.subr.mxu0 %v205
  %1473 = vmatpush1.msra.mxu0 %v204
  %1474 = vmatprep.subr.mxu0 %v207
  %1475 = vmatpush1.msra.mxu0 %v206
  %1476 = vmatprep.subr.mxu0 %v209
  %1477 = vmatpush1.msra.mxu0 %v208
  %1478 = vmatprep.subr.mxu0 %v211
  %1479 = vmatpush1.msra.mxu0 %v210
  %1480 = vmatprep.subr.mxu0 %v213
  %1481 = vmatpush1.msra.mxu0 %v212
  %1482 = vmatprep.subr.mxu0 %v215
  %1483 = vmatpush1.msra.mxu0 %v214
  %1484 = vmatprep.subr.mxu0 %v217
  %1485 = vmatpush1.msra.mxu0 %v216
  %1486 = vmatprep.subr.mxu0 %v219
  %1487 = vmatpush1.msra.mxu0 %v218
  %1488 = vmatprep.subr.mxu0 %v221
  %1489 = vmatpush1.msra.mxu0 %v220
  %1490 = vmatprep.subr.mxu0 %v223
  %1491 = vmatpush1.msra.mxu0 %v222
  %1492 = vmatprep.subr.mxu0 %v225
  %1493 = vmatpush1.msra.mxu0 %v224
  %1494 = vmatprep.subr.mxu0 %v227
  %1495 = vmatpush1.msra.mxu0 %v226
  %1496 = vmatprep.subr.mxu0 %v229
  %1497 = vmatpush1.msra.mxu0 %v228
  %1498 = vmatprep.subr.mxu0 %v231
  %1499 = vmatpush1.msra.mxu0 %v230
  %1500 = vmatprep.subr.mxu0 %v233
  %1501 = vmatpush1.msra.mxu0 %v232
  %1502 = vmatprep.subr.mxu0 %v235
  %1503 = vmatpush1.msra.mxu0 %v234
  %1504 = vmatprep.subr.mxu0 %v237
  %1505 = vmatpush1.msra.mxu0 %v236
  %1506 = vmatprep.subr.mxu0 %v239
  %1507 = vmatpush1.msra.mxu0 %v238
  %1508 = vmatprep.mubr.f32.mxu0 %v1293
  %1509 = vmatmul.mubr.f32.gmra.mrb[0].mxu0 %v1285
  %v1510 = vpop.f32.mrb[0].mxu0
  %v1511 = vadd.f32 %v1440, %v1510
  %v1512 = vpop.f32.mrb[0].mxu0
  %v1513 = vadd.f32 %v1442, %v1512
  %1514 = vdwg.mxu0
  %1515 = vmatprep.subr.mxu0 %v241
  %1516 = vmatpush1.msra.mxu0 %v240
  %1517 = vmatprep.subr.mxu0 %v243
  %1518 = vmatpush1.msra.mxu0 %v242
  %1519 = vmatprep.subr.mxu0 %v245
  %1520 = vmatpush1.msra.mxu0 %v244
  %1521 = vmatprep.subr.mxu0 %v247
  %1522 = vmatpush1.msra.mxu0 %v246
  %1523 = vmatprep.subr.mxu0 %v249
  %1524 = vmatpush1.msra.mxu0 %v248
  %1525 = vmatprep.subr.mxu0 %v251
  %1526 = vmatpush1.msra.mxu0 %v250
  %1527 = vmatprep.subr.mxu0 %v253
  %1528 = vmatpush1.msra.mxu0 %v252
  %1529 = vmatprep.subr.mxu0 %v255
  %1530 = vmatpush1.msra.mxu0 %v254
  %1531 = vmatprep.subr.mxu0 %v257
  %1532 = vmatpush1.msra.mxu0 %v256
  %1533 = vmatprep.subr.mxu0 %v259
  %1534 = vmatpush1.msra.mxu0 %v258
  %1535 = vmatprep.subr.mxu0 %v261
  %1536 = vmatpush1.msra.mxu0 %v260
  %1537 = vmatprep.subr.mxu0 %v263
  %1538 = vmatpush1.msra.mxu0 %v262
  %1539 = vmatprep.subr.mxu0 0.0
  %1540 = vmatpush1.msra.mxu0 0.0
  %1541 = vmatprep.subr.mxu0 0.0
  %1542 = vmatpush1.msra.mxu0 0.0
  %1543 = vmatprep.subr.mxu0 0.0
  %1544 = vmatpush1.msra.mxu0 0.0
  %1545 = vmatprep.subr.mxu0 0.0
  %1546 = vmatpush1.msra.mxu0 0.0
  %1547 = vmatprep.subr.mxu0 0.0
  %1548 = vmatpush1.msra.mxu0 0.0
  %1549 = vmatprep.subr.mxu0 0.0
  %1550 = vmatpush1.msra.mxu0 0.0
  %1551 = vmatprep.subr.mxu0 0.0
  %1552 = vmatpush1.msra.mxu0 0.0
  %1553 = vmatprep.subr.mxu0 0.0
  %1554 = vmatpush1.msra.mxu0 0.0
  %1555 = vmatprep.subr.mxu0 0.0
  %1556 = vmatpush1.msra.mxu0 0.0
  %1557 = vmatprep.subr.mxu0 0.0
  %1558 = vmatpush1.msra.mxu0 0.0
  %1559 = vmatprep.subr.mxu0 0.0
  %1560 = vmatpush1.msra.mxu0 0.0
  %1561 = vmatprep.subr.mxu0 0.0
  %1562 = vmatpush1.msra.mxu0 0.0
  %1563 = vmatprep.subr.mxu0 0.0
  %1564 = vmatpush1.msra.mxu0 0.0
  %1565 = vmatprep.subr.mxu0 0.0
  %1566 = vmatpush1.msra.mxu0 0.0
  %1567 = vmatprep.subr.mxu0 0.0
  %1568 = vmatpush1.msra.mxu0 0.0
  %1569 = vmatprep.subr.mxu0 0.0
  %1570 = vmatpush1.msra.mxu0 0.0
  %1571 = vmatprep.subr.mxu0 0.0
  %1572 = vmatpush1.msra.mxu0 0.0
  %1573 = vmatprep.subr.mxu0 0.0
  %1574 = vmatpush1.msra.mxu0 0.0
  %1575 = vmatprep.subr.mxu0 0.0
  %1576 = vmatpush1.msra.mxu0 0.0
  %1577 = vmatprep.subr.mxu0 0.0
  %1578 = vmatpush1.msra.mxu0 0.0
  %1579 = vmatprep.mubr.f32.mxu0 0.0
  %1580 = vmatmul.mubr.f32.gmra.mrb[0].mxu0 %v1300
  %v1581 = vpop.f32.mrb[0].mxu0
  %v1582 = vadd.f32 %v1511, %v1581
  %v1583 = vpop.f32.mrb[0].mxu0
  %v1584 = vadd.f32 %v1513, %v1583
  %1585 = vdwg.mxu0
  %v1586 = vmax.f32 %v1254, %v1582
  %v1587 = vmax.f32 %v1255, %v1584
  %v1588 = vld [vmem:[%s4] sm:$0x3]
  %v1590 = vlaneseq
  %v1591 = vshrl.u32 %v1590, 7
  %v1592 = vsub.s32 0, %v1591
  %v1593 = vrot.slane %v1588, %v1592
  %v1594 = vlaneseq
  %v1595 = vshrl.u32 %v1594, 7
  %v1596 = vsub.s32 1, %v1595
  %v1597 = vrot.slane %v1588, %v1596
  %v1600 = vadd.f32 %v1586, %v1593
  %v1601 = vadd.f32 %v1587, %v1597
  %v1602 = vmax.f32 %v1600, 0.0
  %v1603 = vmax.f32 %v1601, 0.0
  %v1604 = vld [vmem:[%s1] sm:$0xff]
  %v1605 = vld [vmem:[%s1 + $0x8] sm:$0x3f]
  %v1608 = vcombine.high %v1604, %v1604
  %v1610 = vunpack.c.l.s4 1983009808
  %v1611 = vunpack.c.0.s8 %v1610
  %v1612 = vlaneseq
  %v1613 = vshrl.u32 %v1612, 7
  %v1614 = vsub.s32 %v1611, %v1613
  %v1615 = vrot.slane %v1604, %v1614
  %v1617 = vunpack.c.l.s4 1983009808
  %v1618 = vunpack.c.0.s8 %v1617
  %v1619 = vlaneseq
  %v1620 = vshrl.u32 %v1619, 7
  %v1621 = vsub.s32 %v1618, %v1620
  %v1622 = vrot.slane %v1608, %v1621
  %v1623 = vcombine.high %v1615, %v1615
  %v1624 = vcombine.high %v1622, %v1622
  %v1625 = vcombine.high %v1605, %v1605
  %v1627 = vunpack.c.l.s4 1983009808
  %v1628 = vunpack.c.0.s8 %v1627
  %v1629 = vlaneseq
  %v1630 = vshrl.u32 %v1629, 7
  %v1631 = vsub.s32 %v1628, %v1630
  %v1632 = vrot.slane %v1605, %v1631
  %v1634 = vunpack.c.l.s4 1983009808
  %v1635 = vunpack.c.0.s8 %v1634
  %v1636 = vlaneseq
  %v1637 = vshrl.u32 %v1636, 7
  %v1638 = vsub.s32 %v1635, %v1637
  %v1639 = vrot.slane %v1625, %v1638
  %v1640 = vcombine.high %v1632, %v1632
  %v1647 = vsel %vm305, %v1639, 0
  %1649 = vmatprep.subr.mxu0 %v49
  %1650 = vmatpush1.msra.mxu0 %v48
  %1651 = vmatprep.subr.mxu0 %v51
  %1652 = vmatpush1.msra.mxu0 %v50
  %1653 = vmatprep.subr.mxu0 %v53
  %1654 = vmatpush1.msra.mxu0 %v52
  %1655 = vmatprep.subr.mxu0 %v55
  %1656 = vmatpush1.msra.mxu0 %v54
  %1657 = vmatprep.subr.mxu0 %v57
  %1658 = vmatpush1.msra.mxu0 %v56
  %1659 = vmatprep.subr.mxu0 %v59
  %1660 = vmatpush1.msra.mxu0 %v58
  %1661 = vmatprep.subr.mxu0 %v61
  %1662 = vmatpush1.msra.mxu0 %v60
  %1663 = vmatprep.subr.mxu0 %v63
  %1664 = vmatpush1.msra.mxu0 %v62
  %1665 = vmatprep.subr.mxu0 %v65
  %1666 = vmatpush1.msra.mxu0 %v64
  %1667 = vmatprep.subr.mxu0 %v67
  %1668 = vmatpush1.msra.mxu0 %v66
  %1669 = vmatprep.subr.mxu0 %v69
  %1670 = vmatpush1.msra.mxu0 %v68
  %1671 = vmatprep.subr.mxu0 %v71
  %1672 = vmatpush1.msra.mxu0 %v70
  %1673 = vmatprep.subr.mxu0 %v73
  %1674 = vmatpush1.msra.mxu0 %v72
  %1675 = vmatprep.subr.mxu0 %v75
  %1676 = vmatpush1.msra.mxu0 %v74
  %1677 = vmatprep.subr.mxu0 %v77
  %1678 = vmatpush1.msra.mxu0 %v76
  %1679 = vmatprep.subr.mxu0 %v79
  %1680 = vmatpush1.msra.mxu0 %v78
  %1681 = vmatprep.subr.mxu0 %v81
  %1682 = vmatpush1.msra.mxu0 %v80
  %1683 = vmatprep.subr.mxu0 %v83
  %1684 = vmatpush1.msra.mxu0 %v82
  %1685 = vmatprep.subr.mxu0 %v85
  %1686 = vmatpush1.msra.mxu0 %v84
  %1687 = vmatprep.subr.mxu0 %v87
  %1688 = vmatpush1.msra.mxu0 %v86
  %1689 = vmatprep.subr.mxu0 %v89
  %1690 = vmatpush1.msra.mxu0 %v88
  %1691 = vmatprep.subr.mxu0 %v91
  %1692 = vmatpush1.msra.mxu0 %v90
  %1693 = vmatprep.subr.mxu0 %v93
  %1694 = vmatpush1.msra.mxu0 %v92
  %1695 = vmatprep.subr.mxu0 %v95
  %1696 = vmatpush1.msra.mxu0 %v94
  %1697 = vmatprep.subr.mxu0 %v97
  %1698 = vmatpush1.msra.mxu0 %v96
  %1699 = vmatprep.subr.mxu0 %v99
  %1700 = vmatpush1.msra.mxu0 %v98
  %1701 = vmatprep.subr.mxu0 %v101
  %1702 = vmatpush1.msra.mxu0 %v100
  %1703 = vmatprep.subr.mxu0 %v103
  %1704 = vmatpush1.msra.mxu0 %v102
  %1705 = vmatprep.subr.mxu0 %v105
  %1706 = vmatpush1.msra.mxu0 %v104
  %1707 = vmatprep.subr.mxu0 %v107
  %1708 = vmatpush1.msra.mxu0 %v106
  %1709 = vmatprep.subr.mxu0 %v109
  %1710 = vmatpush1.msra.mxu0 %v108
  %1711 = vmatprep.subr.mxu0 %v111
  %1712 = vmatpush1.msra.mxu0 %v110
  %1713 = vmatprep.mubr.f32.mxu0 %v1623
  %1714 = vmatmul.mubr.f32.gmra.mrb[0].mxu0 %v1615
  %v1715 = vpop.f32.mrb[0].mxu0
  %v1716 = vadd.f32 0.0, %v1715
  %v1717 = vpop.f32.mrb[0].mxu0
  %v1718 = vadd.f32 0.0, %v1717
  %1719 = vdwg.mxu0
  %1720 = vmatprep.subr.mxu0 %v113
  %1721 = vmatpush1.msra.mxu0 %v112
  %1722 = vmatprep.subr.mxu0 %v115
  %1723 = vmatpush1.msra.mxu0 %v114
  %1724 = vmatprep.subr.mxu0 %v117
  %1725 = vmatpush1.msra.mxu0 %v116
  %1726 = vmatprep.subr.mxu0 %v119
  %1727 = vmatpush1.msra.mxu0 %v118
  %1728 = vmatprep.subr.mxu0 %v121
  %1729 = vmatpush1.msra.mxu0 %v120
  %1730 = vmatprep.subr.mxu0 %v123
  %1731 = vmatpush1.msra.mxu0 %v122
  %1732 = vmatprep.subr.mxu0 %v125
  %1733 = vmatpush1.msra.mxu0 %v124
  %1734 = vmatprep.subr.mxu0 %v127
  %1735 = vmatpush1.msra.mxu0 %v126
  %1736 = vmatprep.subr.mxu0 %v129
  %1737 = vmatpush1.msra.mxu0 %v128
  %1738 = vmatprep.subr.mxu0 %v131
  %1739 = vmatpush1.msra.mxu0 %v130
  %1740 = vmatprep.subr.mxu0 %v133
  %1741 = vmatpush1.msra.mxu0 %v132
  %1742 = vmatprep.subr.mxu0 %v135
  %1743 = vmatpush1.msra.mxu0 %v134
  %1744 = vmatprep.subr.mxu0 %v137
  %1745 = vmatpush1.msra.mxu0 %v136
  %1746 = vmatprep.subr.mxu0 %v139
  %1747 = vmatpush1.msra.mxu0 %v138
  %1748 = vmatprep.subr.mxu0 %v141
  %1749 = vmatpush1.msra.mxu0 %v140
  %1750 = vmatprep.subr.mxu0 %v143
  %1751 = vmatpush1.msra.mxu0 %v142
  %1752 = vmatprep.subr.mxu0 %v145
  %1753 = vmatpush1.msra.mxu0 %v144
  %1754 = vmatprep.subr.mxu0 %v147
  %1755 = vmatpush1.msra.mxu0 %v146
  %1756 = vmatprep.subr.mxu0 %v149
  %1757 = vmatpush1.msra.mxu0 %v148
  %1758 = vmatprep.subr.mxu0 %v151
  %1759 = vmatpush1.msra.mxu0 %v150
  %1760 = vmatprep.subr.mxu0 %v153
  %1761 = vmatpush1.msra.mxu0 %v152
  %1762 = vmatprep.subr.mxu0 %v155
  %1763 = vmatpush1.msra.mxu0 %v154
  %1764 = vmatprep.subr.mxu0 %v157
  %1765 = vmatpush1.msra.mxu0 %v156
  %1766 = vmatprep.subr.mxu0 %v159
  %1767 = vmatpush1.msra.mxu0 %v158
  %1768 = vmatprep.subr.mxu0 %v161
  %1769 = vmatpush1.msra.mxu0 %v160
  %1770 = vmatprep.subr.mxu0 %v163
  %1771 = vmatpush1.msra.mxu0 %v162
  %1772 = vmatprep.subr.mxu0 %v165
  %1773 = vmatpush1.msra.mxu0 %v164
  %1774 = vmatprep.subr.mxu0 %v167
  %1775 = vmatpush1.msra.mxu0 %v166
  %1776 = vmatprep.subr.mxu0 %v169
  %1777 = vmatpush1.msra.mxu0 %v168
  %1778 = vmatprep.subr.mxu0 %v171
  %1779 = vmatpush1.msra.mxu0 %v170
  %1780 = vmatprep.subr.mxu0 %v173
  %1781 = vmatpush1.msra.mxu0 %v172
  %1782 = vmatprep.subr.mxu0 %v175
  %1783 = vmatpush1.msra.mxu0 %v174
  %1784 = vmatprep.mubr.f32.mxu0 %v1624
  %1785 = vmatmul.mubr.f32.gmra.mrb[0].mxu0 %v1622
  %v1786 = vpop.f32.mrb[0].mxu0
  %v1787 = vadd.f32 %v1716, %v1786
  %v1788 = vpop.f32.mrb[0].mxu0
  %v1789 = vadd.f32 %v1718, %v1788
  %1790 = vdwg.mxu0
  %1791 = vmatprep.subr.mxu0 %v177
  %1792 = vmatpush1.msra.mxu0 %v176
  %1793 = vmatprep.subr.mxu0 %v179
  %1794 = vmatpush1.msra.mxu0 %v178
  %1795 = vmatprep.subr.mxu0 %v181
  %1796 = vmatpush1.msra.mxu0 %v180
  %1797 = vmatprep.subr.mxu0 %v183
  %1798 = vmatpush1.msra.mxu0 %v182
  %1799 = vmatprep.subr.mxu0 %v185
  %1800 = vmatpush1.msra.mxu0 %v184
  %1801 = vmatprep.subr.mxu0 %v187
  %1802 = vmatpush1.msra.mxu0 %v186
  %1803 = vmatprep.subr.mxu0 %v189
  %1804 = vmatpush1.msra.mxu0 %v188
  %1805 = vmatprep.subr.mxu0 %v191
  %1806 = vmatpush1.msra.mxu0 %v190
  %1807 = vmatprep.subr.mxu0 %v193
  %1808 = vmatpush1.msra.mxu0 %v192
  %1809 = vmatprep.subr.mxu0 %v195
  %1810 = vmatpush1.msra.mxu0 %v194
  %1811 = vmatprep.subr.mxu0 %v197
  %1812 = vmatpush1.msra.mxu0 %v196
  %1813 = vmatprep.subr.mxu0 %v199
  %1814 = vmatpush1.msra.mxu0 %v198
  %1815 = vmatprep.subr.mxu0 %v201
  %1816 = vmatpush1.msra.mxu0 %v200
  %1817 = vmatprep.subr.mxu0 %v203
  %1818 = vmatpush1.msra.mxu0 %v202
  %1819 = vmatprep.subr.mxu0 %v205
  %1820 = vmatpush1.msra.mxu0 %v204
  %1821 = vmatprep.subr.mxu0 %v207
  %1822 = vmatpush1.msra.mxu0 %v206
  %1823 = vmatprep.subr.mxu0 %v209
  %1824 = vmatpush1.msra.mxu0 %v208
  %1825 = vmatprep.subr.mxu0 %v211
  %1826 = vmatpush1.msra.mxu0 %v210
  %1827 = vmatprep.subr.mxu0 %v213
  %1828 = vmatpush1.msra.mxu0 %v212
  %1829 = vmatprep.subr.mxu0 %v215
  %1830 = vmatpush1.msra.mxu0 %v214
  %1831 = vmatprep.subr.mxu0 %v217
  %1832 = vmatpush1.msra.mxu0 %v216
  %1833 = vmatprep.subr.mxu0 %v219
  %1834 = vmatpush1.msra.mxu0 %v218
  %1835 = vmatprep.subr.mxu0 %v221
  %1836 = vmatpush1.msra.mxu0 %v220
  %1837 = vmatprep.subr.mxu0 %v223
  %1838 = vmatpush1.msra.mxu0 %v222
  %1839 = vmatprep.subr.mxu0 %v225
  %1840 = vmatpush1.msra.mxu0 %v224
  %1841 = vmatprep.subr.mxu0 %v227
  %1842 = vmatpush1.msra.mxu0 %v226
  %1843 = vmatprep.subr.mxu0 %v229
  %1844 = vmatpush1.msra.mxu0 %v228
  %1845 = vmatprep.subr.mxu0 %v231
  %1846 = vmatpush1.msra.mxu0 %v230
  %1847 = vmatprep.subr.mxu0 %v233
  %1848 = vmatpush1.msra.mxu0 %v232
  %1849 = vmatprep.subr.mxu0 %v235
  %1850 = vmatpush1.msra.mxu0 %v234
  %1851 = vmatprep.subr.mxu0 %v237
  %1852 = vmatpush1.msra.mxu0 %v236
  %1853 = vmatprep.subr.mxu0 %v239
  %1854 = vmatpush1.msra.mxu0 %v238
  %1855 = vmatprep.mubr.f32.mxu0 %v1640
  %1856 = vmatmul.mubr.f32.gmra.mrb[0].mxu0 %v1632
  %v1857 = vpop.f32.mrb[0].mxu0
  %v1858 = vadd.f32 %v1787, %v1857
  %v1859 = vpop.f32.mrb[0].mxu0
  %v1860 = vadd.f32 %v1789, %v1859
  %1861 = vdwg.mxu0
  %1862 = vmatprep.subr.mxu0 %v241
  %1863 = vmatpush1.msra.mxu0 %v240
  %1864 = vmatprep.subr.mxu0 %v243
  %1865 = vmatpush1.msra.mxu0 %v242
  %1866 = vmatprep.subr.mxu0 %v245
  %1867 = vmatpush1.msra.mxu0 %v244
  %1868 = vmatprep.subr.mxu0 %v247
  %1869 = vmatpush1.msra.mxu0 %v246
  %1870 = vmatprep.subr.mxu0 %v249
  %1871 = vmatpush1.msra.mxu0 %v248
  %1872 = vmatprep.subr.mxu0 %v251
  %1873 = vmatpush1.msra.mxu0 %v250
  %1874 = vmatprep.subr.mxu0 %v253
  %1875 = vmatpush1.msra.mxu0 %v252
  %1876 = vmatprep.subr.mxu0 %v255
  %1877 = vmatpush1.msra.mxu0 %v254
  %1878 = vmatprep.subr.mxu0 %v257
  %1879 = vmatpush1.msra.mxu0 %v256
  %1880 = vmatprep.subr.mxu0 %v259
  %1881 = vmatpush1.msra.mxu0 %v258
  %1882 = vmatprep.subr.mxu0 %v261
  %1883 = vmatpush1.msra.mxu0 %v260
  %1884 = vmatprep.subr.mxu0 %v263
  %1885 = vmatpush1.msra.mxu0 %v262
  %1886 = vmatprep.subr.mxu0 0.0
  %1887 = vmatpush1.msra.mxu0 0.0
  %1888 = vmatprep.subr.mxu0 0.0
  %1889 = vmatpush1.msra.mxu0 0.0
  %1890 = vmatprep.subr.mxu0 0.0
  %1891 = vmatpush1.msra.mxu0 0.0
  %1892 = vmatprep.subr.mxu0 0.0
  %1893 = vmatpush1.msra.mxu0 0.0
  %1894 = vmatprep.subr.mxu0 0.0
  %1895 = vmatpush1.msra.mxu0 0.0
  %1896 = vmatprep.subr.mxu0 0.0
  %1897 = vmatpush1.msra.mxu0 0.0
  %1898 = vmatprep.subr.mxu0 0.0
  %1899 = vmatpush1.msra.mxu0 0.0
  %1900 = vmatprep.subr.mxu0 0.0
  %1901 = vmatpush1.msra.mxu0 0.0
  %1902 = vmatprep.subr.mxu0 0.0
  %1903 = vmatpush1.msra.mxu0 0.0
  %1904 = vmatprep.subr.mxu0 0.0
  %1905 = vmatpush1.msra.mxu0 0.0
  %1906 = vmatprep.subr.mxu0 0.0
  %1907 = vmatpush1.msra.mxu0 0.0
  %1908 = vmatprep.subr.mxu0 0.0
  %1909 = vmatpush1.msra.mxu0 0.0
  %1910 = vmatprep.subr.mxu0 0.0
  %1911 = vmatpush1.msra.mxu0 0.0
  %1912 = vmatprep.subr.mxu0 0.0
  %1913 = vmatpush1.msra.mxu0 0.0
  %1914 = vmatprep.subr.mxu0 0.0
  %1915 = vmatpush1.msra.mxu0 0.0
  %1916 = vmatprep.subr.mxu0 0.0
  %1917 = vmatpush1.msra.mxu0 0.0
  %1918 = vmatprep.subr.mxu0 0.0
  %1919 = vmatpush1.msra.mxu0 0.0
  %1920 = vmatprep.subr.mxu0 0.0
  %1921 = vmatpush1.msra.mxu0 0.0
  %1922 = vmatprep.subr.mxu0 0.0
  %1923 = vmatpush1.msra.mxu0 0.0
  %1924 = vmatprep.subr.mxu0 0.0
  %1925 = vmatpush1.msra.mxu0 0.0
  %1926 = vmatprep.mubr.f32.mxu0 0.0
  %1927 = vmatmul.mubr.f32.gmra.mrb[0].mxu0 %v1647
  %v1928 = vpop.f32.mrb[0].mxu0
  %v1929 = vadd.f32 %v1858, %v1928
  %v1930 = vpop.f32.mrb[0].mxu0
  %v1931 = vadd.f32 %v1860, %v1930
  %1932 = vdwg.mxu0
  %s1933 = scalar_lea.vmem %s1, 14
  %v1934 = vld [vmem:[%s1933] sm:$0xff]
  %v1935 = vld [vmem:[%s1933 + $0x8] sm:$0x3f]
  %v1938 = vcombine.high %v1934, %v1934
  %v1940 = vunpack.c.l.s4 1983009808
  %v1941 = vunpack.c.0.s8 %v1940
  %v1942 = vlaneseq
  %v1943 = vshrl.u32 %v1942, 7
  %v1944 = vsub.s32 %v1941, %v1943
  %v1945 = vrot.slane %v1934, %v1944
  %v1947 = vunpack.c.l.s4 1983009808
  %v1948 = vunpack.c.0.s8 %v1947
  %v1949 = vlaneseq
  %v1950 = vshrl.u32 %v1949, 7
  %v1951 = vsub.s32 %v1948, %v1950
  %v1952 = vrot.slane %v1938, %v1951
  %v1953 = vcombine.high %v1945, %v1945
  %v1954 = vcombine.high %v1952, %v1952
  %v1955 = vcombine.high %v1935, %v1935
  %v1957 = vunpack.c.l.s4 1983009808
  %v1958 = vunpack.c.0.s8 %v1957
  %v1959 = vlaneseq
  %v1960 = vshrl.u32 %v1959, 7
  %v1961 = vsub.s32 %v1958, %v1960
  %v1962 = vrot.slane %v1935, %v1961
  %v1964 = vunpack.c.l.s4 1983009808
  %v1965 = vunpack.c.0.s8 %v1964
  %v1966 = vlaneseq
  %v1967 = vshrl.u32 %v1966, 7
  %v1968 = vsub.s32 %v1965, %v1967
  %v1969 = vrot.slane %v1955, %v1968
  %v1970 = vcombine.high %v1962, %v1962
  %v1977 = vsel %vm305, %v1969, 0
  %1979 = vmatprep.subr.mxu0 %v49
  %1980 = vmatpush1.msra.mxu0 %v48
  %1981 = vmatprep.subr.mxu0 %v51
  %1982 = vmatpush1.msra.mxu0 %v50
  %1983 = vmatprep.subr.mxu0 %v53
  %1984 = vmatpush1.msra.mxu0 %v52
  %1985 = vmatprep.subr.mxu0 %v55
  %1986 = vmatpush1.msra.mxu0 %v54
  %1987 = vmatprep.subr.mxu0 %v57
  %1988 = vmatpush1.msra.mxu0 %v56
  %1989 = vmatprep.subr.mxu0 %v59
  %1990 = vmatpush1.msra.mxu0 %v58
  %1991 = vmatprep.subr.mxu0 %v61
  %1992 = vmatpush1.msra.mxu0 %v60
  %1993 = vmatprep.subr.mxu0 %v63
  %1994 = vmatpush1.msra.mxu0 %v62
  %1995 = vmatprep.subr.mxu0 %v65
  %1996 = vmatpush1.msra.mxu0 %v64
  %1997 = vmatprep.subr.mxu0 %v67
  %1998 = vmatpush1.msra.mxu0 %v66
  %1999 = vmatprep.subr.mxu0 %v69
  %2000 = vmatpush1.msra.mxu0 %v68
  %2001 = vmatprep.subr.mxu0 %v71
  %2002 = vmatpush1.msra.mxu0 %v70
  %2003 = vmatprep.subr.mxu0 %v73
  %2004 = vmatpush1.msra.mxu0 %v72
  %2005 = vmatprep.subr.mxu0 %v75
  %2006 = vmatpush1.msra.mxu0 %v74
  %2007 = vmatprep.subr.mxu0 %v77
  %2008 = vmatpush1.msra.mxu0 %v76
  %2009 = vmatprep.subr.mxu0 %v79
  %2010 = vmatpush1.msra.mxu0 %v78
  %2011 = vmatprep.subr.mxu0 %v81
  %2012 = vmatpush1.msra.mxu0 %v80
  %2013 = vmatprep.subr.mxu0 %v83
  %2014 = vmatpush1.msra.mxu0 %v82
  %2015 = vmatprep.subr.mxu0 %v85
  %2016 = vmatpush1.msra.mxu0 %v84
  %2017 = vmatprep.subr.mxu0 %v87
  %2018 = vmatpush1.msra.mxu0 %v86
  %2019 = vmatprep.subr.mxu0 %v89
  %2020 = vmatpush1.msra.mxu0 %v88
  %2021 = vmatprep.subr.mxu0 %v91
  %2022 = vmatpush1.msra.mxu0 %v90
  %2023 = vmatprep.subr.mxu0 %v93
  %2024 = vmatpush1.msra.mxu0 %v92
  %2025 = vmatprep.subr.mxu0 %v95
  %2026 = vmatpush1.msra.mxu0 %v94
  %2027 = vmatprep.subr.mxu0 %v97
  %2028 = vmatpush1.msra.mxu0 %v96
  %2029 = vmatprep.subr.mxu0 %v99
  %2030 = vmatpush1.msra.mxu0 %v98
  %2031 = vmatprep.subr.mxu0 %v101
  %2032 = vmatpush1.msra.mxu0 %v100
  %2033 = vmatprep.subr.mxu0 %v103
  %2034 = vmatpush1.msra.mxu0 %v102
  %2035 = vmatprep.subr.mxu0 %v105
  %2036 = vmatpush1.msra.mxu0 %v104
  %2037 = vmatprep.subr.mxu0 %v107
  %2038 = vmatpush1.msra.mxu0 %v106
  %2039 = vmatprep.subr.mxu0 %v109
  %2040 = vmatpush1.msra.mxu0 %v108
  %2041 = vmatprep.subr.mxu0 %v111
  %2042 = vmatpush1.msra.mxu0 %v110
  %2043 = vmatprep.mubr.f32.mxu0 %v1953
  %2044 = vmatmul.mubr.f32.gmra.mrb[0].mxu0 %v1945
  %v2045 = vpop.f32.mrb[0].mxu0
  %v2046 = vadd.f32 0.0, %v2045
  %v2047 = vpop.f32.mrb[0].mxu0
  %v2048 = vadd.f32 0.0, %v2047
  %2049 = vdwg.mxu0
  %2050 = vmatprep.subr.mxu0 %v113
  %2051 = vmatpush1.msra.mxu0 %v112
  %2052 = vmatprep.subr.mxu0 %v115
  %2053 = vmatpush1.msra.mxu0 %v114
  %2054 = vmatprep.subr.mxu0 %v117
  %2055 = vmatpush1.msra.mxu0 %v116
  %2056 = vmatprep.subr.mxu0 %v119
  %2057 = vmatpush1.msra.mxu0 %v118
  %2058 = vmatprep.subr.mxu0 %v121
  %2059 = vmatpush1.msra.mxu0 %v120
  %2060 = vmatprep.subr.mxu0 %v123
  %2061 = vmatpush1.msra.mxu0 %v122
  %2062 = vmatprep.subr.mxu0 %v125
  %2063 = vmatpush1.msra.mxu0 %v124
  %2064 = vmatprep.subr.mxu0 %v127
  %2065 = vmatpush1.msra.mxu0 %v126
  %2066 = vmatprep.subr.mxu0 %v129
  %2067 = vmatpush1.msra.mxu0 %v128
  %2068 = vmatprep.subr.mxu0 %v131
  %2069 = vmatpush1.msra.mxu0 %v130
  %2070 = vmatprep.subr.mxu0 %v133
  %2071 = vmatpush1.msra.mxu0 %v132
  %2072 = vmatprep.subr.mxu0 %v135
  %2073 = vmatpush1.msra.mxu0 %v134
  %2074 = vmatprep.subr.mxu0 %v137
  %2075 = vmatpush1.msra.mxu0 %v136
  %2076 = vmatprep.subr.mxu0 %v139
  %2077 = vmatpush1.msra.mxu0 %v138
  %2078 = vmatprep.subr.mxu0 %v141
  %2079 = vmatpush1.msra.mxu0 %v140
  %2080 = vmatprep.subr.mxu0 %v143
  %2081 = vmatpush1.msra.mxu0 %v142
  %2082 = vmatprep.subr.mxu0 %v145
  %2083 = vmatpush1.msra.mxu0 %v144
  %2084 = vmatprep.subr.mxu0 %v147
  %2085 = vmatpush1.msra.mxu0 %v146
  %2086 = vmatprep.subr.mxu0 %v149
  %2087 = vmatpush1.msra.mxu0 %v148
  %2088 = vmatprep.subr.mxu0 %v151
  %2089 = vmatpush1.msra.mxu0 %v150
  %2090 = vmatprep.subr.mxu0 %v153
  %2091 = vmatpush1.msra.mxu0 %v152
  %2092 = vmatprep.subr.mxu0 %v155
  %2093 = vmatpush1.msra.mxu0 %v154
  %2094 = vmatprep.subr.mxu0 %v157
  %2095 = vmatpush1.msra.mxu0 %v156
  %2096 = vmatprep.subr.mxu0 %v159
  %2097 = vmatpush1.msra.mxu0 %v158
  %2098 = vmatprep.subr.mxu0 %v161
  %2099 = vmatpush1.msra.mxu0 %v160
  %2100 = vmatprep.subr.mxu0 %v163
  %2101 = vmatpush1.msra.mxu0 %v162
  %2102 = vmatprep.subr.mxu0 %v165
  %2103 = vmatpush1.msra.mxu0 %v164
  %2104 = vmatprep.subr.mxu0 %v167
  %2105 = vmatpush1.msra.mxu0 %v166
  %2106 = vmatprep.subr.mxu0 %v169
  %2107 = vmatpush1.msra.mxu0 %v168
  %2108 = vmatprep.subr.mxu0 %v171
  %2109 = vmatpush1.msra.mxu0 %v170
  %2110 = vmatprep.subr.mxu0 %v173
  %2111 = vmatpush1.msra.mxu0 %v172
  %2112 = vmatprep.subr.mxu0 %v175
  %2113 = vmatpush1.msra.mxu0 %v174
  %2114 = vmatprep.mubr.f32.mxu0 %v1954
  %2115 = vmatmul.mubr.f32.gmra.mrb[0].mxu0 %v1952
  %v2116 = vpop.f32.mrb[0].mxu0
  %v2117 = vadd.f32 %v2046, %v2116
  %v2118 = vpop.f32.mrb[0].mxu0
  %v2119 = vadd.f32 %v2048, %v2118
  %2120 = vdwg.mxu0
  %2121 = vmatprep.subr.mxu0 %v177
  %2122 = vmatpush1.msra.mxu0 %v176
  %2123 = vmatprep.subr.mxu0 %v179
  %2124 = vmatpush1.msra.mxu0 %v178
  %2125 = vmatprep.subr.mxu0 %v181
  %2126 = vmatpush1.msra.mxu0 %v180
  %2127 = vmatprep.subr.mxu0 %v183
  %2128 = vmatpush1.msra.mxu0 %v182
  %2129 = vmatprep.subr.mxu0 %v185
  %2130 = vmatpush1.msra.mxu0 %v184
  %2131 = vmatprep.subr.mxu0 %v187
  %2132 = vmatpush1.msra.mxu0 %v186
  %2133 = vmatprep.subr.mxu0 %v189
  %2134 = vmatpush1.msra.mxu0 %v188
  %2135 = vmatprep.subr.mxu0 %v191
  %2136 = vmatpush1.msra.mxu0 %v190
  %2137 = vmatprep.subr.mxu0 %v193
  %2138 = vmatpush1.msra.mxu0 %v192
  %2139 = vmatprep.subr.mxu0 %v195
  %2140 = vmatpush1.msra.mxu0 %v194
  %2141 = vmatprep.subr.mxu0 %v197
  %2142 = vmatpush1.msra.mxu0 %v196
  %2143 = vmatprep.subr.mxu0 %v199
  %2144 = vmatpush1.msra.mxu0 %v198
  %2145 = vmatprep.subr.mxu0 %v201
  %2146 = vmatpush1.msra.mxu0 %v200
  %2147 = vmatprep.subr.mxu0 %v203
  %2148 = vmatpush1.msra.mxu0 %v202
  %2149 = vmatprep.subr.mxu0 %v205
  %2150 = vmatpush1.msra.mxu0 %v204
  %2151 = vmatprep.subr.mxu0 %v207
  %2152 = vmatpush1.msra.mxu0 %v206
  %2153 = vmatprep.subr.mxu0 %v209
  %2154 = vmatpush1.msra.mxu0 %v208
  %2155 = vmatprep.subr.mxu0 %v211
  %2156 = vmatpush1.msra.mxu0 %v210
  %2157 = vmatprep.subr.mxu0 %v213
  %2158 = vmatpush1.msra.mxu0 %v212
  %2159 = vmatprep.subr.mxu0 %v215
  %2160 = vmatpush1.msra.mxu0 %v214
  %2161 = vmatprep.subr.mxu0 %v217
  %2162 = vmatpush1.msra.mxu0 %v216
  %2163 = vmatprep.subr.mxu0 %v219
  %2164 = vmatpush1.msra.mxu0 %v218
  %2165 = vmatprep.subr.mxu0 %v221
  %2166 = vmatpush1.msra.mxu0 %v220
  %2167 = vmatprep.subr.mxu0 %v223
  %2168 = vmatpush1.msra.mxu0 %v222
  %2169 = vmatprep.subr.mxu0 %v225
  %2170 = vmatpush1.msra.mxu0 %v224
  %2171 = vmatprep.subr.mxu0 %v227
  %2172 = vmatpush1.msra.mxu0 %v226
  %2173 = vmatprep.subr.mxu0 %v229
  %2174 = vmatpush1.msra.mxu0 %v228
  %2175 = vmatprep.subr.mxu0 %v231
  %2176 = vmatpush1.msra.mxu0 %v230
  %2177 = vmatprep.subr.mxu0 %v233
  %2178 = vmatpush1.msra.mxu0 %v232
  %2179 = vmatprep.subr.mxu0 %v235
  %2180 = vmatpush1.msra.mxu0 %v234
  %2181 = vmatprep.subr.mxu0 %v237
  %2182 = vmatpush1.msra.mxu0 %v236
  %2183 = vmatprep.subr.mxu0 %v239
  %2184 = vmatpush1.msra.mxu0 %v238
  %2185 = vmatprep.mubr.f32.mxu0 %v1970
  %2186 = vmatmul.mubr.f32.gmra.mrb[0].mxu0 %v1962
  %v2187 = vpop.f32.mrb[0].mxu0
  %v2188 = vadd.f32 %v2117, %v2187
  %v2189 = vpop.f32.mrb[0].mxu0
  %v2190 = vadd.f32 %v2119, %v2189
  %2191 = vdwg.mxu0
  %2192 = vmatprep.subr.mxu0 %v241
  %2193 = vmatpush1.msra.mxu0 %v240
  %2194 = vmatprep.subr.mxu0 %v243
  %2195 = vmatpush1.msra.mxu0 %v242
  %2196 = vmatprep.subr.mxu0 %v245
  %2197 = vmatpush1.msra.mxu0 %v244
  %2198 = vmatprep.subr.mxu0 %v247
  %2199 = vmatpush1.msra.mxu0 %v246
  %2200 = vmatprep.subr.mxu0 %v249
  %2201 = vmatpush1.msra.mxu0 %v248
  %2202 = vmatprep.subr.mxu0 %v251
  %2203 = vmatpush1.msra.mxu0 %v250
  %2204 = vmatprep.subr.mxu0 %v253
  %2205 = vmatpush1.msra.mxu0 %v252
  %2206 = vmatprep.subr.mxu0 %v255
  %2207 = vmatpush1.msra.mxu0 %v254
  %2208 = vmatprep.subr.mxu0 %v257
  %2209 = vmatpush1.msra.mxu0 %v256
  %2210 = vmatprep.subr.mxu0 %v259
  %2211 = vmatpush1.msra.mxu0 %v258
  %2212 = vmatprep.subr.mxu0 %v261
  %2213 = vmatpush1.msra.mxu0 %v260
  %2214 = vmatprep.subr.mxu0 %v263
  %2215 = vmatpush1.msra.mxu0 %v262
  %2216 = vmatprep.subr.mxu0 0.0
  %2217 = vmatpush1.msra.mxu0 0.0
  %2218 = vmatprep.subr.mxu0 0.0
  %2219 = vmatpush1.msra.mxu0 0.0
  %2220 = vmatprep.subr.mxu0 0.0
  %2221 = vmatpush1.msra.mxu0 0.0
  %2222 = vmatprep.subr.mxu0 0.0
  %2223 = vmatpush1.msra.mxu0 0.0
  %2224 = vmatprep.subr.mxu0 0.0
  %2225 = vmatpush1.msra.mxu0 0.0
  %2226 = vmatprep.subr.mxu0 0.0
  %2227 = vmatpush1.msra.mxu0 0.0
  %2228 = vmatprep.subr.mxu0 0.0
  %2229 = vmatpush1.msra.mxu0 0.0
  %2230 = vmatprep.subr.mxu0 0.0
  %2231 = vmatpush1.msra.mxu0 0.0
  %2232 = vmatprep.subr.mxu0 0.0
  %2233 = vmatpush1.msra.mxu0 0.0
  %2234 = vmatprep.subr.mxu0 0.0
  %2235 = vmatpush1.msra.mxu0 0.0
  %2236 = vmatprep.subr.mxu0 0.0
  %2237 = vmatpush1.msra.mxu0 0.0
  %2238 = vmatprep.subr.mxu0 0.0
  %2239 = vmatpush1.msra.mxu0 0.0
  %2240 = vmatprep.subr.mxu0 0.0
  %2241 = vmatpush1.msra.mxu0 0.0
  %2242 = vmatprep.subr.mxu0 0.0
  %2243 = vmatpush1.msra.mxu0 0.0
  %2244 = vmatprep.subr.mxu0 0.0
  %2245 = vmatpush1.msra.mxu0 0.0
  %2246 = vmatprep.subr.mxu0 0.0
  %2247 = vmatpush1.msra.mxu0 0.0
  %2248 = vmatprep.subr.mxu0 0.0
  %2249 = vmatpush1.msra.mxu0 0.0
  %2250 = vmatprep.subr.mxu0 0.0
  %2251 = vmatpush1.msra.mxu0 0.0
  %2252 = vmatprep.subr.mxu0 0.0
  %2253 = vmatpush1.msra.mxu0 0.0
  %2254 = vmatprep.subr.mxu0 0.0
  %2255 = vmatpush1.msra.mxu0 0.0
  %2256 = vmatprep.mubr.f32.mxu0 0.0
  %2257 = vmatmul.mubr.f32.gmra.mrb[0].mxu0 %v1977
  %v2258 = vpop.f32.mrb[0].mxu0
  %v2259 = vadd.f32 %v2188, %v2258
  %v2260 = vpop.f32.mrb[0].mxu0
  %v2261 = vadd.f32 %v2190, %v2260
  %2262 = vdwg.mxu0
  %v2263 = vmax.f32 %v1929, %v2259
  %v2264 = vmax.f32 %v1931, %v2261
  %s2265 = scalar_lea.vmem %s1, 28
  %v2266 = vld [vmem:[%s2265] sm:$0xff]
  %v2267 = vld [vmem:[%s2265 + $0x8] sm:$0x3f]
  %v2270 = vcombine.high %v2266, %v2266
  %v2272 = vunpack.c.l.s4 1983009808
  %v2273 = vunpack.c.0.s8 %v2272
  %v2274 = vlaneseq
  %v2275 = vshrl.u32 %v2274, 7
  %v2276 = vsub.s32 %v2273, %v2275
  %v2277 = vrot.slane %v2266, %v2276
  %v2279 = vunpack.c.l.s4 1983009808
  %v2280 = vunpack.c.0.s8 %v2279
  %v2281 = vlaneseq
  %v2282 = vshrl.u32 %v2281, 7
  %v2283 = vsub.s32 %v2280, %v2282
  %v2284 = vrot.slane %v2270, %v2283
  %v2285 = vcombine.high %v2277, %v2277
  %v2286 = vcombine.high %v2284, %v2284
  %v2287 = vcombine.high %v2267, %v2267
  %v2289 = vunpack.c.l.s4 1983009808
  %v2290 = vunpack.c.0.s8 %v2289
  %v2291 = vlaneseq
  %v2292 = vshrl.u32 %v2291, 7
  %v2293 = vsub.s32 %v2290, %v2292
  %v2294 = vrot.slane %v2267, %v2293
  %v2296 = vunpack.c.l.s4 1983009808
  %v2297 = vunpack.c.0.s8 %v2296
  %v2298 = vlaneseq
  %v2299 = vshrl.u32 %v2298, 7
  %v2300 = vsub.s32 %v2297, %v2299
  %v2301 = vrot.slane %v2287, %v2300
  %v2302 = vcombine.high %v2294, %v2294
  %v2309 = vsel %vm305, %v2301, 0
  %2311 = vmatprep.subr.mxu0 %v49
  %2312 = vmatpush1.msra.mxu0 %v48
  %2313 = vmatprep.subr.mxu0 %v51
  %2314 = vmatpush1.msra.mxu0 %v50
  %2315 = vmatprep.subr.mxu0 %v53
  %2316 = vmatpush1.msra.mxu0 %v52
  %2317 = vmatprep.subr.mxu0 %v55
  %2318 = vmatpush1.msra.mxu0 %v54
  %2319 = vmatprep.subr.mxu0 %v57
  %2320 = vmatpush1.msra.mxu0 %v56
  %2321 = vmatprep.subr.mxu0 %v59
  %2322 = vmatpush1.msra.mxu0 %v58
  %2323 = vmatprep.subr.mxu0 %v61
  %2324 = vmatpush1.msra.mxu0 %v60
  %2325 = vmatprep.subr.mxu0 %v63
  %2326 = vmatpush1.msra.mxu0 %v62
  %2327 = vmatprep.subr.mxu0 %v65
  %2328 = vmatpush1.msra.mxu0 %v64
  %2329 = vmatprep.subr.mxu0 %v67
  %2330 = vmatpush1.msra.mxu0 %v66
  %2331 = vmatprep.subr.mxu0 %v69
  %2332 = vmatpush1.msra.mxu0 %v68
  %2333 = vmatprep.subr.mxu0 %v71
  %2334 = vmatpush1.msra.mxu0 %v70
  %2335 = vmatprep.subr.mxu0 %v73
  %2336 = vmatpush1.msra.mxu0 %v72
  %2337 = vmatprep.subr.mxu0 %v75
  %2338 = vmatpush1.msra.mxu0 %v74
  %2339 = vmatprep.subr.mxu0 %v77
  %2340 = vmatpush1.msra.mxu0 %v76
  %2341 = vmatprep.subr.mxu0 %v79
  %2342 = vmatpush1.msra.mxu0 %v78
  %2343 = vmatprep.subr.mxu0 %v81
  %2344 = vmatpush1.msra.mxu0 %v80
  %2345 = vmatprep.subr.mxu0 %v83
  %2346 = vmatpush1.msra.mxu0 %v82
  %2347 = vmatprep.subr.mxu0 %v85
  %2348 = vmatpush1.msra.mxu0 %v84
  %2349 = vmatprep.subr.mxu0 %v87
  %2350 = vmatpush1.msra.mxu0 %v86
  %2351 = vmatprep.subr.mxu0 %v89
  %2352 = vmatpush1.msra.mxu0 %v88
  %2353 = vmatprep.subr.mxu0 %v91
  %2354 = vmatpush1.msra.mxu0 %v90
  %2355 = vmatprep.subr.mxu0 %v93
  %2356 = vmatpush1.msra.mxu0 %v92
  %2357 = vmatprep.subr.mxu0 %v95
  %2358 = vmatpush1.msra.mxu0 %v94
  %2359 = vmatprep.subr.mxu0 %v97
  %2360 = vmatpush1.msra.mxu0 %v96
  %2361 = vmatprep.subr.mxu0 %v99
  %2362 = vmatpush1.msra.mxu0 %v98
  %2363 = vmatprep.subr.mxu0 %v101
  %2364 = vmatpush1.msra.mxu0 %v100
  %2365 = vmatprep.subr.mxu0 %v103
  %2366 = vmatpush1.msra.mxu0 %v102
  %2367 = vmatprep.subr.mxu0 %v105
  %2368 = vmatpush1.msra.mxu0 %v104
  %2369 = vmatprep.subr.mxu0 %v107
  %2370 = vmatpush1.msra.mxu0 %v106
  %2371 = vmatprep.subr.mxu0 %v109
  %2372 = vmatpush1.msra.mxu0 %v108
  %2373 = vmatprep.subr.mxu0 %v111
  %2374 = vmatpush1.msra.mxu0 %v110
  %2375 = vmatprep.mubr.f32.mxu0 %v2285
  %2376 = vmatmul.mubr.f32.gmra.mrb[0].mxu0 %v2277
  %v2377 = vpop.f32.mrb[0].mxu0
  %v2378 = vadd.f32 0.0, %v2377
  %v2379 = vpop.f32.mrb[0].mxu0
  %v2380 = vadd.f32 0.0, %v2379
  %2381 = vdwg.mxu0
  %2382 = vmatprep.subr.mxu0 %v113
  %2383 = vmatpush1.msra.mxu0 %v112
  %2384 = vmatprep.subr.mxu0 %v115
  %2385 = vmatpush1.msra.mxu0 %v114
  %2386 = vmatprep.subr.mxu0 %v117
  %2387 = vmatpush1.msra.mxu0 %v116
  %2388 = vmatprep.subr.mxu0 %v119
  %2389 = vmatpush1.msra.mxu0 %v118
  %2390 = vmatprep.subr.mxu0 %v121
  %2391 = vmatpush1.msra.mxu0 %v120
  %2392 = vmatprep.subr.mxu0 %v123
  %2393 = vmatpush1.msra.mxu0 %v122
  %2394 = vmatprep.subr.mxu0 %v125
  %2395 = vmatpush1.msra.mxu0 %v124
  %2396 = vmatprep.subr.mxu0 %v127
  %2397 = vmatpush1.msra.mxu0 %v126
  %2398 = vmatprep.subr.mxu0 %v129
  %2399 = vmatpush1.msra.mxu0 %v128
  %2400 = vmatprep.subr.mxu0 %v131
  %2401 = vmatpush1.msra.mxu0 %v130
  %2402 = vmatprep.subr.mxu0 %v133
  %2403 = vmatpush1.msra.mxu0 %v132
  %2404 = vmatprep.subr.mxu0 %v135
  %2405 = vmatpush1.msra.mxu0 %v134
  %2406 = vmatprep.subr.mxu0 %v137
  %2407 = vmatpush1.msra.mxu0 %v136
  %2408 = vmatprep.subr.mxu0 %v139
  %2409 = vmatpush1.msra.mxu0 %v138
  %2410 = vmatprep.subr.mxu0 %v141
  %2411 = vmatpush1.msra.mxu0 %v140
  %2412 = vmatprep.subr.mxu0 %v143
  %2413 = vmatpush1.msra.mxu0 %v142
  %2414 = vmatprep.subr.mxu0 %v145
  %2415 = vmatpush1.msra.mxu0 %v144
  %2416 = vmatprep.subr.mxu0 %v147
  %2417 = vmatpush1.msra.mxu0 %v146
  %2418 = vmatprep.subr.mxu0 %v149
  %2419 = vmatpush1.msra.mxu0 %v148
  %2420 = vmatprep.subr.mxu0 %v151
  %2421 = vmatpush1.msra.mxu0 %v150
  %2422 = vmatprep.subr.mxu0 %v153
  %2423 = vmatpush1.msra.mxu0 %v152
  %2424 = vmatprep.subr.mxu0 %v155
  %2425 = vmatpush1.msra.mxu0 %v154
  %2426 = vmatprep.subr.mxu0 %v157
  %2427 = vmatpush1.msra.mxu0 %v156
  %2428 = vmatprep.subr.mxu0 %v159
  %2429 = vmatpush1.msra.mxu0 %v158
  %2430 = vmatprep.subr.mxu0 %v161
  %2431 = vmatpush1.msra.mxu0 %v160
  %2432 = vmatprep.subr.mxu0 %v163
  %2433 = vmatpush1.msra.mxu0 %v162
  %2434 = vmatprep.subr.mxu0 %v165
  %2435 = vmatpush1.msra.mxu0 %v164
  %2436 = vmatprep.subr.mxu0 %v167
  %2437 = vmatpush1.msra.mxu0 %v166
  %2438 = vmatprep.subr.mxu0 %v169
  %2439 = vmatpush1.msra.mxu0 %v168
  %2440 = vmatprep.subr.mxu0 %v171
  %2441 = vmatpush1.msra.mxu0 %v170
  %2442 = vmatprep.subr.mxu0 %v173
  %2443 = vmatpush1.msra.mxu0 %v172
  %2444 = vmatprep.subr.mxu0 %v175
  %2445 = vmatpush1.msra.mxu0 %v174
  %2446 = vmatprep.mubr.f32.mxu0 %v2286
  %2447 = vmatmul.mubr.f32.gmra.mrb[0].mxu0 %v2284
  %v2448 = vpop.f32.mrb[0].mxu0
  %v2449 = vadd.f32 %v2378, %v2448
  %v2450 = vpop.f32.mrb[0].mxu0
  %v2451 = vadd.f32 %v2380, %v2450
  %2452 = vdwg.mxu0
  %2453 = vmatprep.subr.mxu0 %v177
  %2454 = vmatpush1.msra.mxu0 %v176
  %2455 = vmatprep.subr.mxu0 %v179
  %2456 = vmatpush1.msra.mxu0 %v178
  %2457 = vmatprep.subr.mxu0 %v181
  %2458 = vmatpush1.msra.mxu0 %v180
  %2459 = vmatprep.subr.mxu0 %v183
  %2460 = vmatpush1.msra.mxu0 %v182
  %2461 = vmatprep.subr.mxu0 %v185
  %2462 = vmatpush1.msra.mxu0 %v184
  %2463 = vmatprep.subr.mxu0 %v187
  %2464 = vmatpush1.msra.mxu0 %v186
  %2465 = vmatprep.subr.mxu0 %v189
  %2466 = vmatpush1.msra.mxu0 %v188
  %2467 = vmatprep.subr.mxu0 %v191
  %2468 = vmatpush1.msra.mxu0 %v190
  %2469 = vmatprep.subr.mxu0 %v193
  %2470 = vmatpush1.msra.mxu0 %v192
  %2471 = vmatprep.subr.mxu0 %v195
  %2472 = vmatpush1.msra.mxu0 %v194
  %2473 = vmatprep.subr.mxu0 %v197
  %2474 = vmatpush1.msra.mxu0 %v196
  %2475 = vmatprep.subr.mxu0 %v199
  %2476 = vmatpush1.msra.mxu0 %v198
  %2477 = vmatprep.subr.mxu0 %v201
  %2478 = vmatpush1.msra.mxu0 %v200
  %2479 = vmatprep.subr.mxu0 %v203
  %2480 = vmatpush1.msra.mxu0 %v202
  %2481 = vmatprep.subr.mxu0 %v205
  %2482 = vmatpush1.msra.mxu0 %v204
  %2483 = vmatprep.subr.mxu0 %v207
  %2484 = vmatpush1.msra.mxu0 %v206
  %2485 = vmatprep.subr.mxu0 %v209
  %2486 = vmatpush1.msra.mxu0 %v208
  %2487 = vmatprep.subr.mxu0 %v211
  %2488 = vmatpush1.msra.mxu0 %v210
  %2489 = vmatprep.subr.mxu0 %v213
  %2490 = vmatpush1.msra.mxu0 %v212
  %2491 = vmatprep.subr.mxu0 %v215
  %2492 = vmatpush1.msra.mxu0 %v214
  %2493 = vmatprep.subr.mxu0 %v217
  %2494 = vmatpush1.msra.mxu0 %v216
  %2495 = vmatprep.subr.mxu0 %v219
  %2496 = vmatpush1.msra.mxu0 %v218
  %2497 = vmatprep.subr.mxu0 %v221
  %2498 = vmatpush1.msra.mxu0 %v220
  %2499 = vmatprep.subr.mxu0 %v223
  %2500 = vmatpush1.msra.mxu0 %v222
  %2501 = vmatprep.subr.mxu0 %v225
  %2502 = vmatpush1.msra.mxu0 %v224
  %2503 = vmatprep.subr.mxu0 %v227
  %2504 = vmatpush1.msra.mxu0 %v226
  %2505 = vmatprep.subr.mxu0 %v229
  %2506 = vmatpush1.msra.mxu0 %v228
  %2507 = vmatprep.subr.mxu0 %v231
  %2508 = vmatpush1.msra.mxu0 %v230
  %2509 = vmatprep.subr.mxu0 %v233
  %2510 = vmatpush1.msra.mxu0 %v232
  %2511 = vmatprep.subr.mxu0 %v235
  %2512 = vmatpush1.msra.mxu0 %v234
  %2513 = vmatprep.subr.mxu0 %v237
  %2514 = vmatpush1.msra.mxu0 %v236
  %2515 = vmatprep.subr.mxu0 %v239
  %2516 = vmatpush1.msra.mxu0 %v238
  %2517 = vmatprep.mubr.f32.mxu0 %v2302
  %2518 = vmatmul.mubr.f32.gmra.mrb[0].mxu0 %v2294
  %v2519 = vpop.f32.mrb[0].mxu0
  %v2520 = vadd.f32 %v2449, %v2519
  %v2521 = vpop.f32.mrb[0].mxu0
  %v2522 = vadd.f32 %v2451, %v2521
  %2523 = vdwg.mxu0
  %2524 = vmatprep.subr.mxu0 %v241
  %2525 = vmatpush1.msra.mxu0 %v240
  %2526 = vmatprep.subr.mxu0 %v243
  %2527 = vmatpush1.msra.mxu0 %v242
  %2528 = vmatprep.subr.mxu0 %v245
  %2529 = vmatpush1.msra.mxu0 %v244
  %2530 = vmatprep.subr.mxu0 %v247
  %2531 = vmatpush1.msra.mxu0 %v246
  %2532 = vmatprep.subr.mxu0 %v249
  %2533 = vmatpush1.msra.mxu0 %v248
  %2534 = vmatprep.subr.mxu0 %v251
  %2535 = vmatpush1.msra.mxu0 %v250
  %2536 = vmatprep.subr.mxu0 %v253
  %2537 = vmatpush1.msra.mxu0 %v252
  %2538 = vmatprep.subr.mxu0 %v255
  %2539 = vmatpush1.msra.mxu0 %v254
  %2540 = vmatprep.subr.mxu0 %v257
  %2541 = vmatpush1.msra.mxu0 %v256
  %2542 = vmatprep.subr.mxu0 %v259
  %2543 = vmatpush1.msra.mxu0 %v258
  %2544 = vmatprep.subr.mxu0 %v261
  %2545 = vmatpush1.msra.mxu0 %v260
  %2546 = vmatprep.subr.mxu0 %v263
  %2547 = vmatpush1.msra.mxu0 %v262
  %2548 = vmatprep.subr.mxu0 0.0
  %2549 = vmatpush1.msra.mxu0 0.0
  %2550 = vmatprep.subr.mxu0 0.0
  %2551 = vmatpush1.msra.mxu0 0.0
  %2552 = vmatprep.subr.mxu0 0.0
  %2553 = vmatpush1.msra.mxu0 0.0
  %2554 = vmatprep.subr.mxu0 0.0
  %2555 = vmatpush1.msra.mxu0 0.0
  %2556 = vmatprep.subr.mxu0 0.0
  %2557 = vmatpush1.msra.mxu0 0.0
  %2558 = vmatprep.subr.mxu0 0.0
  %2559 = vmatpush1.msra.mxu0 0.0
  %2560 = vmatprep.subr.mxu0 0.0
  %2561 = vmatpush1.msra.mxu0 0.0
  %2562 = vmatprep.subr.mxu0 0.0
  %2563 = vmatpush1.msra.mxu0 0.0
  %2564 = vmatprep.subr.mxu0 0.0
  %2565 = vmatpush1.msra.mxu0 0.0
  %2566 = vmatprep.subr.mxu0 0.0
  %2567 = vmatpush1.msra.mxu0 0.0
  %2568 = vmatprep.subr.mxu0 0.0
  %2569 = vmatpush1.msra.mxu0 0.0
  %2570 = vmatprep.subr.mxu0 0.0
  %2571 = vmatpush1.msra.mxu0 0.0
  %2572 = vmatprep.subr.mxu0 0.0
  %2573 = vmatpush1.msra.mxu0 0.0
  %2574 = vmatprep.subr.mxu0 0.0
  %2575 = vmatpush1.msra.mxu0 0.0
  %2576 = vmatprep.subr.mxu0 0.0
  %2577 = vmatpush1.msra.mxu0 0.0
  %2578 = vmatprep.subr.mxu0 0.0
  %2579 = vmatpush1.msra.mxu0 0.0
  %2580 = vmatprep.subr.mxu0 0.0
  %2581 = vmatpush1.msra.mxu0 0.0
  %2582 = vmatprep.subr.mxu0 0.0
  %2583 = vmatpush1.msra.mxu0 0.0
  %2584 = vmatprep.subr.mxu0 0.0
  %2585 = vmatpush1.msra.mxu0 0.0
  %2586 = vmatprep.subr.mxu0 0.0
  %2587 = vmatpush1.msra.mxu0 0.0
  %2588 = vmatprep.mubr.f32.mxu0 0.0
  %2589 = vmatmul.mubr.f32.gmra.mrb[0].mxu0 %v2309
  %v2590 = vpop.f32.mrb[0].mxu0
  %v2591 = vadd.f32 %v2520, %v2590
  %v2592 = vpop.f32.mrb[0].mxu0
  %v2593 = vadd.f32 %v2522, %v2592
  %2594 = vdwg.mxu0
  %v2595 = vmax.f32 %v2263, %v2591
  %v2596 = vmax.f32 %v2264, %v2593
  %s2597 = scalar_lea.vmem %s1, 42
  %v2598 = vld [vmem:[%s2597] sm:$0xff]
  %v2599 = vld [vmem:[%s2597 + $0x8] sm:$0x3f]
  %v2602 = vcombine.high %v2598, %v2598
  %v2604 = vunpack.c.l.s4 1983009808
  %v2605 = vunpack.c.0.s8 %v2604
  %v2606 = vlaneseq
  %v2607 = vshrl.u32 %v2606, 7
  %v2608 = vsub.s32 %v2605, %v2607
  %v2609 = vrot.slane %v2598, %v2608
  %v2611 = vunpack.c.l.s4 1983009808
  %v2612 = vunpack.c.0.s8 %v2611
  %v2613 = vlaneseq
  %v2614 = vshrl.u32 %v2613, 7
  %v2615 = vsub.s32 %v2612, %v2614
  %v2616 = vrot.slane %v2602, %v2615
  %v2617 = vcombine.high %v2609, %v2609
  %v2618 = vcombine.high %v2616, %v2616
  %v2619 = vcombine.high %v2599, %v2599
  %v2621 = vunpack.c.l.s4 1983009808
  %v2622 = vunpack.c.0.s8 %v2621
  %v2623 = vlaneseq
  %v2624 = vshrl.u32 %v2623, 7
  %v2625 = vsub.s32 %v2622, %v2624
  %v2626 = vrot.slane %v2599, %v2625
  %v2628 = vunpack.c.l.s4 1983009808
  %v2629 = vunpack.c.0.s8 %v2628
  %v2630 = vlaneseq
  %v2631 = vshrl.u32 %v2630, 7
  %v2632 = vsub.s32 %v2629, %v2631
  %v2633 = vrot.slane %v2619, %v2632
  %v2634 = vcombine.high %v2626, %v2626
  %v2641 = vsel %vm305, %v2633, 0
  %2643 = vmatprep.subr.mxu0 %v49
  %2644 = vmatpush1.msra.mxu0 %v48
  %2645 = vmatprep.subr.mxu0 %v51
  %2646 = vmatpush1.msra.mxu0 %v50
  %2647 = vmatprep.subr.mxu0 %v53
  %2648 = vmatpush1.msra.mxu0 %v52
  %2649 = vmatprep.subr.mxu0 %v55
  %2650 = vmatpush1.msra.mxu0 %v54
  %2651 = vmatprep.subr.mxu0 %v57
  %2652 = vmatpush1.msra.mxu0 %v56
  %2653 = vmatprep.subr.mxu0 %v59
  %2654 = vmatpush1.msra.mxu0 %v58
  %2655 = vmatprep.subr.mxu0 %v61
  %2656 = vmatpush1.msra.mxu0 %v60
  %2657 = vmatprep.subr.mxu0 %v63
  %2658 = vmatpush1.msra.mxu0 %v62
  %2659 = vmatprep.subr.mxu0 %v65
  %2660 = vmatpush1.msra.mxu0 %v64
  %2661 = vmatprep.subr.mxu0 %v67
  %2662 = vmatpush1.msra.mxu0 %v66
  %2663 = vmatprep.subr.mxu0 %v69
  %2664 = vmatpush1.msra.mxu0 %v68
  %2665 = vmatprep.subr.mxu0 %v71
  %2666 = vmatpush1.msra.mxu0 %v70
  %2667 = vmatprep.subr.mxu0 %v73
  %2668 = vmatpush1.msra.mxu0 %v72
  %2669 = vmatprep.subr.mxu0 %v75
  %2670 = vmatpush1.msra.mxu0 %v74
  %2671 = vmatprep.subr.mxu0 %v77
  %2672 = vmatpush1.msra.mxu0 %v76
  %2673 = vmatprep.subr.mxu0 %v79
  %2674 = vmatpush1.msra.mxu0 %v78
  %2675 = vmatprep.subr.mxu0 %v81
  %2676 = vmatpush1.msra.mxu0 %v80
  %2677 = vmatprep.subr.mxu0 %v83
  %2678 = vmatpush1.msra.mxu0 %v82
  %2679 = vmatprep.subr.mxu0 %v85
  %2680 = vmatpush1.msra.mxu0 %v84
  %2681 = vmatprep.subr.mxu0 %v87
  %2682 = vmatpush1.msra.mxu0 %v86
  %2683 = vmatprep.subr.mxu0 %v89
  %2684 = vmatpush1.msra.mxu0 %v88
  %2685 = vmatprep.subr.mxu0 %v91
  %2686 = vmatpush1.msra.mxu0 %v90
  %2687 = vmatprep.subr.mxu0 %v93
  %2688 = vmatpush1.msra.mxu0 %v92
  %2689 = vmatprep.subr.mxu0 %v95
  %2690 = vmatpush1.msra.mxu0 %v94
  %2691 = vmatprep.subr.mxu0 %v97
  %2692 = vmatpush1.msra.mxu0 %v96
  %2693 = vmatprep.subr.mxu0 %v99
  %2694 = vmatpush1.msra.mxu0 %v98
  %2695 = vmatprep.subr.mxu0 %v101
  %2696 = vmatpush1.msra.mxu0 %v100
  %2697 = vmatprep.subr.mxu0 %v103
  %2698 = vmatpush1.msra.mxu0 %v102
  %2699 = vmatprep.subr.mxu0 %v105
  %2700 = vmatpush1.msra.mxu0 %v104
  %2701 = vmatprep.subr.mxu0 %v107
  %2702 = vmatpush1.msra.mxu0 %v106
  %2703 = vmatprep.subr.mxu0 %v109
  %2704 = vmatpush1.msra.mxu0 %v108
  %2705 = vmatprep.subr.mxu0 %v111
  %2706 = vmatpush1.msra.mxu0 %v110
  %2707 = vmatprep.mubr.f32.mxu0 %v2617
  %2708 = vmatmul.mubr.f32.gmra.mrb[0].mxu0 %v2609
  %v2709 = vpop.f32.mrb[0].mxu0
  %v2710 = vadd.f32 0.0, %v2709
  %v2711 = vpop.f32.mrb[0].mxu0
  %v2712 = vadd.f32 0.0, %v2711
  %2713 = vdwg.mxu0
  %2714 = vmatprep.subr.mxu0 %v113
  %2715 = vmatpush1.msra.mxu0 %v112
  %2716 = vmatprep.subr.mxu0 %v115
  %2717 = vmatpush1.msra.mxu0 %v114
  %2718 = vmatprep.subr.mxu0 %v117
  %2719 = vmatpush1.msra.mxu0 %v116
  %2720 = vmatprep.subr.mxu0 %v119
  %2721 = vmatpush1.msra.mxu0 %v118
  %2722 = vmatprep.subr.mxu0 %v121
  %2723 = vmatpush1.msra.mxu0 %v120
  %2724 = vmatprep.subr.mxu0 %v123
  %2725 = vmatpush1.msra.mxu0 %v122
  %2726 = vmatprep.subr.mxu0 %v125
  %2727 = vmatpush1.msra.mxu0 %v124
  %2728 = vmatprep.subr.mxu0 %v127
  %2729 = vmatpush1.msra.mxu0 %v126
  %2730 = vmatprep.subr.mxu0 %v129
  %2731 = vmatpush1.msra.mxu0 %v128
  %2732 = vmatprep.subr.mxu0 %v131
  %2733 = vmatpush1.msra.mxu0 %v130
  %2734 = vmatprep.subr.mxu0 %v133
  %2735 = vmatpush1.msra.mxu0 %v132
  %2736 = vmatprep.subr.mxu0 %v135
  %2737 = vmatpush1.msra.mxu0 %v134
  %2738 = vmatprep.subr.mxu0 %v137
  %2739 = vmatpush1.msra.mxu0 %v136
  %2740 = vmatprep.subr.mxu0 %v139
  %2741 = vmatpush1.msra.mxu0 %v138
  %2742 = vmatprep.subr.mxu0 %v141
  %2743 = vmatpush1.msra.mxu0 %v140
  %2744 = vmatprep.subr.mxu0 %v143
  %2745 = vmatpush1.msra.mxu0 %v142
  %2746 = vmatprep.subr.mxu0 %v145
  %2747 = vmatpush1.msra.mxu0 %v144
  %2748 = vmatprep.subr.mxu0 %v147
  %2749 = vmatpush1.msra.mxu0 %v146
  %2750 = vmatprep.subr.mxu0 %v149
  %2751 = vmatpush1.msra.mxu0 %v148
  %2752 = vmatprep.subr.mxu0 %v151
  %2753 = vmatpush1.msra.mxu0 %v150
  %2754 = vmatprep.subr.mxu0 %v153
  %2755 = vmatpush1.msra.mxu0 %v152
  %2756 = vmatprep.subr.mxu0 %v155
  %2757 = vmatpush1.msra.mxu0 %v154
  %2758 = vmatprep.subr.mxu0 %v157
  %2759 = vmatpush1.msra.mxu0 %v156
  %2760 = vmatprep.subr.mxu0 %v159
  %2761 = vmatpush1.msra.mxu0 %v158
  %2762 = vmatprep.subr.mxu0 %v161
  %2763 = vmatpush1.msra.mxu0 %v160
  %2764 = vmatprep.subr.mxu0 %v163
  %2765 = vmatpush1.msra.mxu0 %v162
  %2766 = vmatprep.subr.mxu0 %v165
  %2767 = vmatpush1.msra.mxu0 %v164
  %2768 = vmatprep.subr.mxu0 %v167
  %2769 = vmatpush1.msra.mxu0 %v166
  %2770 = vmatprep.subr.mxu0 %v169
  %2771 = vmatpush1.msra.mxu0 %v168
  %2772 = vmatprep.subr.mxu0 %v171
  %2773 = vmatpush1.msra.mxu0 %v170
  %2774 = vmatprep.subr.mxu0 %v173
  %2775 = vmatpush1.msra.mxu0 %v172
  %2776 = vmatprep.subr.mxu0 %v175
  %2777 = vmatpush1.msra.mxu0 %v174
  %2778 = vmatprep.mubr.f32.mxu0 %v2618
  %2779 = vmatmul.mubr.f32.gmra.mrb[0].mxu0 %v2616
  %v2780 = vpop.f32.mrb[0].mxu0
  %v2781 = vadd.f32 %v2710, %v2780
  %v2782 = vpop.f32.mrb[0].mxu0
  %v2783 = vadd.f32 %v2712, %v2782
  %2784 = vdwg.mxu0
  %2785 = vmatprep.subr.mxu0 %v177
  %2786 = vmatpush1.msra.mxu0 %v176
  %2787 = vmatprep.subr.mxu0 %v179
  %2788 = vmatpush1.msra.mxu0 %v178
  %2789 = vmatprep.subr.mxu0 %v181
  %2790 = vmatpush1.msra.mxu0 %v180
  %2791 = vmatprep.subr.mxu0 %v183
  %2792 = vmatpush1.msra.mxu0 %v182
  %2793 = vmatprep.subr.mxu0 %v185
  %2794 = vmatpush1.msra.mxu0 %v184
  %2795 = vmatprep.subr.mxu0 %v187
  %2796 = vmatpush1.msra.mxu0 %v186
  %2797 = vmatprep.subr.mxu0 %v189
  %2798 = vmatpush1.msra.mxu0 %v188
  %2799 = vmatprep.subr.mxu0 %v191
  %2800 = vmatpush1.msra.mxu0 %v190
  %2801 = vmatprep.subr.mxu0 %v193
  %2802 = vmatpush1.msra.mxu0 %v192
  %2803 = vmatprep.subr.mxu0 %v195
  %2804 = vmatpush1.msra.mxu0 %v194
  %2805 = vmatprep.subr.mxu0 %v197
  %2806 = vmatpush1.msra.mxu0 %v196
  %2807 = vmatprep.subr.mxu0 %v199
  %2808 = vmatpush1.msra.mxu0 %v198
  %2809 = vmatprep.subr.mxu0 %v201
  %2810 = vmatpush1.msra.mxu0 %v200
  %2811 = vmatprep.subr.mxu0 %v203
  %2812 = vmatpush1.msra.mxu0 %v202
  %2813 = vmatprep.subr.mxu0 %v205
  %2814 = vmatpush1.msra.mxu0 %v204
  %2815 = vmatprep.subr.mxu0 %v207
  %2816 = vmatpush1.msra.mxu0 %v206
  %2817 = vmatprep.subr.mxu0 %v209
  %2818 = vmatpush1.msra.mxu0 %v208
  %2819 = vmatprep.subr.mxu0 %v211
  %2820 = vmatpush1.msra.mxu0 %v210
  %2821 = vmatprep.subr.mxu0 %v213
  %2822 = vmatpush1.msra.mxu0 %v212
  %2823 = vmatprep.subr.mxu0 %v215
  %2824 = vmatpush1.msra.mxu0 %v214
  %2825 = vmatprep.subr.mxu0 %v217
  %2826 = vmatpush1.msra.mxu0 %v216
  %2827 = vmatprep.subr.mxu0 %v219
  %2828 = vmatpush1.msra.mxu0 %v218
  %2829 = vmatprep.subr.mxu0 %v221
  %2830 = vmatpush1.msra.mxu0 %v220
  %2831 = vmatprep.subr.mxu0 %v223
  %2832 = vmatpush1.msra.mxu0 %v222
  %2833 = vmatprep.subr.mxu0 %v225
  %2834 = vmatpush1.msra.mxu0 %v224
  %2835 = vmatprep.subr.mxu0 %v227
  %2836 = vmatpush1.msra.mxu0 %v226
  %2837 = vmatprep.subr.mxu0 %v229
  %2838 = vmatpush1.msra.mxu0 %v228
  %2839 = vmatprep.subr.mxu0 %v231
  %2840 = vmatpush1.msra.mxu0 %v230
  %2841 = vmatprep.subr.mxu0 %v233
  %2842 = vmatpush1.msra.mxu0 %v232
  %2843 = vmatprep.subr.mxu0 %v235
  %2844 = vmatpush1.msra.mxu0 %v234
  %2845 = vmatprep.subr.mxu0 %v237
  %2846 = vmatpush1.msra.mxu0 %v236
  %2847 = vmatprep.subr.mxu0 %v239
  %2848 = vmatpush1.msra.mxu0 %v238
  %2849 = vmatprep.mubr.f32.mxu0 %v2634
  %2850 = vmatmul.mubr.f32.gmra.mrb[0].mxu0 %v2626
  %v2851 = vpop.f32.mrb[0].mxu0
  %v2852 = vadd.f32 %v2781, %v2851
  %v2853 = vpop.f32.mrb[0].mxu0
  %v2854 = vadd.f32 %v2783, %v2853
  %2855 = vdwg.mxu0
  %2856 = vmatprep.subr.mxu0 %v241
  %2857 = vmatpush1.msra.mxu0 %v240
  %2858 = vmatprep.subr.mxu0 %v243
  %2859 = vmatpush1.msra.mxu0 %v242
  %2860 = vmatprep.subr.mxu0 %v245
  %2861 = vmatpush1.msra.mxu0 %v244
  %2862 = vmatprep.subr.mxu0 %v247
  %2863 = vmatpush1.msra.mxu0 %v246
  %2864 = vmatprep.subr.mxu0 %v249
  %2865 = vmatpush1.msra.mxu0 %v248
  %2866 = vmatprep.subr.mxu0 %v251
  %2867 = vmatpush1.msra.mxu0 %v250
  %2868 = vmatprep.subr.mxu0 %v253
  %2869 = vmatpush1.msra.mxu0 %v252
  %2870 = vmatprep.subr.mxu0 %v255
  %2871 = vmatpush1.msra.mxu0 %v254
  %2872 = vmatprep.subr.mxu0 %v257
  %2873 = vmatpush1.msra.mxu0 %v256
  %2874 = vmatprep.subr.mxu0 %v259
  %2875 = vmatpush1.msra.mxu0 %v258
  %2876 = vmatprep.subr.mxu0 %v261
  %2877 = vmatpush1.msra.mxu0 %v260
  %2878 = vmatprep.subr.mxu0 %v263
  %2879 = vmatpush1.msra.mxu0 %v262
  %2880 = vmatprep.subr.mxu0 0.0
  %2881 = vmatpush1.msra.mxu0 0.0
  %2882 = vmatprep.subr.mxu0 0.0
  %2883 = vmatpush1.msra.mxu0 0.0
  %2884 = vmatprep.subr.mxu0 0.0
  %2885 = vmatpush1.msra.mxu0 0.0
  %2886 = vmatprep.subr.mxu0 0.0
  %2887 = vmatpush1.msra.mxu0 0.0
  %2888 = vmatprep.subr.mxu0 0.0
  %2889 = vmatpush1.msra.mxu0 0.0
  %2890 = vmatprep.subr.mxu0 0.0
  %2891 = vmatpush1.msra.mxu0 0.0
  %2892 = vmatprep.subr.mxu0 0.0
  %2893 = vmatpush1.msra.mxu0 0.0
  %2894 = vmatprep.subr.mxu0 0.0
  %2895 = vmatpush1.msra.mxu0 0.0
  %2896 = vmatprep.subr.mxu0 0.0
  %2897 = vmatpush1.msra.mxu0 0.0
  %2898 = vmatprep.subr.mxu0 0.0
  %2899 = vmatpush1.msra.mxu0 0.0
  %2900 = vmatprep.subr.mxu0 0.0
  %2901 = vmatpush1.msra.mxu0 0.0
  %2902 = vmatprep.subr.mxu0 0.0
  %2903 = vmatpush1.msra.mxu0 0.0
  %2904 = vmatprep.subr.mxu0 0.0
  %2905 = vmatpush1.msra.mxu0 0.0
  %2906 = vmatprep.subr.mxu0 0.0
  %2907 = vmatpush1.msra.mxu0 0.0
  %2908 = vmatprep.subr.mxu0 0.0
  %2909 = vmatpush1.msra.mxu0 0.0
  %2910 = vmatprep.subr.mxu0 0.0
  %2911 = vmatpush1.msra.mxu0 0.0
  %2912 = vmatprep.subr.mxu0 0.0
  %2913 = vmatpush1.msra.mxu0 0.0
  %2914 = vmatprep.subr.mxu0 0.0
  %2915 = vmatpush1.msra.mxu0 0.0
  %2916 = vmatprep.subr.mxu0 0.0
  %2917 = vmatpush1.msra.mxu0 0.0
  %2918 = vmatprep.subr.mxu0 0.0
  %2919 = vmatpush1.msra.mxu0 0.0
  %2920 = vmatprep.mubr.f32.mxu0 0.0
  %2921 = vmatmul.mubr.f32.gmra.mrb[0].mxu0 %v2641
  %v2922 = vpop.f32.mrb[0].mxu0
  %v2923 = vadd.f32 %v2852, %v2922
  %v2924 = vpop.f32.mrb[0].mxu0
  %v2925 = vadd.f32 %v2854, %v2924
  %2926 = vdwg.mxu0
  %v2927 = vmax.f32 %v2595, %v2923
  %v2928 = vmax.f32 %v2596, %v2925
  %v2929 = vadd.f32 %v2927, %v1593
  %v2930 = vadd.f32 %v2928, %v1597
  %v2931 = vmax.f32 %v2929, 0.0
  %v2932 = vmax.f32 %v2930, 0.0
  %v2933 = vld [vmem:[%s5] sm:$0xff]
  %v2934 = vld [vmem:[%s5 + $0x8] sm:$0xff]
  %v2935 = vld [vmem:[%s5 + $0x10] sm:$0xff]
  %v2936 = vld [vmem:[%s5 + $0x18] sm:$0xff]
  %v2937 = vld [vmem:[%s5 + $0x20] sm:$0xff]
  %v2938 = vld [vmem:[%s5 + $0x28] sm:$0xff]
  %v2939 = vld [vmem:[%s5 + $0x30] sm:$0xff]
  %v2940 = vld [vmem:[%s5 + $0x38] sm:$0xff]
  %v2941 = vld [vmem:[%s5 + $0x40] sm:$0xff]
  %v2942 = vld [vmem:[%s5 + $0x48] sm:$0xff]
  %v2943 = vld [vmem:[%s5 + $0x50] sm:$0xff]
  %v2944 = vld [vmem:[%s5 + $0x58] sm:$0xff]
  %v2945 = vld [vmem:[%s5 + $0x60] sm:$0xff]
  %v2946 = vld [vmem:[%s5 + $0x68] sm:$0xff]
  %v2947 = vld [vmem:[%s5 + $0x70] sm:$0xff]
  %v2948 = vld [vmem:[%s5 + $0x78] sm:$0xff]
  %v2949 = vld [vmem:[%s5 + $0x80] sm:$0xff]
  %v2950 = vld [vmem:[%s5 + $0x88] sm:$0xff]
  %v2951 = vld [vmem:[%s5 + $0x90] sm:$0xff]
  %v2952 = vld [vmem:[%s5 + $0x98] sm:$0xff]
  %v2953 = vld [vmem:[%s5 + $0xa0] sm:$0xff]
  %v2954 = vld [vmem:[%s5 + $0xa8] sm:$0xff]
  %v2955 = vld [vmem:[%s5 + $0xb0] sm:$0xff]
  %v2956 = vld [vmem:[%s5 + $0xb8] sm:$0xff]
  %v2957 = vld [vmem:[%s5 + $0xc0] sm:$0xff]
  %v2958 = vld [vmem:[%s5 + $0xc8] sm:$0xff]
  %v2959 = vld [vmem:[%s5 + $0xd0] sm:$0xff]
  %v2960 = vld [vmem:[%s5 + $0xd8] sm:$0xff]
  %v2961 = vld [vmem:[%s5 + $0xe0] sm:$0xff]
  %v2962 = vld [vmem:[%s5 + $0xe8] sm:$0xff]
  %v2963 = vld [vmem:[%s5 + $0xf0] sm:$0xff]
  %v2964 = vld [vmem:[%s5 + $0xf8] sm:$0xff]
  %v2965 = vld [vmem:[%s5 + $0x100] sm:$0xff]
  %v2966 = vld [vmem:[%s5 + $0x108] sm:$0xff]
  %v2967 = vld [vmem:[%s5 + $0x110] sm:$0xff]
  %v2968 = vld [vmem:[%s5 + $0x118] sm:$0xff]
  %v2969 = vld [vmem:[%s5 + $0x120] sm:$0xff]
  %v2970 = vld [vmem:[%s5 + $0x128] sm:$0xff]
  %v2971 = vld [vmem:[%s5 + $0x130] sm:$0xff]
  %v2972 = vld [vmem:[%s5 + $0x138] sm:$0xff]
  %v2973 = vld [vmem:[%s5 + $0x140] sm:$0xff]
  %v2974 = vld [vmem:[%s5 + $0x148] sm:$0xff]
  %v2975 = vld [vmem:[%s5 + $0x150] sm:$0xff]
  %v2976 = vld [vmem:[%s5 + $0x158] sm:$0xff]
  %v2977 = vld [vmem:[%s5 + $0x160] sm:$0xff]
  %v2978 = vld [vmem:[%s5 + $0x168] sm:$0xff]
  %v2979 = vld [vmem:[%s5 + $0x170] sm:$0xff]
  %v2980 = vld [vmem:[%s5 + $0x178] sm:$0xff]
  %v2981 = vld [vmem:[%s5 + $0x180] sm:$0xff]
  %v2982 = vld [vmem:[%s5 + $0x188] sm:$0xff]
  %v2983 = vld [vmem:[%s5 + $0x190] sm:$0xff]
  %v2984 = vld [vmem:[%s5 + $0x198] sm:$0xff]
  %v2985 = vld [vmem:[%s5 + $0x1a0] sm:$0xff]
  %v2986 = vld [vmem:[%s5 + $0x1a8] sm:$0xff]
  %v2987 = vld [vmem:[%s6] sm:$0xff]
  %v2988 = vld [vmem:[%s6 + $0x8] sm:$0xff]
  %v2989 = vld [vmem:[%s6 + $0x10] sm:$0xff]
  %v2990 = vld [vmem:[%s6 + $0x18] sm:$0xff]
  %v2991 = vld [vmem:[%s6 + $0x20] sm:$0xff]
  %v2992 = vld [vmem:[%s6 + $0x28] sm:$0xff]
  %v2993 = vld [vmem:[%s6 + $0x30] sm:$0xff]
  %v2994 = vld [vmem:[%s6 + $0x38] sm:$0xff]
  %v2995 = vld [vmem:[%s6 + $0x40] sm:$0xff]
  %v2996 = vld [vmem:[%s6 + $0x48] sm:$0xff]
  %v2997 = vld [vmem:[%s6 + $0x50] sm:$0xff]
  %v2998 = vld [vmem:[%s6 + $0x58] sm:$0xff]
  %v2999 = vld [vmem:[%s6 + $0x60] sm:$0xff]
  %v3000 = vld [vmem:[%s6 + $0x68] sm:$0xff]
  %v3001 = vld [vmem:[%s6 + $0x70] sm:$0xff]
  %v3002 = vld [vmem:[%s6 + $0x78] sm:$0xff]
  %v3003 = vld [vmem:[%s6 + $0x80] sm:$0xff]
  %v3004 = vld [vmem:[%s6 + $0x88] sm:$0xff]
  %v3005 = vld [vmem:[%s6 + $0x90] sm:$0xff]
  %v3006 = vld [vmem:[%s6 + $0x98] sm:$0xff]
  %v3007 = vld [vmem:[%s6 + $0xa0] sm:$0xff]
  %v3008 = vld [vmem:[%s6 + $0xa8] sm:$0xff]
  %v3009 = vld [vmem:[%s6 + $0xb0] sm:$0xff]
  %v3010 = vld [vmem:[%s6 + $0xb8] sm:$0xff]
  %v3011 = vld [vmem:[%s6 + $0xc0] sm:$0xff]
  %v3012 = vld [vmem:[%s6 + $0xc8] sm:$0xff]
  %v3013 = vld [vmem:[%s6 + $0xd0] sm:$0xff]
  %v3014 = vld [vmem:[%s6 + $0xd8] sm:$0xff]
  %v3015 = vld [vmem:[%s6 + $0xe0] sm:$0xff]
  %v3016 = vld [vmem:[%s6 + $0xe8] sm:$0xff]
  %v3017 = vld [vmem:[%s6 + $0xf0] sm:$0xff]
  %v3018 = vld [vmem:[%s6 + $0xf8] sm:$0xff]
  %v3019 = vld [vmem:[%s6 + $0x100] sm:$0xff]
  %v3020 = vld [vmem:[%s6 + $0x108] sm:$0xff]
  %v3021 = vld [vmem:[%s6 + $0x110] sm:$0xff]
  %v3022 = vld [vmem:[%s6 + $0x118] sm:$0xff]
  %v3023 = vld [vmem:[%s6 + $0x120] sm:$0xff]
  %v3024 = vld [vmem:[%s6 + $0x128] sm:$0xff]
  %v3025 = vld [vmem:[%s6 + $0x130] sm:$0xff]
  %v3026 = vld [vmem:[%s6 + $0x138] sm:$0xff]
  %v3027 = vld [vmem:[%s6 + $0x140] sm:$0xff]
  %v3028 = vld [vmem:[%s6 + $0x148] sm:$0xff]
  %v3029 = vld [vmem:[%s6 + $0x150] sm:$0xff]
  %v3030 = vld [vmem:[%s6 + $0x158] sm:$0xff]
  %v3031 = vld [vmem:[%s6 + $0x160] sm:$0xff]
  %v3032 = vld [vmem:[%s6 + $0x168] sm:$0xff]
  %v3033 = vld [vmem:[%s6 + $0x170] sm:$0xff]
  %v3034 = vld [vmem:[%s6 + $0x178] sm:$0xff]
  %v3035 = vld [vmem:[%s6 + $0x180] sm:$0xff]
  %v3036 = vld [vmem:[%s6 + $0x188] sm:$0xff]
  %v3037 = vld [vmem:[%s6 + $0x190] sm:$0xff]
  %v3038 = vld [vmem:[%s6 + $0x198] sm:$0xff]
  %v3039 = vld [vmem:[%s6 + $0x1a0] sm:$0xff]
  %v3040 = vld [vmem:[%s6 + $0x1a8] sm:$0xff]
  %vm3041 = vcmask 719872
  %v3043 = vsel %vm3041, %v2932, 0
  %3045 = vmatprep.subr.mxu0 %v2988
  %3046 = vmatpush1.msra.mxu0 %v2987
  %3047 = vmatprep.subr.mxu0 %v2990
  %3048 = vmatpush1.msra.mxu0 %v2989
  %3049 = vmatprep.subr.mxu0 %v2992
  %3050 = vmatpush1.msra.mxu0 %v2991
  %3051 = vmatprep.subr.mxu0 %v2994
  %3052 = vmatpush1.msra.mxu0 %v2993
  %3053 = vmatprep.subr.mxu0 %v2996
  %3054 = vmatpush1.msra.mxu0 %v2995
  %3055 = vmatprep.subr.mxu0 %v2998
  %3056 = vmatpush1.msra.mxu0 %v2997
  %3057 = vmatprep.subr.mxu0 %v3000
  %3058 = vmatpush1.msra.mxu0 %v2999
  %3059 = vmatprep.subr.mxu0 %v3002
  %3060 = vmatpush1.msra.mxu0 %v3001
  %3061 = vmatprep.subr.mxu0 %v3004
  %3062 = vmatpush1.msra.mxu0 %v3003
  %3063 = vmatprep.subr.mxu0 %v3006
  %3064 = vmatpush1.msra.mxu0 %v3005
  %3065 = vmatprep.subr.mxu0 %v3008
  %3066 = vmatpush1.msra.mxu0 %v3007
  %3067 = vmatprep.subr.mxu0 %v3010
  %3068 = vmatpush1.msra.mxu0 %v3009
  %3069 = vmatprep.subr.mxu0 %v3012
  %3070 = vmatpush1.msra.mxu0 %v3011
  %3071 = vmatprep.subr.mxu0 %v3014
  %3072 = vmatpush1.msra.mxu0 %v3013
  %3073 = vmatprep.subr.mxu0 %v3016
  %3074 = vmatpush1.msra.mxu0 %v3015
  %3075 = vmatprep.subr.mxu0 %v3018
  %3076 = vmatpush1.msra.mxu0 %v3017
  %3077 = vmatprep.subr.mxu0 %v3020
  %3078 = vmatpush1.msra.mxu0 %v3019
  %3079 = vmatprep.subr.mxu0 %v3022
  %3080 = vmatpush1.msra.mxu0 %v3021
  %3081 = vmatprep.subr.mxu0 %v3024
  %3082 = vmatpush1.msra.mxu0 %v3023
  %3083 = vmatprep.subr.mxu0 %v3026
  %3084 = vmatpush1.msra.mxu0 %v3025
  %3085 = vmatprep.subr.mxu0 %v3028
  %3086 = vmatpush1.msra.mxu0 %v3027
  %3087 = vmatprep.subr.mxu0 %v3030
  %3088 = vmatpush1.msra.mxu0 %v3029
  %3089 = vmatprep.subr.mxu0 %v3032
  %3090 = vmatpush1.msra.mxu0 %v3031
  %3091 = vmatprep.subr.mxu0 %v3034
  %3092 = vmatpush1.msra.mxu0 %v3033
  %3093 = vmatprep.subr.mxu0 %v3036
  %3094 = vmatpush1.msra.mxu0 %v3035
  %3095 = vmatprep.subr.mxu0 %v3038
  %3096 = vmatpush1.msra.mxu0 %v3037
  %3097 = vmatprep.subr.mxu0 %v3040
  %3098 = vmatpush1.msra.mxu0 %v3039
  %3099 = vmatprep.subr.mxu0 0.0
  %3100 = vmatpush1.msra.mxu0 0.0
  %3101 = vmatprep.subr.mxu0 0.0
  %3102 = vmatpush1.msra.mxu0 0.0
  %3103 = vmatprep.subr.mxu0 0.0
  %3104 = vmatpush1.msra.mxu0 0.0
  %3105 = vmatprep.subr.mxu0 0.0
  %3106 = vmatpush1.msra.mxu0 0.0
  %3107 = vmatprep.subr.mxu0 0.0
  %3108 = vmatpush1.msra.mxu0 0.0
  %3109 = vmatprep.mubr.f32.mxu0 %v3043
  %3110 = vmatmul.mubr.f32.gmra.mrb[0].mxu0 %v2931
  %v3111 = vpop.f32.mrb[0].mxu0
  %v3112 = vadd.f32 0.0, %v3111
  %v3113 = vpop.f32.mrb[0].mxu0
  %v3114 = vadd.f32 0.0, %v3113
  %3115 = vdwg.mxu0
  %v3117 = vsel %vm3041, %v1603, 0
  %3119 = vmatprep.subr.mxu0 %v2934
  %3120 = vmatpush1.msra.mxu0 %v2933
  %3121 = vmatprep.subr.mxu0 %v2936
  %3122 = vmatpush1.msra.mxu0 %v2935
  %3123 = vmatprep.subr.mxu0 %v2938
  %3124 = vmatpush1.msra.mxu0 %v2937
  %3125 = vmatprep.subr.mxu0 %v2940
  %3126 = vmatpush1.msra.mxu0 %v2939
  %3127 = vmatprep.subr.mxu0 %v2942
  %3128 = vmatpush1.msra.mxu0 %v2941
  %3129 = vmatprep.subr.mxu0 %v2944
  %3130 = vmatpush1.msra.mxu0 %v2943
  %3131 = vmatprep.subr.mxu0 %v2946
  %3132 = vmatpush1.msra.mxu0 %v2945
  %3133 = vmatprep.subr.mxu0 %v2948
  %3134 = vmatpush1.msra.mxu0 %v2947
  %3135 = vmatprep.subr.mxu0 %v2950
  %3136 = vmatpush1.msra.mxu0 %v2949
  %3137 = vmatprep.subr.mxu0 %v2952
  %3138 = vmatpush1.msra.mxu0 %v2951
  %3139 = vmatprep.subr.mxu0 %v2954
  %3140 = vmatpush1.msra.mxu0 %v2953
  %3141 = vmatprep.subr.mxu0 %v2956
  %3142 = vmatpush1.msra.mxu0 %v2955
  %3143 = vmatprep.subr.mxu0 %v2958
  %3144 = vmatpush1.msra.mxu0 %v2957
  %3145 = vmatprep.subr.mxu0 %v2960
  %3146 = vmatpush1.msra.mxu0 %v2959
  %3147 = vmatprep.subr.mxu0 %v2962
  %3148 = vmatpush1.msra.mxu0 %v2961
  %3149 = vmatprep.subr.mxu0 %v2964
  %3150 = vmatpush1.msra.mxu0 %v2963
  %3151 = vmatprep.subr.mxu0 %v2966
  %3152 = vmatpush1.msra.mxu0 %v2965
  %3153 = vmatprep.subr.mxu0 %v2968
  %3154 = vmatpush1.msra.mxu0 %v2967
  %3155 = vmatprep.subr.mxu0 %v2970
  %3156 = vmatpush1.msra.mxu0 %v2969
  %3157 = vmatprep.subr.mxu0 %v2972
  %3158 = vmatpush1.msra.mxu0 %v2971
  %3159 = vmatprep.subr.mxu0 %v2974
  %3160 = vmatpush1.msra.mxu0 %v2973
  %3161 = vmatprep.subr.mxu0 %v2976
  %3162 = vmatpush1.msra.mxu0 %v2975
  %3163 = vmatprep.subr.mxu0 %v2978
  %3164 = vmatpush1.msra.mxu0 %v2977
  %3165 = vmatprep.subr.mxu0 %v2980
  %3166 = vmatpush1.msra.mxu0 %v2979
  %3167 = vmatprep.subr.mxu0 %v2982
  %3168 = vmatpush1.msra.mxu0 %v2981
  %3169 = vmatprep.subr.mxu0 %v2984
  %3170 = vmatpush1.msra.mxu0 %v2983
  %3171 = vmatprep.subr.mxu0 %v2986
  %3172 = vmatpush1.msra.mxu0 %v2985
  %3173 = vmatprep.subr.mxu0 0.0
  %3174 = vmatpush1.msra.mxu0 0.0
  %3175 = vmatprep.subr.mxu0 0.0
  %3176 = vmatpush1.msra.mxu0 0.0
  %3177 = vmatprep.subr.mxu0 0.0
  %3178 = vmatpush1.msra.mxu0 0.0
  %3179 = vmatprep.subr.mxu0 0.0
  %3180 = vmatpush1.msra.mxu0 0.0
  %3181 = vmatprep.subr.mxu0 0.0
  %3182 = vmatpush1.msra.mxu0 0.0
  %3183 = vmatprep.mubr.f32.mxu0 %v3117
  %3184 = vmatmul.mubr.f32.gmra.mrb[0].mxu0 %v1602
  %v3185 = vpop.f32.mrb[0].mxu0
  %v3186 = vadd.f32 %v3112, %v3185
  %v3187 = vpop.f32.mrb[0].mxu0
  %v3188 = vadd.f32 %v3114, %v3187
  %3189 = vdwg.mxu0
  %v3190 = vld [vmem:[%s2] sm:$0x3]
  %v3191 = vld [vmem:[%s7] sm:$0x3]
  %3193 = vset.pattern.permute.xlu0 0
  %3194 = vperm.xlu0 %3193, %v3190
  %v3195 = vpop.permute.xlu0 %3194
  %v3198 = vlaneseq
  %v3199 = vshrl.u32 %v3198, 7
  %v3200 = vsub.s32 0, %v3199
  %v3201 = vrot.slane %v3191, %v3200
  %v3202 = vlaneseq
  %v3203 = vshrl.u32 %v3202, 7
  %v3204 = vsub.s32 1, %v3203
  %v3205 = vrot.slane %v3191, %v3204
  %v3208 = vmul.f32 %v3195, %v3201
  %v3209 = vmul.f32 %v3195, %v3205
  %v3210 = vadd.f32 %v3186, %v3208
  %v3211 = vadd.f32 %v3188, %v3209
  %v3212 = vld [vmem:[%s8] sm:$0x3]
  %v3214 = vlaneseq
  %v3215 = vshrl.u32 %v3214, 7
  %v3216 = vsub.s32 0, %v3215
  %v3217 = vrot.slane %v3212, %v3216
  %v3218 = vlaneseq
  %v3219 = vshrl.u32 %v3218, 7
  %v3220 = vsub.s32 1, %v3219
  %v3221 = vrot.slane %v3212, %v3220
  %v3224 = vadd.f32 %v3210, %v3217
  %v3225 = vadd.f32 %v3211, %v3221
  %v3226 = vmax.f32 %v3224, 0.0
  %v3227 = vmax.f32 %v3225, 0.0
  %v3228 = vld [vmem:[%s9] sm:$0xff]
  %v3229 = vld [vmem:[%s9 + $0x8] sm:$0xff]
  %v3230 = vld [vmem:[%s9 + $0x10] sm:$0xff]
  %v3231 = vld [vmem:[%s9 + $0x18] sm:$0xff]
  %v3232 = vld [vmem:[%s9 + $0x20] sm:$0xff]
  %v3233 = vld [vmem:[%s9 + $0x28] sm:$0xff]
  %v3234 = vld [vmem:[%s9 + $0x30] sm:$0xff]
  %v3235 = vld [vmem:[%s9 + $0x38] sm:$0xff]
  %v3236 = vld [vmem:[%s9 + $0x40] sm:$0xff]
  %v3237 = vld [vmem:[%s9 + $0x48] sm:$0xff]
  %v3238 = vld [vmem:[%s9 + $0x50] sm:$0xff]
  %v3239 = vld [vmem:[%s9 + $0x58] sm:$0xff]
  %v3240 = vld [vmem:[%s9 + $0x60] sm:$0xff]
  %v3241 = vld [vmem:[%s9 + $0x68] sm:$0xff]
  %v3242 = vld [vmem:[%s9 + $0x70] sm:$0xff]
  %v3243 = vld [vmem:[%s9 + $0x78] sm:$0xff]
  %v3244 = vld [vmem:[%s9 + $0x80] sm:$0xff]
  %v3245 = vld [vmem:[%s9 + $0x88] sm:$0xff]
  %v3246 = vld [vmem:[%s9 + $0x90] sm:$0xff]
  %v3247 = vld [vmem:[%s9 + $0x98] sm:$0xff]
  %v3248 = vld [vmem:[%s9 + $0xa0] sm:$0xff]
  %v3249 = vld [vmem:[%s9 + $0xa8] sm:$0xff]
  %v3250 = vld [vmem:[%s9 + $0xb0] sm:$0xff]
  %v3251 = vld [vmem:[%s9 + $0xb8] sm:$0xff]
  %v3252 = vld [vmem:[%s9 + $0xc0] sm:$0xff]
  %v3253 = vld [vmem:[%s9 + $0xc8] sm:$0xff]
  %v3254 = vld [vmem:[%s9 + $0xd0] sm:$0xff]
  %v3255 = vld [vmem:[%s9 + $0xd8] sm:$0xff]
  %v3256 = vld [vmem:[%s9 + $0xe0] sm:$0xff]
  %v3257 = vld [vmem:[%s9 + $0xe8] sm:$0xff]
  %v3258 = vld [vmem:[%s9 + $0xf0] sm:$0xff]
  %v3259 = vld [vmem:[%s9 + $0xf8] sm:$0xff]
  %v3260 = vld [vmem:[%s9 + $0x100] sm:$0xff]
  %v3261 = vld [vmem:[%s9 + $0x108] sm:$0xff]
  %v3262 = vld [vmem:[%s9 + $0x110] sm:$0xff]
  %v3263 = vld [vmem:[%s9 + $0x118] sm:$0xff]
  %v3264 = vld [vmem:[%s9 + $0x120] sm:$0xff]
  %v3265 = vld [vmem:[%s9 + $0x128] sm:$0xff]
  %v3266 = vld [vmem:[%s9 + $0x130] sm:$0xff]
  %v3267 = vld [vmem:[%s9 + $0x138] sm:$0xff]
  %v3268 = vld [vmem:[%s9 + $0x140] sm:$0xff]
  %v3269 = vld [vmem:[%s9 + $0x148] sm:$0xff]
  %v3270 = vld [vmem:[%s9 + $0x150] sm:$0xff]
  %v3271 = vld [vmem:[%s9 + $0x158] sm:$0xff]
  %v3272 = vld [vmem:[%s9 + $0x160] sm:$0xff]
  %v3273 = vld [vmem:[%s9 + $0x168] sm:$0xff]
  %v3274 = vld [vmem:[%s9 + $0x170] sm:$0xff]
  %v3275 = vld [vmem:[%s9 + $0x178] sm:$0xff]
  %v3276 = vld [vmem:[%s9 + $0x180] sm:$0xff]
  %v3277 = vld [vmem:[%s9 + $0x188] sm:$0xff]
  %v3278 = vld [vmem:[%s9 + $0x190] sm:$0xff]
  %v3279 = vld [vmem:[%s9 + $0x198] sm:$0xff]
  %v3280 = vld [vmem:[%s9 + $0x1a0] sm:$0xff]
  %v3281 = vld [vmem:[%s9 + $0x1a8] sm:$0xff]
  %v3282 = vld [vmem:[%s9 + $0x1b0] sm:$0xff]
  %v3283 = vld [vmem:[%s9 + $0x1b8] sm:$0xff]
  %v3284 = vld [vmem:[%s9 + $0x1c0] sm:$0xff]
  %v3285 = vld [vmem:[%s9 + $0x1c8] sm:$0xff]
  %v3286 = vld [vmem:[%s9 + $0x1d0] sm:$0xff]
  %v3287 = vld [vmem:[%s9 + $0x1d8] sm:$0xff]
  %v3288 = vld [vmem:[%s9 + $0x1e0] sm:$0xff]
  %v3289 = vld [vmem:[%s9 + $0x1e8] sm:$0xff]
  %v3290 = vld [vmem:[%s9 + $0x1f0] sm:$0xff]
  %v3291 = vld [vmem:[%s9 + $0x1f8] sm:$0xff]
  %v3292 = vld [vmem:[%s10] sm:$0x3]
  %v3294 = vlaneseq
  %v3295 = vshrl.u32 %v3294, 7
  %v3296 = vsub.s32 0, %v3295
  %v3297 = vrot.slane %v3292, %v3296
  %v3298 = vlaneseq
  %v3299 = vshrl.u32 %v3298, 7
  %v3300 = vsub.s32 1, %v3299
  %v3301 = vrot.slane %v3292, %v3300
  %3304 = vmatprep.subr.mxu0 %v3229
  %3305 = vmatpush1.msra.mxu0 %v3228
  %3306 = vmatprep.subr.mxu0 %v3231
  %3307 = vmatpush1.msra.mxu0 %v3230
  %3308 = vmatprep.subr.mxu0 %v3233
  %3309 = vmatpush1.msra.mxu0 %v3232
  %3310 = vmatprep.subr.mxu0 %v3235
  %3311 = vmatpush1.msra.mxu0 %v3234
  %3312 = vmatprep.subr.mxu0 %v3237
  %3313 = vmatpush1.msra.mxu0 %v3236
  %3314 = vmatprep.subr.mxu0 %v3239
  %3315 = vmatpush1.msra.mxu0 %v3238
  %3316 = vmatprep.subr.mxu0 %v3241
  %3317 = vmatpush1.msra.mxu0 %v3240
  %3318 = vmatprep.subr.mxu0 %v3243
  %3319 = vmatpush1.msra.mxu0 %v3242
  %3320 = vmatprep.subr.mxu0 %v3245
  %3321 = vmatpush1.msra.mxu0 %v3244
  %3322 = vmatprep.subr.mxu0 %v3247
  %3323 = vmatpush1.msra.mxu0 %v3246
  %3324 = vmatprep.subr.mxu0 %v3249
  %3325 = vmatpush1.msra.mxu0 %v3248
  %3326 = vmatprep.subr.mxu0 %v3251
  %3327 = vmatpush1.msra.mxu0 %v3250
  %3328 = vmatprep.subr.mxu0 %v3253
  %3329 = vmatpush1.msra.mxu0 %v3252
  %3330 = vmatprep.subr.mxu0 %v3255
  %3331 = vmatpush1.msra.mxu0 %v3254
  %3332 = vmatprep.subr.mxu0 %v3257
  %3333 = vmatpush1.msra.mxu0 %v3256
  %3334 = vmatprep.subr.mxu0 %v3259
  %3335 = vmatpush1.msra.mxu0 %v3258
  %3336 = vmatprep.subr.mxu0 %v3261
  %3337 = vmatpush1.msra.mxu0 %v3260
  %3338 = vmatprep.subr.mxu0 %v3263
  %3339 = vmatpush1.msra.mxu0 %v3262
  %3340 = vmatprep.subr.mxu0 %v3265
  %3341 = vmatpush1.msra.mxu0 %v3264
  %3342 = vmatprep.subr.mxu0 %v3267
  %3343 = vmatpush1.msra.mxu0 %v3266
  %3344 = vmatprep.subr.mxu0 %v3269
  %3345 = vmatpush1.msra.mxu0 %v3268
  %3346 = vmatprep.subr.mxu0 %v3271
  %3347 = vmatpush1.msra.mxu0 %v3270
  %3348 = vmatprep.subr.mxu0 %v3273
  %3349 = vmatpush1.msra.mxu0 %v3272
  %3350 = vmatprep.subr.mxu0 %v3275
  %3351 = vmatpush1.msra.mxu0 %v3274
  %3352 = vmatprep.subr.mxu0 %v3277
  %3353 = vmatpush1.msra.mxu0 %v3276
  %3354 = vmatprep.subr.mxu0 %v3279
  %3355 = vmatpush1.msra.mxu0 %v3278
  %3356 = vmatprep.subr.mxu0 %v3281
  %3357 = vmatpush1.msra.mxu0 %v3280
  %3358 = vmatprep.subr.mxu0 %v3283
  %3359 = vmatpush1.msra.mxu0 %v3282
  %3360 = vmatprep.subr.mxu0 %v3285
  %3361 = vmatpush1.msra.mxu0 %v3284
  %3362 = vmatprep.subr.mxu0 %v3287
  %3363 = vmatpush1.msra.mxu0 %v3286
  %3364 = vmatprep.subr.mxu0 %v3289
  %3365 = vmatpush1.msra.mxu0 %v3288
  %3366 = vmatprep.subr.mxu0 %v3291
  %3367 = vmatpush1.msra.mxu0 %v3290
  %3368 = vmatprep.mubr.f32.mxu0 %v3227
  %3369 = vmatmul.mubr.f32.gmra.mrb[0].mxu0 %v3226
  %v3370 = vpop.f32.mrb[0].mxu0
  %v3371 = vadd.f32 %v3297, %v3370
  %v3372 = vpop.f32.mrb[0].mxu0
  %v3373 = vadd.f32 %v3301, %v3372
  %3374 = vdwg.mxu0
  %v3375 = vmax.f32 %v3371, 0.0
  %v3376 = vmax.f32 %v3373, 0.0
  %v3377 = vld [vmem:[%s11] sm:$0x3]
  %v3379 = vlaneseq
  %v3380 = vshrl.u32 %v3379, 7
  %v3381 = vsub.s32 0, %v3380
  %v3382 = vrot.slane %v3377, %v3381
  %v3383 = vlaneseq
  %v3384 = vshrl.u32 %v3383, 7
  %v3385 = vsub.s32 1, %v3384
  %v3386 = vrot.slane %v3377, %v3385
  %v3389 = vmul.f32 %v3375, %v3382
  %v3390 = vmul.f32 %v3376, %v3386
  %vm3391 = vcmask 1041408
  %v3392 = vsel %vm3391, %v3389, 0.0
  %v3393 = vsel %vm3391, %v3390, 0.0
  %v3394 = vadd.f32 %v3392, %v3393
  %3395 = vadd.xlane.f32.xlu0 %v3394
  %v3396 = vpop.xlane.xlu0 %3395
  %v3397 = vld [vmem:[#allocation2] sm:$0x1]
  %v3399 = vlaneseq
  %v3400 = vshrl.u32 %v3399, 7
  %v3401 = vsub.s32 0, %v3400
  %v3402 = vrot.slane %v3397, %v3401
  %v3404 = vadd.f32 %v3396, %v3402
  %vm3405 = vcmask 1024
  %3406 = vst.msk [vmem:[%s13] sm:$0x3] %vm3405, %v3404
  // Predicated region
  $region54: #{critic_forward.1} parent=0 // pred_check
    _
  $region55: #{critic_forward.1} parent=0 // pred_check_branch
    %3408 = sbr.rel (0) target = $region57
  $region56: #{critic_forward.1} parent=0 // pred_region
    _
  $region57: #{critic_forward.1} parent=0 // pred_fallthru
    _
  // Predicated region
  $region58: #{critic_forward.1} parent=0 // pred_check
    _
  $region59: #{critic_forward.1} parent=0 // pred_check_branch
    %3410 = sbr.rel (0) target = $region61
  $region60: #{critic_forward.1} parent=0 // pred_region
    _
  $region61: #{critic_forward.1} parent=0 // pred_fallthru
    _

</llo_original>
